<compile_context>
chip_gen: v6e
topology: v6e:2x2x1
jax: 0.10.0
libtpu: 0.0.40
codegen_flags: <defaults>
</compile_context>

<pallas_src>
import math

import jax
import jax.numpy as jnp
import numpy as np
from jax.experimental import pallas as pl
from jax.experimental.pallas import tpu as pltpu

# ----------------------------- config (small) -------------------------------
IMG = 32          # input_resolution
PATCH = 8         # patch_size
WIDTH = 64        # d_model
LAYERS = 2
HEADS = 4
OUT_DIM = 32      # output_dim
IN_CH = 3
LN_EPS = 1e-5

N_TOK = (IMG // PATCH) ** 2          # 16 patch tokens
SEQ = N_TOK + 1                      # + class token
HEAD_DIM = WIDTH // HEADS            # 16
CPP = IN_CH * PATCH * PATCH          # 192 flattened patch features

# MXU operand dtype.  Kept f32 to match the PyTorch reference numerics; set to
# jnp.bfloat16 on v6e/v7x for higher MXU feed rate (accumulation is always f32,
# LayerNorm / softmax / QuickGELU math stays f32 either way).
MM_DTYPE = jnp.float32


# ----------------------------- small helpers --------------------------------
def _mm(a, b):
    return jnp.dot(a.astype(MM_DTYPE), b.astype(MM_DTYPE),
                   preferred_element_type=jnp.float32)


def _mm_nt(a, b):
    # a @ b.T (contract the last dim of both) without an explicit transpose.
    return jax.lax.dot_general(a.astype(MM_DTYPE), b.astype(MM_DTYPE),
                               (((1,), (1,)), ((), ())),
                               preferred_element_type=jnp.float32)


def _layer_norm(x, g, b):
    x = x.astype(jnp.float32)                    # LayerNorm subclass: fp32 stats
    mean = jnp.mean(x, axis=-1, keepdims=True)
    var = jnp.mean(jnp.square(x - mean), axis=-1, keepdims=True)
    return (x - mean) * jax.lax.rsqrt(var + LN_EPS) * g + b


# ----------------------------- fused kernel ----------------------------------
def _vit_kernel(patches_ref, wpatch_ref, clspos_ref, postok_ref,
                lnpre_g_ref, lnpre_b_ref,
                ln1_g_ref, ln1_b_ref, qkv_w_ref, qkv_b_ref,
                out_w_ref, out_b_ref,
                ln2_g_ref, ln2_b_ref, fc_w_ref, fc_b_ref,
                pj_w_ref, pj_b_ref,
                lnpost_g_ref, lnpost_b_ref, proj_ref,
                out_ref,
                x_ref):
    """One grid step == (one batch element, one transformer layer)."""
    layer = pl.program_id(1)
    scale = 1.0 / math.sqrt(HEAD_DIM)

    # ---- prologue (layer 0): patch embed + positional emb + ln_pre ----------
    @pl.when(layer == 0)
    def _prologue():
        tokens = _mm(patches_ref[0], wpatch_ref[...])            # (N_TOK, D)
        x_ref[0:N_TOK, :] = tokens + postok_ref[...]
        x_ref[N_TOK:SEQ, :] = clspos_ref[...]                    # class token last
        x_ref[...] = _layer_norm(x_ref[...], lnpre_g_ref[...], lnpre_b_ref[...])

    # ---- residual attention block (runs every layer) ------------------------
    x = x_ref[...]                                               # (SEQ, D), f32

    h = _layer_norm(x, ln1_g_ref[0], ln1_b_ref[0])
    attn = x + out_b_ref[0]                     # residual + out-proj bias
    for hd in range(HEADS):                     # static unroll, all VMEM-resident
        q = _mm(h, qkv_w_ref[0, hd]) + qkv_b_ref[0, hd]                   # (SEQ, Dh)
        k = _mm(h, qkv_w_ref[0, HEADS + hd]) + qkv_b_ref[0, HEADS + hd]
        v = _mm(h, qkv_w_ref[0, 2 * HEADS + hd]) + qkv_b_ref[0, 2 * HEADS + hd]
        s = _mm_nt(q * scale, k)                                          # (SEQ, SEQ)
        s = s - jnp.max(s, axis=-1, keepdims=True)
        e = jnp.exp(s)
        p = e * pl.reciprocal(jnp.sum(e, axis=-1, keepdims=True), approx=True)
        o = _mm(p, v)                                                     # (SEQ, Dh)
        attn = attn + _mm(o, out_w_ref[0, hd])       # head merge fused into out-proj
    x = attn

    h = _layer_norm(x, ln2_g_ref[0], ln2_b_ref[0])
    h = _mm(h, fc_w_ref[0]) + fc_b_ref[0]
    h = h * jax.nn.sigmoid(1.702 * h)                            # QuickGELU
    x = x + _mm(h, pj_w_ref[0]) + pj_b_ref[0]

    x_ref[...] = x

    # ---- epilogue (last layer): ln_post on class token + final projection ---
    @pl.when(layer == pl.num_programs(1) - 1)
    def _epilogue():
        cls_tok = _layer_norm(x[N_TOK:SEQ, :],
                              lnpost_g_ref[...], lnpost_b_ref[...])       # (1, D)
        out_ref[0] = _mm(cls_tok, proj_ref[...]).astype(out_ref.dtype)


# ----------------------------- wrapper ----------------------------------------
def vit_forward(x, params):
    """x: (B, IN_CH, IMG, IMG) float32, NCHW exactly like the PyTorch module."""
    B = x.shape[0]
    Hp = x.shape[2] // PATCH
    Wp = x.shape[3] // PATCH
    D = WIDTH

    # Patch extraction (stride==kernel Conv2d == patch gather); one tiny copy.
    patches = x.reshape(B, IN_CH, Hp, PATCH, Wp, PATCH)
    patches = patches.transpose(0, 2, 4, 1, 3, 5).reshape(B, Hp * Wp, CPP)

    # Parameter-only re-layouts (tiny): conv kernel as a matmul; QKV / out-proj
    # weights split per head so the kernel never lane-slices activations.
    w_patch = params["conv1"].reshape(D, CPP).T                         # (CPP, D)
    cls_pos = params["cls"] + params["pos"][0:1]                        # (1, D)
    pos_tok = params["pos"][1:]                                         # (N_TOK, D)
    qkv_w = params["in_w"].reshape(LAYERS, D, 3, HEADS, HEAD_DIM)
    qkv_w = qkv_w.transpose(0, 2, 3, 1, 4).reshape(LAYERS, 3 * HEADS, D, HEAD_DIM)
    qkv_b = params["in_b"].reshape(LAYERS, 1, 3, HEADS, HEAD_DIM)
    qkv_b = qkv_b.transpose(0, 2, 3, 1, 4).reshape(LAYERS, 3 * HEADS, 1, HEAD_DIM)
    out_w = params["out_w"].reshape(LAYERS, HEADS, HEAD_DIM, D)         # (L,H,Dh,D)

    def shared(shape):
        zeros = (0,) * len(shape)
        return pl.BlockSpec(shape, lambda b, l: zeros)

    def per_batch(shape):
        rest = (0,) * (len(shape) - 1)
        return pl.BlockSpec(shape, lambda b, l: (b,) + rest)

    def per_layer(shape):
        rest = (0,) * (len(shape) - 1)
        return pl.BlockSpec(shape, lambda b, l: (l,) + rest)

    grid_spec = pltpu.PrefetchScalarGridSpec(
        num_scalar_prefetch=0,
        grid=(B, LAYERS),
        in_specs=[
            per_batch((1, N_TOK, CPP)),                          # patches
            shared((CPP, D)),                                    # patch-embed weight
            shared((1, D)),                                      # cls + pos[0]
            shared((N_TOK, D)),                                  # pos[1:]
            shared((1, D)), shared((1, D)),                      # ln_pre g/b
            per_layer((1, 1, D)), per_layer((1, 1, D)),          # ln_1 g/b
            per_layer((1, 3 * HEADS, D, HEAD_DIM)),              # per-head QKV weight
            per_layer((1, 3 * HEADS, 1, HEAD_DIM)),              # per-head QKV bias
            per_layer((1, HEADS, HEAD_DIM, D)),                  # per-head out-proj weight
            per_layer((1, 1, D)),                                # out-proj bias
            per_layer((1, 1, D)), per_layer((1, 1, D)),          # ln_2 g/b
            per_layer((1, D, 4 * D)), per_layer((1, 1, 4 * D)),  # c_fc w/b
            per_layer((1, 4 * D, D)), per_layer((1, 1, D)),      # c_proj w/b
            shared((1, D)), shared((1, D)),                      # ln_post g/b
            shared((D, OUT_DIM)),                                # final projection
        ],
        out_specs=pl.BlockSpec((1, 1, OUT_DIM), lambda b, l: (b, 0, 0)),
        scratch_shapes=[pltpu.VMEM((SEQ, D), jnp.float32)],      # resident token state
    )

    out = pl.pallas_call(
        _vit_kernel,
        grid_spec=grid_spec,
        out_shape=jax.ShapeDtypeStruct((B, 1, OUT_DIM), jnp.float32),
        compiler_params=pltpu.CompilerParams(
            dimension_semantics=("parallel", "arbitrary")),
    )(patches, w_patch, cls_pos, pos_tok,
      params["ln_pre_g"], params["ln_pre_b"],
      params["ln1_g"], params["ln1_b"], qkv_w, qkv_b,
      out_w, params["out_b"],
      params["ln2_g"], params["ln2_b"], params["fc_w"], params["fc_b"],
      params["pj_w"], params["pj_b"],
      params["ln_post_g"], params["ln_post_b"], params["proj"])
    return out.reshape(B, OUT_DIM)


# ----------------------------- params & reference ----------------------------
def init_params(key):
    D = WIDTH
    scale = D ** (-0.5)
    ks = jax.random.split(key, 12)
    return {
        "conv1": 0.02 * jax.random.normal(ks[0], (D, IN_CH, PATCH, PATCH), jnp.float32),
        "cls": scale * jax.random.normal(ks[1], (1, D), jnp.float32),
        "pos": scale * jax.random.normal(ks[2], (SEQ, D), jnp.float32),
        "ln_pre_g": jnp.ones((1, D), jnp.float32),
        "ln_pre_b": jnp.zeros((1, D), jnp.float32),
        "ln_post_g": jnp.ones((1, D), jnp.float32),
        "ln_post_b": jnp.zeros((1, D), jnp.float32),
        "proj": scale * jax.random.normal(ks[3], (D, OUT_DIM), jnp.float32),
        # transformer blocks, stacked along a leading layer axis
        "ln1_g": jnp.ones((LAYERS, 1, D), jnp.float32),
        "ln1_b": jnp.zeros((LAYERS, 1, D), jnp.float32),
        "in_w": 0.02 * jax.random.normal(ks[4], (LAYERS, D, 3 * D), jnp.float32),
        "in_b": 0.02 * jax.random.normal(ks[5], (LAYERS, 1, 3 * D), jnp.float32),
        "out_w": 0.02 * jax.random.normal(ks[6], (LAYERS, D, D), jnp.float32),
        "out_b": 0.02 * jax.random.normal(ks[7], (LAYERS, 1, D), jnp.float32),
        "ln2_g": jnp.ones((LAYERS, 1, D), jnp.float32),
        "ln2_b": jnp.zeros((LAYERS, 1, D), jnp.float32),
        "fc_w": 0.02 * jax.random.normal(ks[8], (LAYERS, D, 4 * D), jnp.float32),
        "fc_b": 0.02 * jax.random.normal(ks[9], (LAYERS, 1, 4 * D), jnp.float32),
        "pj_w": 0.02 * jax.random.normal(ks[10], (LAYERS, 4 * D, D), jnp.float32),
        "pj_b": 0.02 * jax.random.normal(ks[11], (LAYERS, 1, D), jnp.float32),
    }


def vit_reference(x, p):
    """Pure-jnp reference matching the PyTorch VisionTransformer forward."""
    B = x.shape[0]
    Hp = x.shape[2] // PATCH
    Wp = x.shape[3] // PATCH
    D, H, Dh = WIDTH, HEADS, HEAD_DIM

    patches = x.reshape(B, IN_CH, Hp, PATCH, Wp, PATCH)
    patches = patches.transpose(0, 2, 4, 1, 3, 5).reshape(B, Hp * Wp, CPP)
    tok = patches @ p["conv1"].reshape(D, CPP).T                 # (B, N, D)

    cls = jnp.broadcast_to(p["cls"][None], (B, 1, D))
    xx = jnp.concatenate([cls, tok], axis=1) + p["pos"][None]

    def ln(t, g, b):
        m = t.mean(-1, keepdims=True)
        v = jnp.square(t - m).mean(-1, keepdims=True)
        return (t - m) * jax.lax.rsqrt(v + LN_EPS) * g + b

    xx = ln(xx, p["ln_pre_g"][0], p["ln_pre_b"][0])
    for li in range(LAYERS):
        h = ln(xx, p["ln1_g"][li, 0], p["ln1_b"][li, 0])
        qkv = h @ p["in_w"][li] + p["in_b"][li, 0]
        q, k, v = jnp.split(qkv, 3, axis=-1)
        sh = lambda t: t.reshape(B, -1, H, Dh).transpose(0, 2, 1, 3)
        q, k, v = sh(q), sh(k), sh(v)
        s = jnp.einsum("bhqd,bhkd->bhqk", q, k) / math.sqrt(Dh)
        pr = jax.nn.softmax(s, axis=-1)
        o = jnp.einsum("bhqk,bhkd->bhqd", pr, v)
        o = o.transpose(0, 2, 1, 3).reshape(B, -1, D)
        xx = xx + (o @ p["out_w"][li] + p["out_b"][li, 0])
        h = ln(xx, p["ln2_g"][li, 0], p["ln2_b"][li, 0])
        h = h @ p["fc_w"][li] + p["fc_b"][li, 0]
        h = h * jax.nn.sigmoid(1.702 * h)
        xx = xx + (h @ p["pj_w"][li] + p["pj_b"][li, 0])

    cls_tok = ln(xx[:, 0, :], p["ln_post_g"][0], p["ln_post_b"][0])
    return cls_tok @ p["proj"]


# ----------------------------- main -------------------------------------------
if __name__ == "__main__":
    key = jax.random.PRNGKey(0)
    k_x, k_p = jax.random.split(key)
    x = jax.random.normal(k_x, (2, IN_CH, IMG, IMG), jnp.float32)
    params = init_params(k_p)

    fwd = jax.jit(vit_forward)
    out = fwd(x, params)
    jax.block_until_ready(out)

    assert out.shape == (2, OUT_DIM), out.shape
    assert bool(jnp.all(jnp.isfinite(out)))

    # Numerical sanity check against a pure-JAX reference of the same module
    # (loose tolerance only to absorb the approx-reciprocal softmax denom).
    ref = jax.jit(vit_reference)(x, params)
    assert np.allclose(np.asarray(out), np.asarray(ref), rtol=3e-2, atol=3e-2), (
        float(jnp.max(jnp.abs(out - ref))))

    print("KERNEL_OK")
</pallas_src>

<mosaic_0001>
module attributes {stable_mosaic.version = 11 : i64} {
  func.func @_vit_kernel(%arg0: i32, %arg1: i32, %arg2: memref<1x16x192xf32, #tpu.memory_space<vmem>>, %arg3: memref<192x64xf32, #tpu.memory_space<vmem>>, %arg4: memref<1x64xf32, #tpu.memory_space<vmem>>, %arg5: memref<16x64xf32, #tpu.memory_space<vmem>>, %arg6: memref<1x64xf32, #tpu.memory_space<vmem>>, %arg7: memref<1x64xf32, #tpu.memory_space<vmem>>, %arg8: memref<1x1x64xf32, #tpu.memory_space<vmem>>, %arg9: memref<1x1x64xf32, #tpu.memory_space<vmem>>, %arg10: memref<1x12x64x16xf32, #tpu.memory_space<vmem>>, %arg11: memref<1x12x1x16xf32, #tpu.memory_space<vmem>>, %arg12: memref<1x4x16x64xf32, #tpu.memory_space<vmem>>, %arg13: memref<1x1x64xf32, #tpu.memory_space<vmem>>, %arg14: memref<1x1x64xf32, #tpu.memory_space<vmem>>, %arg15: memref<1x1x64xf32, #tpu.memory_space<vmem>>, %arg16: memref<1x64x256xf32, #tpu.memory_space<vmem>>, %arg17: memref<1x1x256xf32, #tpu.memory_space<vmem>>, %arg18: memref<1x256x64xf32, #tpu.memory_space<vmem>>, %arg19: memref<1x1x64xf32, #tpu.memory_space<vmem>>, %arg20: memref<1x64xf32, #tpu.memory_space<vmem>>, %arg21: memref<1x64xf32, #tpu.memory_space<vmem>>, %arg22: memref<64x32xf32, #tpu.memory_space<vmem>>, %arg23: memref<1x1x32xf32, #tpu.memory_space<vmem>>, %arg24: memref<17x64xf32, #tpu.memory_space<vmem>>) attributes {dimension_semantics = [#tpu.dimension_semantics<parallel>, #tpu.dimension_semantics<arbitrary>], iteration_bounds = array<i64: 2, 2>, scalar_prefetch = 0 : i64, scratch_operands = 1 : i64, tpu.core_type = #tpu.core_type<tc>, window_params = [{transform_indices = @transform_0, window_bounds = array<i64: 1, 16, 192>}, {pipeline_mode = #tpu.pipeline_mode<synchronous>, transform_indices = @transform_1, window_bounds = array<i64: 192, 64>}, {pipeline_mode = #tpu.pipeline_mode<synchronous>, transform_indices = @transform_2, window_bounds = array<i64: 1, 64>}, {pipeline_mode = #tpu.pipeline_mode<synchronous>, transform_indices = @transform_3, window_bounds = array<i64: 16, 64>}, {pipeline_mode = #tpu.pipeline_mode<synchronous>, transform_indices = @transform_4, window_bounds = array<i64: 1, 64>}, {pipeline_mode = #tpu.pipeline_mode<synchronous>, transform_indices = @transform_5, window_bounds = array<i64: 1, 64>}, {transform_indices = @transform_6, window_bounds = array<i64: 1, 1, 64>}, {transform_indices = @transform_7, window_bounds = array<i64: 1, 1, 64>}, {transform_indices = @transform_8, window_bounds = array<i64: 1, 12, 64, 16>}, {transform_indices = @transform_9, window_bounds = array<i64: 1, 12, 1, 16>}, {transform_indices = @transform_10, window_bounds = array<i64: 1, 4, 16, 64>}, {transform_indices = @transform_11, window_bounds = array<i64: 1, 1, 64>}, {transform_indices = @transform_12, window_bounds = array<i64: 1, 1, 64>}, {transform_indices = @transform_13, window_bounds = array<i64: 1, 1, 64>}, {transform_indices = @transform_14, window_bounds = array<i64: 1, 64, 256>}, {transform_indices = @transform_15, window_bounds = array<i64: 1, 1, 256>}, {transform_indices = @transform_16, window_bounds = array<i64: 1, 256, 64>}, {transform_indices = @transform_17, window_bounds = array<i64: 1, 1, 64>}, {pipeline_mode = #tpu.pipeline_mode<synchronous>, transform_indices = @transform_18, window_bounds = array<i64: 1, 64>}, {pipeline_mode = #tpu.pipeline_mode<synchronous>, transform_indices = @transform_19, window_bounds = array<i64: 1, 64>}, {pipeline_mode = #tpu.pipeline_mode<synchronous>, transform_indices = @transform_20, window_bounds = array<i64: 64, 32>}, {transform_indices = @transform_21, window_bounds = array<i64: 1, 1, 32>}]} {
    %c0_i32 = arith.constant 0 : i32
    %0 = arith.cmpi eq, %arg1, %c0_i32 : i32
    %1 = arith.extui %0 : i1 to i32
    %c0_i32_0 = arith.constant 0 : i32
    %2 = arith.cmpi ne, %1, %c0_i32_0 : i32
    scf.if %2 {
      %c0_182 = arith.constant 0 : index
      %c0_183 = arith.constant 0 : index
      %c0_184 = arith.constant 0 : index
      %243 = vector.load %arg2[%c0_182, %c0_183, %c0_184] : memref<1x16x192xf32, #tpu.memory_space<vmem>>, vector<1x16x192xf32>
      %244 = vector.shape_cast %243 : vector<1x16x192xf32> to vector<16x192xf32>
      %c0_185 = arith.constant 0 : index
      %c0_186 = arith.constant 0 : index
      %245 = vector.load %arg3[%c0_185, %c0_186] : memref<192x64xf32, #tpu.memory_space<vmem>>, vector<192x64xf32>
      %cst_187 = arith.constant dense<0.000000e+00> : vector<16x64xf32>
      %246 = tpu.matmul %244, %245, %cst_187 {dimension_numbers = #tpu.dot_dimension_numbers<[1], [0], [0], [1], [0, 0, 1, 1], [], []>} : vector<16x192xf32>, vector<192x64xf32>, vector<16x64xf32> -> vector<16x64xf32>
      %c0_188 = arith.constant 0 : index
      %c0_189 = arith.constant 0 : index
      %247 = vector.load %arg5[%c0_188, %c0_189] : memref<16x64xf32, #tpu.memory_space<vmem>>, vector<16x64xf32>
      %248 = arith.addf %246, %247 : vector<16x64xf32>
      %c0_190 = arith.constant 0 : index
      %c0_191 = arith.constant 0 : index
      %249 = vector.load %arg24[%c0_190, %c0_191] : memref<17x64xf32, #tpu.memory_space<vmem>>, vector<16x64xf32>
      tpu.vector_store %arg24[%c0_190, %c0_191], %248 {strides = array<i32>} : memref<17x64xf32, #tpu.memory_space<vmem>>, vector<16x64xf32>,
      %c0_192 = arith.constant 0 : index
      %c0_193 = arith.constant 0 : index
      %250 = vector.load %arg4[%c0_192, %c0_193] : memref<1x64xf32, #tpu.memory_space<vmem>>, vector<1x64xf32>
      %c16 = arith.constant 16 : index
      %c0_194 = arith.constant 0 : index
      %251 = vector.load %arg24[%c16, %c0_194] : memref<17x64xf32, #tpu.memory_space<vmem>>, vector<1x64xf32>
      tpu.vector_store %arg24[%c16, %c0_194], %250 {strides = array<i32>} : memref<17x64xf32, #tpu.memory_space<vmem>>, vector<1x64xf32>,
      %c0_195 = arith.constant 0 : index
      %c0_196 = arith.constant 0 : index
      %252 = vector.load %arg24[%c0_195, %c0_196] : memref<17x64xf32, #tpu.memory_space<vmem>>, vector<17x64xf32>
      %c0_197 = arith.constant 0 : index
      %c0_198 = arith.constant 0 : index
      %253 = vector.load %arg6[%c0_197, %c0_198] : memref<1x64xf32, #tpu.memory_space<vmem>>, vector<1x64xf32>
      %c0_199 = arith.constant 0 : index
      %c0_200 = arith.constant 0 : index
      %254 = vector.load %arg7[%c0_199, %c0_200] : memref<1x64xf32, #tpu.memory_space<vmem>>, vector<1x64xf32>
      %cst_201 = arith.constant dense<0.000000e+00> : vector<17xf32>
      %255 = vector.multi_reduction <add>, %252, %cst_201 [1] : vector<17x64xf32> to vector<17xf32>
      %256 = vector.shape_cast %255 : vector<17xf32> to vector<17x1xf32>
      %cst_202 = arith.constant 6.400000e+01 : f32
      %257 = vector.broadcast %cst_202 : f32 to vector<17x1xf32>
      %258 = arith.divf %256, %257 : vector<17x1xf32>
      %259 = vector.broadcast %258 : vector<17x1xf32> to vector<17x64xf32>
      %260 = arith.subf %252, %259 : vector<17x64xf32>
      %261 = arith.mulf %260, %260 : vector<17x64xf32>
      %cst_203 = arith.constant dense<0.000000e+00> : vector<17xf32>
      %262 = vector.multi_reduction <add>, %261, %cst_203 [1] : vector<17x64xf32> to vector<17xf32>
      %263 = vector.shape_cast %262 : vector<17xf32> to vector<17x1xf32>
      %cst_204 = arith.constant 6.400000e+01 : f32
      %264 = vector.broadcast %cst_204 : f32 to vector<17x1xf32>
      %265 = arith.divf %263, %264 : vector<17x1xf32>
      %266 = vector.broadcast %258 : vector<17x1xf32> to vector<17x64xf32>
      %267 = arith.subf %252, %266 : vector<17x64xf32>
      %cst_205 = arith.constant 9.99999974E-6 : f32
      %268 = vector.broadcast %cst_205 : f32 to vector<17x1xf32>
      %269 = arith.addf %265, %268 : vector<17x1xf32>
      %270 = math.rsqrt %269 : vector<17x1xf32>
      %271 = vector.broadcast %270 : vector<17x1xf32> to vector<17x64xf32>
      %272 = arith.mulf %267, %271 : vector<17x64xf32>
      %273 = vector.broadcast %253 : vector<1x64xf32> to vector<17x64xf32>
      %274 = arith.mulf %272, %273 : vector<17x64xf32>
      %275 = vector.broadcast %254 : vector<1x64xf32> to vector<17x64xf32>
      %276 = arith.addf %274, %275 : vector<17x64xf32>
      %c0_206 = arith.constant 0 : index
      %c0_207 = arith.constant 0 : index
      %277 = vector.load %arg24[%c0_206, %c0_207] : memref<17x64xf32, #tpu.memory_space<vmem>>, vector<17x64xf32>
      tpu.vector_store %arg24[%c0_206, %c0_207], %276 {strides = array<i32>} : memref<17x64xf32, #tpu.memory_space<vmem>>, vector<17x64xf32>,
    } else {
    }
    %c0 = arith.constant 0 : index
    %c0_1 = arith.constant 0 : index
    %3 = vector.load %arg24[%c0, %c0_1] : memref<17x64xf32, #tpu.memory_space<vmem>>, vector<17x64xf32>
    %c0_2 = arith.constant 0 : index
    %c0_3 = arith.constant 0 : index
    %c0_4 = arith.constant 0 : index
    %4 = vector.load %arg8[%c0_2, %c0_3, %c0_4] : memref<1x1x64xf32, #tpu.memory_space<vmem>>, vector<1x1x64xf32>
    %5 = vector.shape_cast %4 : vector<1x1x64xf32> to vector<1x64xf32>
    %c0_5 = arith.constant 0 : index
    %c0_6 = arith.constant 0 : index
    %c0_7 = arith.constant 0 : index
    %6 = vector.load %arg9[%c0_5, %c0_6, %c0_7] : memref<1x1x64xf32, #tpu.memory_space<vmem>>, vector<1x1x64xf32>
    %7 = vector.shape_cast %6 : vector<1x1x64xf32> to vector<1x64xf32>
    %cst = arith.constant dense<0.000000e+00> : vector<17xf32>
    %8 = vector.multi_reduction <add>, %3, %cst [1] : vector<17x64xf32> to vector<17xf32>
    %9 = vector.shape_cast %8 : vector<17xf32> to vector<17x1xf32>
    %cst_8 = arith.constant 6.400000e+01 : f32
    %10 = vector.broadcast %cst_8 : f32 to vector<17x1xf32>
    %11 = arith.divf %9, %10 : vector<17x1xf32>
    %12 = vector.broadcast %11 : vector<17x1xf32> to vector<17x64xf32>
    %13 = arith.subf %3, %12 : vector<17x64xf32>
    %14 = arith.mulf %13, %13 : vector<17x64xf32>
    %cst_9 = arith.constant dense<0.000000e+00> : vector<17xf32>
    %15 = vector.multi_reduction <add>, %14, %cst_9 [1] : vector<17x64xf32> to vector<17xf32>
    %16 = vector.shape_cast %15 : vector<17xf32> to vector<17x1xf32>
    %cst_10 = arith.constant 6.400000e+01 : f32
    %17 = vector.broadcast %cst_10 : f32 to vector<17x1xf32>
    %18 = arith.divf %16, %17 : vector<17x1xf32>
    %19 = vector.broadcast %11 : vector<17x1xf32> to vector<17x64xf32>
    %20 = arith.subf %3, %19 : vector<17x64xf32>
    %cst_11 = arith.constant 9.99999974E-6 : f32
    %21 = vector.broadcast %cst_11 : f32 to vector<17x1xf32>
    %22 = arith.addf %18, %21 : vector<17x1xf32>
    %23 = math.rsqrt %22 : vector<17x1xf32>
    %24 = vector.broadcast %23 : vector<17x1xf32> to vector<17x64xf32>
    %25 = arith.mulf %20, %24 : vector<17x64xf32>
    %26 = vector.broadcast %5 : vector<1x64xf32> to vector<17x64xf32>
    %27 = arith.mulf %25, %26 : vector<17x64xf32>
    %28 = vector.broadcast %7 : vector<1x64xf32> to vector<17x64xf32>
    %29 = arith.addf %27, %28 : vector<17x64xf32>
    %c0_12 = arith.constant 0 : index
    %c0_13 = arith.constant 0 : index
    %c0_14 = arith.constant 0 : index
    %30 = vector.load %arg13[%c0_12, %c0_13, %c0_14] : memref<1x1x64xf32, #tpu.memory_space<vmem>>, vector<1x1x64xf32>
    %31 = vector.shape_cast %30 : vector<1x1x64xf32> to vector<1x64xf32>
    %32 = vector.broadcast %31 : vector<1x64xf32> to vector<17x64xf32>
    %33 = arith.addf %3, %32 : vector<17x64xf32>
    %c0_15 = arith.constant 0 : index
    %c0_16 = arith.constant 0 : index
    %c0_17 = arith.constant 0 : index
    %c0_18 = arith.constant 0 : index
    %34 = vector.load %arg10[%c0_15, %c0_16, %c0_17, %c0_18] : memref<1x12x64x16xf32, #tpu.memory_space<vmem>>, vector<1x1x64x16xf32>
    %35 = vector.shape_cast %34 : vector<1x1x64x16xf32> to vector<64x16xf32>
    %cst_19 = arith.constant dense<0.000000e+00> : vector<17x16xf32>
    %36 = tpu.matmul %29, %35, %cst_19 {dimension_numbers = #tpu.dot_dimension_numbers<[1], [0], [0], [1], [0, 0, 1, 1], [], []>} : vector<17x64xf32>, vector<64x16xf32>, vector<17x16xf32> -> vector<17x16xf32>
    %c0_20 = arith.constant 0 : index
    %c0_21 = arith.constant 0 : index
    %c0_22 = arith.constant 0 : index
    %c0_23 = arith.constant 0 : index
    %37 = vector.load %arg11[%c0_20, %c0_21, %c0_22, %c0_23] : memref<1x12x1x16xf32, #tpu.memory_space<vmem>>, vector<1x1x1x16xf32>
    %38 = vector.shape_cast %37 : vector<1x1x1x16xf32> to vector<1x16xf32>
    %39 = vector.broadcast %38 : vector<1x16xf32> to vector<17x16xf32>
    %40 = arith.addf %36, %39 : vector<17x16xf32>
    %c0_24 = arith.constant 0 : index
    %c4 = arith.constant 4 : index
    %c0_25 = arith.constant 0 : index
    %c0_26 = arith.constant 0 : index
    %41 = vector.load %arg10[%c0_24, %c4, %c0_25, %c0_26] : memref<1x12x64x16xf32, #tpu.memory_space<vmem>>, vector<1x1x64x16xf32>
    %42 = vector.shape_cast %41 : vector<1x1x64x16xf32> to vector<64x16xf32>
    %cst_27 = arith.constant dense<0.000000e+00> : vector<17x16xf32>
    %43 = tpu.matmul %29, %42, %cst_27 {dimension_numbers = #tpu.dot_dimension_numbers<[1], [0], [0], [1], [0, 0, 1, 1], [], []>} : vector<17x64xf32>, vector<64x16xf32>, vector<17x16xf32> -> vector<17x16xf32>
    %c0_28 = arith.constant 0 : index
    %c4_29 = arith.constant 4 : index
    %c0_30 = arith.constant 0 : index
    %c0_31 = arith.constant 0 : index
    %44 = vector.load %arg11[%c0_28, %c4_29, %c0_30, %c0_31] : memref<1x12x1x16xf32, #tpu.memory_space<vmem>>, vector<1x1x1x16xf32>
    %45 = vector.shape_cast %44 : vector<1x1x1x16xf32> to vector<1x16xf32>
    %46 = vector.broadcast %45 : vector<1x16xf32> to vector<17x16xf32>
    %47 = arith.addf %43, %46 : vector<17x16xf32>
    %c0_32 = arith.constant 0 : index
    %c8 = arith.constant 8 : index
    %c0_33 = arith.constant 0 : index
    %c0_34 = arith.constant 0 : index
    %48 = vector.load %arg10[%c0_32, %c8, %c0_33, %c0_34] : memref<1x12x64x16xf32, #tpu.memory_space<vmem>>, vector<1x1x64x16xf32>
    %49 = vector.shape_cast %48 : vector<1x1x64x16xf32> to vector<64x16xf32>
    %cst_35 = arith.constant dense<0.000000e+00> : vector<17x16xf32>
    %50 = tpu.matmul %29, %49, %cst_35 {dimension_numbers = #tpu.dot_dimension_numbers<[1], [0], [0], [1], [0, 0, 1, 1], [], []>} : vector<17x64xf32>, vector<64x16xf32>, vector<17x16xf32> -> vector<17x16xf32>
    %c0_36 = arith.constant 0 : index
    %c8_37 = arith.constant 8 : index
    %c0_38 = arith.constant 0 : index
    %c0_39 = arith.constant 0 : index
    %51 = vector.load %arg11[%c0_36, %c8_37, %c0_38, %c0_39] : memref<1x12x1x16xf32, #tpu.memory_space<vmem>>, vector<1x1x1x16xf32>
    %52 = vector.shape_cast %51 : vector<1x1x1x16xf32> to vector<1x16xf32>
    %53 = vector.broadcast %52 : vector<1x16xf32> to vector<17x16xf32>
    %54 = arith.addf %50, %53 : vector<17x16xf32>
    %cst_40 = arith.constant 2.500000e-01 : f32
    %55 = vector.broadcast %cst_40 : f32 to vector<17x16xf32>
    %56 = arith.mulf %40, %55 : vector<17x16xf32>
    %cst_41 = arith.constant dense<0.000000e+00> : vector<17x17xf32>
    %57 = tpu.matmul %56, %47, %cst_41 {dimension_numbers = #tpu.dot_dimension_numbers<[1], [1], [0], [0], [0, 0, 1, 0], [], []>} : vector<17x16xf32>, vector<17x16xf32>, vector<17x17xf32> -> vector<17x17xf32>
    %cst_42 = arith.constant dense<0xFF800000> : vector<17xf32>
    %58 = vector.multi_reduction <maximumf>, %57, %cst_42 [1] : vector<17x17xf32> to vector<17xf32>
    %59 = vector.shape_cast %58 : vector<17xf32> to vector<17x1xf32>
    %60 = vector.broadcast %59 : vector<17x1xf32> to vector<17x17xf32>
    %61 = arith.subf %57, %60 : vector<17x17xf32>
    %62 = math.exp %61 : vector<17x17xf32>
    %cst_43 = arith.constant dense<0.000000e+00> : vector<17xf32>
    %63 = vector.multi_reduction <add>, %62, %cst_43 [1] : vector<17x17xf32> to vector<17xf32>
    %64 = vector.shape_cast %63 : vector<17xf32> to vector<17x1xf32>
    %65 = tpu.reciprocal %64 {approx = true} : vector<17x1xf32> -> vector<17x1xf32>
    %66 = vector.broadcast %65 : vector<17x1xf32> to vector<17x17xf32>
    %67 = arith.mulf %62, %66 : vector<17x17xf32>
    %cst_44 = arith.constant dense<0.000000e+00> : vector<17x16xf32>
    %68 = tpu.matmul %67, %54, %cst_44 {dimension_numbers = #tpu.dot_dimension_numbers<[1], [0], [0], [1], [0, 0, 1, 1], [], []>} : vector<17x17xf32>, vector<17x16xf32>, vector<17x16xf32> -> vector<17x16xf32>
    %c0_45 = arith.constant 0 : index
    %c0_46 = arith.constant 0 : index
    %c0_47 = arith.constant 0 : index
    %c0_48 = arith.constant 0 : index
    %69 = vector.load %arg12[%c0_45, %c0_46, %c0_47, %c0_48] : memref<1x4x16x64xf32, #tpu.memory_space<vmem>>, vector<1x1x16x64xf32>
    %70 = vector.shape_cast %69 : vector<1x1x16x64xf32> to vector<16x64xf32>
    %cst_49 = arith.constant dense<0.000000e+00> : vector<17x64xf32>
    %71 = tpu.matmul %68, %70, %cst_49 {dimension_numbers = #tpu.dot_dimension_numbers<[1], [0], [0], [1], [0, 0, 1, 1], [], []>} : vector<17x16xf32>, vector<16x64xf32>, vector<17x64xf32> -> vector<17x64xf32>
    %72 = arith.addf %33, %71 : vector<17x64xf32>
    %c0_50 = arith.constant 0 : index
    %c1 = arith.constant 1 : index
    %c0_51 = arith.constant 0 : index
    %c0_52 = arith.constant 0 : index
    %73 = vector.load %arg10[%c0_50, %c1, %c0_51, %c0_52] : memref<1x12x64x16xf32, #tpu.memory_space<vmem>>, vector<1x1x64x16xf32>
    %74 = vector.shape_cast %73 : vector<1x1x64x16xf32> to vector<64x16xf32>
    %cst_53 = arith.constant dense<0.000000e+00> : vector<17x16xf32>
    %75 = tpu.matmul %29, %74, %cst_53 {dimension_numbers = #tpu.dot_dimension_numbers<[1], [0], [0], [1], [0, 0, 1, 1], [], []>} : vector<17x64xf32>, vector<64x16xf32>, vector<17x16xf32> -> vector<17x16xf32>
    %c0_54 = arith.constant 0 : index
    %c1_55 = arith.constant 1 : index
    %c0_56 = arith.constant 0 : index
    %c0_57 = arith.constant 0 : index
    %76 = vector.load %arg11[%c0_54, %c1_55, %c0_56, %c0_57] : memref<1x12x1x16xf32, #tpu.memory_space<vmem>>, vector<1x1x1x16xf32>
    %77 = vector.shape_cast %76 : vector<1x1x1x16xf32> to vector<1x16xf32>
    %78 = vector.broadcast %77 : vector<1x16xf32> to vector<17x16xf32>
    %79 = arith.addf %75, %78 : vector<17x16xf32>
    %c0_58 = arith.constant 0 : index
    %c5 = arith.constant 5 : index
    %c0_59 = arith.constant 0 : index
    %c0_60 = arith.constant 0 : index
    %80 = vector.load %arg10[%c0_58, %c5, %c0_59, %c0_60] : memref<1x12x64x16xf32, #tpu.memory_space<vmem>>, vector<1x1x64x16xf32>
    %81 = vector.shape_cast %80 : vector<1x1x64x16xf32> to vector<64x16xf32>
    %cst_61 = arith.constant dense<0.000000e+00> : vector<17x16xf32>
    %82 = tpu.matmul %29, %81, %cst_61 {dimension_numbers = #tpu.dot_dimension_numbers<[1], [0], [0], [1], [0, 0, 1, 1], [], []>} : vector<17x64xf32>, vector<64x16xf32>, vector<17x16xf32> -> vector<17x16xf32>
    %c0_62 = arith.constant 0 : index
    %c5_63 = arith.constant 5 : index
    %c0_64 = arith.constant 0 : index
    %c0_65 = arith.constant 0 : index
    %83 = vector.load %arg11[%c0_62, %c5_63, %c0_64, %c0_65] : memref<1x12x1x16xf32, #tpu.memory_space<vmem>>, vector<1x1x1x16xf32>
    %84 = vector.shape_cast %83 : vector<1x1x1x16xf32> to vector<1x16xf32>
    %85 = vector.broadcast %84 : vector<1x16xf32> to vector<17x16xf32>
    %86 = arith.addf %82, %85 : vector<17x16xf32>
    %c0_66 = arith.constant 0 : index
    %c9 = arith.constant 9 : index
    %c0_67 = arith.constant 0 : index
    %c0_68 = arith.constant 0 : index
    %87 = vector.load %arg10[%c0_66, %c9, %c0_67, %c0_68] : memref<1x12x64x16xf32, #tpu.memory_space<vmem>>, vector<1x1x64x16xf32>
    %88 = vector.shape_cast %87 : vector<1x1x64x16xf32> to vector<64x16xf32>
    %cst_69 = arith.constant dense<0.000000e+00> : vector<17x16xf32>
    %89 = tpu.matmul %29, %88, %cst_69 {dimension_numbers = #tpu.dot_dimension_numbers<[1], [0], [0], [1], [0, 0, 1, 1], [], []>} : vector<17x64xf32>, vector<64x16xf32>, vector<17x16xf32> -> vector<17x16xf32>
    %c0_70 = arith.constant 0 : index
    %c9_71 = arith.constant 9 : index
    %c0_72 = arith.constant 0 : index
    %c0_73 = arith.constant 0 : index
    %90 = vector.load %arg11[%c0_70, %c9_71, %c0_72, %c0_73] : memref<1x12x1x16xf32, #tpu.memory_space<vmem>>, vector<1x1x1x16xf32>
    %91 = vector.shape_cast %90 : vector<1x1x1x16xf32> to vector<1x16xf32>
    %92 = vector.broadcast %91 : vector<1x16xf32> to vector<17x16xf32>
    %93 = arith.addf %89, %92 : vector<17x16xf32>
    %cst_74 = arith.constant 2.500000e-01 : f32
    %94 = vector.broadcast %cst_74 : f32 to vector<17x16xf32>
    %95 = arith.mulf %79, %94 : vector<17x16xf32>
    %cst_75 = arith.constant dense<0.000000e+00> : vector<17x17xf32>
    %96 = tpu.matmul %95, %86, %cst_75 {dimension_numbers = #tpu.dot_dimension_numbers<[1], [1], [0], [0], [0, 0, 1, 0], [], []>} : vector<17x16xf32>, vector<17x16xf32>, vector<17x17xf32> -> vector<17x17xf32>
    %cst_76 = arith.constant dense<0xFF800000> : vector<17xf32>
    %97 = vector.multi_reduction <maximumf>, %96, %cst_76 [1] : vector<17x17xf32> to vector<17xf32>
    %98 = vector.shape_cast %97 : vector<17xf32> to vector<17x1xf32>
    %99 = vector.broadcast %98 : vector<17x1xf32> to vector<17x17xf32>
    %100 = arith.subf %96, %99 : vector<17x17xf32>
    %101 = math.exp %100 : vector<17x17xf32>
    %cst_77 = arith.constant dense<0.000000e+00> : vector<17xf32>
    %102 = vector.multi_reduction <add>, %101, %cst_77 [1] : vector<17x17xf32> to vector<17xf32>
    %103 = vector.shape_cast %102 : vector<17xf32> to vector<17x1xf32>
    %104 = tpu.reciprocal %103 {approx = true} : vector<17x1xf32> -> vector<17x1xf32>
    %105 = vector.broadcast %104 : vector<17x1xf32> to vector<17x17xf32>
    %106 = arith.mulf %101, %105 : vector<17x17xf32>
    %cst_78 = arith.constant dense<0.000000e+00> : vector<17x16xf32>
    %107 = tpu.matmul %106, %93, %cst_78 {dimension_numbers = #tpu.dot_dimension_numbers<[1], [0], [0], [1], [0, 0, 1, 1], [], []>} : vector<17x17xf32>, vector<17x16xf32>, vector<17x16xf32> -> vector<17x16xf32>
    %c0_79 = arith.constant 0 : index
    %c1_80 = arith.constant 1 : index
    %c0_81 = arith.constant 0 : index
    %c0_82 = arith.constant 0 : index
    %108 = vector.load %arg12[%c0_79, %c1_80, %c0_81, %c0_82] : memref<1x4x16x64xf32, #tpu.memory_space<vmem>>, vector<1x1x16x64xf32>
    %109 = vector.shape_cast %108 : vector<1x1x16x64xf32> to vector<16x64xf32>
    %cst_83 = arith.constant dense<0.000000e+00> : vector<17x64xf32>
    %110 = tpu.matmul %107, %109, %cst_83 {dimension_numbers = #tpu.dot_dimension_numbers<[1], [0], [0], [1], [0, 0, 1, 1], [], []>} : vector<17x16xf32>, vector<16x64xf32>, vector<17x64xf32> -> vector<17x64xf32>
    %111 = arith.addf %72, %110 : vector<17x64xf32>
    %c0_84 = arith.constant 0 : index
    %c2 = arith.constant 2 : index
    %c0_85 = arith.constant 0 : index
    %c0_86 = arith.constant 0 : index
    %112 = vector.load %arg10[%c0_84, %c2, %c0_85, %c0_86] : memref<1x12x64x16xf32, #tpu.memory_space<vmem>>, vector<1x1x64x16xf32>
    %113 = vector.shape_cast %112 : vector<1x1x64x16xf32> to vector<64x16xf32>
    %cst_87 = arith.constant dense<0.000000e+00> : vector<17x16xf32>
    %114 = tpu.matmul %29, %113, %cst_87 {dimension_numbers = #tpu.dot_dimension_numbers<[1], [0], [0], [1], [0, 0, 1, 1], [], []>} : vector<17x64xf32>, vector<64x16xf32>, vector<17x16xf32> -> vector<17x16xf32>
    %c0_88 = arith.constant 0 : index
    %c2_89 = arith.constant 2 : index
    %c0_90 = arith.constant 0 : index
    %c0_91 = arith.constant 0 : index
    %115 = vector.load %arg11[%c0_88, %c2_89, %c0_90, %c0_91] : memref<1x12x1x16xf32, #tpu.memory_space<vmem>>, vector<1x1x1x16xf32>
    %116 = vector.shape_cast %115 : vector<1x1x1x16xf32> to vector<1x16xf32>
    %117 = vector.broadcast %116 : vector<1x16xf32> to vector<17x16xf32>
    %118 = arith.addf %114, %117 : vector<17x16xf32>
    %c0_92 = arith.constant 0 : index
    %c6 = arith.constant 6 : index
    %c0_93 = arith.constant 0 : index
    %c0_94 = arith.constant 0 : index
    %119 = vector.load %arg10[%c0_92, %c6, %c0_93, %c0_94] : memref<1x12x64x16xf32, #tpu.memory_space<vmem>>, vector<1x1x64x16xf32>
    %120 = vector.shape_cast %119 : vector<1x1x64x16xf32> to vector<64x16xf32>
    %cst_95 = arith.constant dense<0.000000e+00> : vector<17x16xf32>
    %121 = tpu.matmul %29, %120, %cst_95 {dimension_numbers = #tpu.dot_dimension_numbers<[1], [0], [0], [1], [0, 0, 1, 1], [], []>} : vector<17x64xf32>, vector<64x16xf32>, vector<17x16xf32> -> vector<17x16xf32>
    %c0_96 = arith.constant 0 : index
    %c6_97 = arith.constant 6 : index
    %c0_98 = arith.constant 0 : index
    %c0_99 = arith.constant 0 : index
    %122 = vector.load %arg11[%c0_96, %c6_97, %c0_98, %c0_99] : memref<1x12x1x16xf32, #tpu.memory_space<vmem>>, vector<1x1x1x16xf32>
    %123 = vector.shape_cast %122 : vector<1x1x1x16xf32> to vector<1x16xf32>
    %124 = vector.broadcast %123 : vector<1x16xf32> to vector<17x16xf32>
    %125 = arith.addf %121, %124 : vector<17x16xf32>
    %c0_100 = arith.constant 0 : index
    %c10 = arith.constant 10 : index
    %c0_101 = arith.constant 0 : index
    %c0_102 = arith.constant 0 : index
    %126 = vector.load %arg10[%c0_100, %c10, %c0_101, %c0_102] : memref<1x12x64x16xf32, #tpu.memory_space<vmem>>, vector<1x1x64x16xf32>
    %127 = vector.shape_cast %126 : vector<1x1x64x16xf32> to vector<64x16xf32>
    %cst_103 = arith.constant dense<0.000000e+00> : vector<17x16xf32>
    %128 = tpu.matmul %29, %127, %cst_103 {dimension_numbers = #tpu.dot_dimension_numbers<[1], [0], [0], [1], [0, 0, 1, 1], [], []>} : vector<17x64xf32>, vector<64x16xf32>, vector<17x16xf32> -> vector<17x16xf32>
    %c0_104 = arith.constant 0 : index
    %c10_105 = arith.constant 10 : index
    %c0_106 = arith.constant 0 : index
    %c0_107 = arith.constant 0 : index
    %129 = vector.load %arg11[%c0_104, %c10_105, %c0_106, %c0_107] : memref<1x12x1x16xf32, #tpu.memory_space<vmem>>, vector<1x1x1x16xf32>
    %130 = vector.shape_cast %129 : vector<1x1x1x16xf32> to vector<1x16xf32>
    %131 = vector.broadcast %130 : vector<1x16xf32> to vector<17x16xf32>
    %132 = arith.addf %128, %131 : vector<17x16xf32>
    %cst_108 = arith.constant 2.500000e-01 : f32
    %133 = vector.broadcast %cst_108 : f32 to vector<17x16xf32>
    %134 = arith.mulf %118, %133 : vector<17x16xf32>
    %cst_109 = arith.constant dense<0.000000e+00> : vector<17x17xf32>
    %135 = tpu.matmul %134, %125, %cst_109 {dimension_numbers = #tpu.dot_dimension_numbers<[1], [1], [0], [0], [0, 0, 1, 0], [], []>} : vector<17x16xf32>, vector<17x16xf32>, vector<17x17xf32> -> vector<17x17xf32>
    %cst_110 = arith.constant dense<0xFF800000> : vector<17xf32>
    %136 = vector.multi_reduction <maximumf>, %135, %cst_110 [1] : vector<17x17xf32> to vector<17xf32>
    %137 = vector.shape_cast %136 : vector<17xf32> to vector<17x1xf32>
    %138 = vector.broadcast %137 : vector<17x1xf32> to vector<17x17xf32>
    %139 = arith.subf %135, %138 : vector<17x17xf32>
    %140 = math.exp %139 : vector<17x17xf32>
    %cst_111 = arith.constant dense<0.000000e+00> : vector<17xf32>
    %141 = vector.multi_reduction <add>, %140, %cst_111 [1] : vector<17x17xf32> to vector<17xf32>
    %142 = vector.shape_cast %141 : vector<17xf32> to vector<17x1xf32>
    %143 = tpu.reciprocal %142 {approx = true} : vector<17x1xf32> -> vector<17x1xf32>
    %144 = vector.broadcast %143 : vector<17x1xf32> to vector<17x17xf32>
    %145 = arith.mulf %140, %144 : vector<17x17xf32>
    %cst_112 = arith.constant dense<0.000000e+00> : vector<17x16xf32>
    %146 = tpu.matmul %145, %132, %cst_112 {dimension_numbers = #tpu.dot_dimension_numbers<[1], [0], [0], [1], [0, 0, 1, 1], [], []>} : vector<17x17xf32>, vector<17x16xf32>, vector<17x16xf32> -> vector<17x16xf32>
    %c0_113 = arith.constant 0 : index
    %c2_114 = arith.constant 2 : index
    %c0_115 = arith.constant 0 : index
    %c0_116 = arith.constant 0 : index
    %147 = vector.load %arg12[%c0_113, %c2_114, %c0_115, %c0_116] : memref<1x4x16x64xf32, #tpu.memory_space<vmem>>, vector<1x1x16x64xf32>
    %148 = vector.shape_cast %147 : vector<1x1x16x64xf32> to vector<16x64xf32>
    %cst_117 = arith.constant dense<0.000000e+00> : vector<17x64xf32>
    %149 = tpu.matmul %146, %148, %cst_117 {dimension_numbers = #tpu.dot_dimension_numbers<[1], [0], [0], [1], [0, 0, 1, 1], [], []>} : vector<17x16xf32>, vector<16x64xf32>, vector<17x64xf32> -> vector<17x64xf32>
    %150 = arith.addf %111, %149 : vector<17x64xf32>
    %c0_118 = arith.constant 0 : index
    %c3 = arith.constant 3 : index
    %c0_119 = arith.constant 0 : index
    %c0_120 = arith.constant 0 : index
    %151 = vector.load %arg10[%c0_118, %c3, %c0_119, %c0_120] : memref<1x12x64x16xf32, #tpu.memory_space<vmem>>, vector<1x1x64x16xf32>
    %152 = vector.shape_cast %151 : vector<1x1x64x16xf32> to vector<64x16xf32>
    %cst_121 = arith.constant dense<0.000000e+00> : vector<17x16xf32>
    %153 = tpu.matmul %29, %152, %cst_121 {dimension_numbers = #tpu.dot_dimension_numbers<[1], [0], [0], [1], [0, 0, 1, 1], [], []>} : vector<17x64xf32>, vector<64x16xf32>, vector<17x16xf32> -> vector<17x16xf32>
    %c0_122 = arith.constant 0 : index
    %c3_123 = arith.constant 3 : index
    %c0_124 = arith.constant 0 : index
    %c0_125 = arith.constant 0 : index
    %154 = vector.load %arg11[%c0_122, %c3_123, %c0_124, %c0_125] : memref<1x12x1x16xf32, #tpu.memory_space<vmem>>, vector<1x1x1x16xf32>
    %155 = vector.shape_cast %154 : vector<1x1x1x16xf32> to vector<1x16xf32>
    %156 = vector.broadcast %155 : vector<1x16xf32> to vector<17x16xf32>
    %157 = arith.addf %153, %156 : vector<17x16xf32>
    %c0_126 = arith.constant 0 : index
    %c7 = arith.constant 7 : index
    %c0_127 = arith.constant 0 : index
    %c0_128 = arith.constant 0 : index
    %158 = vector.load %arg10[%c0_126, %c7, %c0_127, %c0_128] : memref<1x12x64x16xf32, #tpu.memory_space<vmem>>, vector<1x1x64x16xf32>
    %159 = vector.shape_cast %158 : vector<1x1x64x16xf32> to vector<64x16xf32>
    %cst_129 = arith.constant dense<0.000000e+00> : vector<17x16xf32>
    %160 = tpu.matmul %29, %159, %cst_129 {dimension_numbers = #tpu.dot_dimension_numbers<[1], [0], [0], [1], [0, 0, 1, 1], [], []>} : vector<17x64xf32>, vector<64x16xf32>, vector<17x16xf32> -> vector<17x16xf32>
    %c0_130 = arith.constant 0 : index
    %c7_131 = arith.constant 7 : index
    %c0_132 = arith.constant 0 : index
    %c0_133 = arith.constant 0 : index
    %161 = vector.load %arg11[%c0_130, %c7_131, %c0_132, %c0_133] : memref<1x12x1x16xf32, #tpu.memory_space<vmem>>, vector<1x1x1x16xf32>
    %162 = vector.shape_cast %161 : vector<1x1x1x16xf32> to vector<1x16xf32>
    %163 = vector.broadcast %162 : vector<1x16xf32> to vector<17x16xf32>
    %164 = arith.addf %160, %163 : vector<17x16xf32>
    %c0_134 = arith.constant 0 : index
    %c11 = arith.constant 11 : index
    %c0_135 = arith.constant 0 : index
    %c0_136 = arith.constant 0 : index
    %165 = vector.load %arg10[%c0_134, %c11, %c0_135, %c0_136] : memref<1x12x64x16xf32, #tpu.memory_space<vmem>>, vector<1x1x64x16xf32>
    %166 = vector.shape_cast %165 : vector<1x1x64x16xf32> to vector<64x16xf32>
    %cst_137 = arith.constant dense<0.000000e+00> : vector<17x16xf32>
    %167 = tpu.matmul %29, %166, %cst_137 {dimension_numbers = #tpu.dot_dimension_numbers<[1], [0], [0], [1], [0, 0, 1, 1], [], []>} : vector<17x64xf32>, vector<64x16xf32>, vector<17x16xf32> -> vector<17x16xf32>
    %c0_138 = arith.constant 0 : index
    %c11_139 = arith.constant 11 : index
    %c0_140 = arith.constant 0 : index
    %c0_141 = arith.constant 0 : index
    %168 = vector.load %arg11[%c0_138, %c11_139, %c0_140, %c0_141] : memref<1x12x1x16xf32, #tpu.memory_space<vmem>>, vector<1x1x1x16xf32>
    %169 = vector.shape_cast %168 : vector<1x1x1x16xf32> to vector<1x16xf32>
    %170 = vector.broadcast %169 : vector<1x16xf32> to vector<17x16xf32>
    %171 = arith.addf %167, %170 : vector<17x16xf32>
    %cst_142 = arith.constant 2.500000e-01 : f32
    %172 = vector.broadcast %cst_142 : f32 to vector<17x16xf32>
    %173 = arith.mulf %157, %172 : vector<17x16xf32>
    %cst_143 = arith.constant dense<0.000000e+00> : vector<17x17xf32>
    %174 = tpu.matmul %173, %164, %cst_143 {dimension_numbers = #tpu.dot_dimension_numbers<[1], [1], [0], [0], [0, 0, 1, 0], [], []>} : vector<17x16xf32>, vector<17x16xf32>, vector<17x17xf32> -> vector<17x17xf32>
    %cst_144 = arith.constant dense<0xFF800000> : vector<17xf32>
    %175 = vector.multi_reduction <maximumf>, %174, %cst_144 [1] : vector<17x17xf32> to vector<17xf32>
    %176 = vector.shape_cast %175 : vector<17xf32> to vector<17x1xf32>
    %177 = vector.broadcast %176 : vector<17x1xf32> to vector<17x17xf32>
    %178 = arith.subf %174, %177 : vector<17x17xf32>
    %179 = math.exp %178 : vector<17x17xf32>
    %cst_145 = arith.constant dense<0.000000e+00> : vector<17xf32>
    %180 = vector.multi_reduction <add>, %179, %cst_145 [1] : vector<17x17xf32> to vector<17xf32>
    %181 = vector.shape_cast %180 : vector<17xf32> to vector<17x1xf32>
    %182 = tpu.reciprocal %181 {approx = true} : vector<17x1xf32> -> vector<17x1xf32>
    %183 = vector.broadcast %182 : vector<17x1xf32> to vector<17x17xf32>
    %184 = arith.mulf %179, %183 : vector<17x17xf32>
    %cst_146 = arith.constant dense<0.000000e+00> : vector<17x16xf32>
    %185 = tpu.matmul %184, %171, %cst_146 {dimension_numbers = #tpu.dot_dimension_numbers<[1], [0], [0], [1], [0, 0, 1, 1], [], []>} : vector<17x17xf32>, vector<17x16xf32>, vector<17x16xf32> -> vector<17x16xf32>
    %c0_147 = arith.constant 0 : index
    %c3_148 = arith.constant 3 : index
    %c0_149 = arith.constant 0 : index
    %c0_150 = arith.constant 0 : index
    %186 = vector.load %arg12[%c0_147, %c3_148, %c0_149, %c0_150] : memref<1x4x16x64xf32, #tpu.memory_space<vmem>>, vector<1x1x16x64xf32>
    %187 = vector.shape_cast %186 : vector<1x1x16x64xf32> to vector<16x64xf32>
    %cst_151 = arith.constant dense<0.000000e+00> : vector<17x64xf32>
    %188 = tpu.matmul %185, %187, %cst_151 {dimension_numbers = #tpu.dot_dimension_numbers<[1], [0], [0], [1], [0, 0, 1, 1], [], []>} : vector<17x16xf32>, vector<16x64xf32>, vector<17x64xf32> -> vector<17x64xf32>
    %189 = arith.addf %150, %188 : vector<17x64xf32>
    %c0_152 = arith.constant 0 : index
    %c0_153 = arith.constant 0 : index
    %c0_154 = arith.constant 0 : index
    %190 = vector.load %arg14[%c0_152, %c0_153, %c0_154] : memref<1x1x64xf32, #tpu.memory_space<vmem>>, vector<1x1x64xf32>
    %191 = vector.shape_cast %190 : vector<1x1x64xf32> to vector<1x64xf32>
    %c0_155 = arith.constant 0 : index
    %c0_156 = arith.constant 0 : index
    %c0_157 = arith.constant 0 : index
    %192 = vector.load %arg15[%c0_155, %c0_156, %c0_157] : memref<1x1x64xf32, #tpu.memory_space<vmem>>, vector<1x1x64xf32>
    %193 = vector.shape_cast %192 : vector<1x1x64xf32> to vector<1x64xf32>
    %cst_158 = arith.constant dense<0.000000e+00> : vector<17xf32>
    %194 = vector.multi_reduction <add>, %189, %cst_158 [1] : vector<17x64xf32> to vector<17xf32>
    %195 = vector.shape_cast %194 : vector<17xf32> to vector<17x1xf32>
    %cst_159 = arith.constant 6.400000e+01 : f32
    %196 = vector.broadcast %cst_159 : f32 to vector<17x1xf32>
    %197 = arith.divf %195, %196 : vector<17x1xf32>
    %198 = vector.broadcast %197 : vector<17x1xf32> to vector<17x64xf32>
    %199 = arith.subf %189, %198 : vector<17x64xf32>
    %200 = arith.mulf %199, %199 : vector<17x64xf32>
    %cst_160 = arith.constant dense<0.000000e+00> : vector<17xf32>
    %201 = vector.multi_reduction <add>, %200, %cst_160 [1] : vector<17x64xf32> to vector<17xf32>
    %202 = vector.shape_cast %201 : vector<17xf32> to vector<17x1xf32>
    %cst_161 = arith.constant 6.400000e+01 : f32
    %203 = vector.broadcast %cst_161 : f32 to vector<17x1xf32>
    %204 = arith.divf %202, %203 : vector<17x1xf32>
    %205 = vector.broadcast %197 : vector<17x1xf32> to vector<17x64xf32>
    %206 = arith.subf %189, %205 : vector<17x64xf32>
    %cst_162 = arith.constant 9.99999974E-6 : f32
    %207 = vector.broadcast %cst_162 : f32 to vector<17x1xf32>
    %208 = arith.addf %204, %207 : vector<17x1xf32>
    %209 = math.rsqrt %208 : vector<17x1xf32>
    %210 = vector.broadcast %209 : vector<17x1xf32> to vector<17x64xf32>
    %211 = arith.mulf %206, %210 : vector<17x64xf32>
    %212 = vector.broadcast %191 : vector<1x64xf32> to vector<17x64xf32>
    %213 = arith.mulf %211, %212 : vector<17x64xf32>
    %214 = vector.broadcast %193 : vector<1x64xf32> to vector<17x64xf32>
    %215 = arith.addf %213, %214 : vector<17x64xf32>
    %c0_163 = arith.constant 0 : index
    %c0_164 = arith.constant 0 : index
    %c0_165 = arith.constant 0 : index
    %216 = vector.load %arg16[%c0_163, %c0_164, %c0_165] : memref<1x64x256xf32, #tpu.memory_space<vmem>>, vector<1x64x256xf32>
    %217 = vector.shape_cast %216 : vector<1x64x256xf32> to vector<64x256xf32>
    %cst_166 = arith.constant dense<0.000000e+00> : vector<17x256xf32>
    %218 = tpu.matmul %215, %217, %cst_166 {dimension_numbers = #tpu.dot_dimension_numbers<[1], [0], [0], [1], [0, 0, 1, 1], [], []>} : vector<17x64xf32>, vector<64x256xf32>, vector<17x256xf32> -> vector<17x256xf32>
    %c0_167 = arith.constant 0 : index
    %c0_168 = arith.constant 0 : index
    %c0_169 = arith.constant 0 : index
    %219 = vector.load %arg17[%c0_167, %c0_168, %c0_169] : memref<1x1x256xf32, #tpu.memory_space<vmem>>, vector<1x1x256xf32>
    %220 = vector.shape_cast %219 : vector<1x1x256xf32> to vector<1x256xf32>
    %221 = vector.broadcast %220 : vector<1x256xf32> to vector<17x256xf32>
    %222 = arith.addf %218, %221 : vector<17x256xf32>
    %cst_170 = arith.constant 1.702000e+00 : f32
    %223 = vector.broadcast %cst_170 : f32 to vector<17x256xf32>
    %224 = arith.mulf %223, %222 : vector<17x256xf32>
    %225 = arith.negf %224 : vector<17x256xf32>
    %226 = math.exp %225 : vector<17x256xf32>
    %cst_171 = arith.constant 1.000000e+00 : f32
    %227 = vector.broadcast %cst_171 : f32 to vector<17x256xf32>
    %228 = arith.addf %227, %226 : vector<17x256xf32>
    %229 = arith.divf %227, %228 : vector<17x256xf32>
    %230 = arith.mulf %222, %229 : vector<17x256xf32>
    %c0_172 = arith.constant 0 : index
    %c0_173 = arith.constant 0 : index
    %c0_174 = arith.constant 0 : index
    %231 = vector.load %arg18[%c0_172, %c0_173, %c0_174] : memref<1x256x64xf32, #tpu.memory_space<vmem>>, vector<1x256x64xf32>
    %232 = vector.shape_cast %231 : vector<1x256x64xf32> to vector<256x64xf32>
    %cst_175 = arith.constant dense<0.000000e+00> : vector<17x64xf32>
    %233 = tpu.matmul %230, %232, %cst_175 {dimension_numbers = #tpu.dot_dimension_numbers<[1], [0], [0], [1], [0, 0, 1, 1], [], []>} : vector<17x256xf32>, vector<256x64xf32>, vector<17x64xf32> -> vector<17x64xf32>
    %234 = arith.addf %189, %233 : vector<17x64xf32>
    %c0_176 = arith.constant 0 : index
    %c0_177 = arith.constant 0 : index
    %c0_178 = arith.constant 0 : index
    %235 = vector.load %arg19[%c0_176, %c0_177, %c0_178] : memref<1x1x64xf32, #tpu.memory_space<vmem>>, vector<1x1x64xf32>
    %236 = vector.shape_cast %235 : vector<1x1x64xf32> to vector<1x64xf32>
    %237 = vector.broadcast %236 : vector<1x64xf32> to vector<17x64xf32>
    %238 = arith.addf %234, %237 : vector<17x64xf32>
    %c0_179 = arith.constant 0 : index
    %c0_180 = arith.constant 0 : index
    %239 = vector.load %arg24[%c0_179, %c0_180] : memref<17x64xf32, #tpu.memory_space<vmem>>, vector<17x64xf32>
    tpu.vector_store %arg24[%c0_179, %c0_180], %238 {strides = array<i32>} : memref<17x64xf32, #tpu.memory_space<vmem>>, vector<17x64xf32>,
    %c1_i32 = arith.constant 1 : i32
    %240 = arith.cmpi eq, %arg1, %c1_i32 : i32
    %241 = arith.extui %240 : i1 to i32
    %c0_i32_181 = arith.constant 0 : i32
    %242 = arith.cmpi ne, %241, %c0_i32_181 : i32
    scf.if %242 {
      %243 = vector.extract_strided_slice %238 {offsets = [16, 0], sizes = [1, 64], strides = [1, 1]} : vector<17x64xf32> to vector<1x64xf32>
      %c0_182 = arith.constant 0 : index
      %c0_183 = arith.constant 0 : index
      %244 = vector.load %arg20[%c0_182, %c0_183] : memref<1x64xf32, #tpu.memory_space<vmem>>, vector<1x64xf32>
      %c0_184 = arith.constant 0 : index
      %c0_185 = arith.constant 0 : index
      %245 = vector.load %arg21[%c0_184, %c0_185] : memref<1x64xf32, #tpu.memory_space<vmem>>, vector<1x64xf32>
      %cst_186 = arith.constant dense<0.000000e+00> : vector<1xf32>
      %246 = vector.multi_reduction <add>, %243, %cst_186 [1] : vector<1x64xf32> to vector<1xf32>
      %247 = vector.shape_cast %246 : vector<1xf32> to vector<1x1xf32>
      %cst_187 = arith.constant 6.400000e+01 : f32
      %248 = vector.broadcast %cst_187 : f32 to vector<1x1xf32>
      %249 = arith.divf %247, %248 : vector<1x1xf32>
      %250 = vector.broadcast %249 : vector<1x1xf32> to vector<1x64xf32>
      %251 = arith.subf %243, %250 : vector<1x64xf32>
      %252 = arith.mulf %251, %251 : vector<1x64xf32>
      %cst_188 = arith.constant dense<0.000000e+00> : vector<1xf32>
      %253 = vector.multi_reduction <add>, %252, %cst_188 [1] : vector<1x64xf32> to vector<1xf32>
      %254 = vector.shape_cast %253 : vector<1xf32> to vector<1x1xf32>
      %cst_189 = arith.constant 6.400000e+01 : f32
      %255 = vector.broadcast %cst_189 : f32 to vector<1x1xf32>
      %256 = arith.divf %254, %255 : vector<1x1xf32>
      %257 = vector.broadcast %249 : vector<1x1xf32> to vector<1x64xf32>
      %258 = arith.subf %243, %257 : vector<1x64xf32>
      %cst_190 = arith.constant 9.99999974E-6 : f32
      %259 = vector.broadcast %cst_190 : f32 to vector<1x1xf32>
      %260 = arith.addf %256, %259 : vector<1x1xf32>
      %261 = math.rsqrt %260 : vector<1x1xf32>
      %262 = vector.broadcast %261 : vector<1x1xf32> to vector<1x64xf32>
      %263 = arith.mulf %258, %262 : vector<1x64xf32>
      %264 = arith.mulf %263, %244 : vector<1x64xf32>
      %265 = arith.addf %264, %245 : vector<1x64xf32>
      %c0_191 = arith.constant 0 : index
      %c0_192 = arith.constant 0 : index
      %266 = vector.load %arg22[%c0_191, %c0_192] : memref<64x32xf32, #tpu.memory_space<vmem>>, vector<64x32xf32>
      %cst_193 = arith.constant dense<0.000000e+00> : vector<1x32xf32>
      %267 = tpu.matmul %265, %266, %cst_193 {dimension_numbers = #tpu.dot_dimension_numbers<[1], [0], [0], [1], [0, 0, 1, 1], [], []>} : vector<1x64xf32>, vector<64x32xf32>, vector<1x32xf32> -> vector<1x32xf32>
      %c0_194 = arith.constant 0 : index
      %c0_195 = arith.constant 0 : index
      %c0_196 = arith.constant 0 : index
      %268 = vector.load %arg23[%c0_194, %c0_195, %c0_196] : memref<1x1x32xf32, #tpu.memory_space<vmem>>, vector<1x1x32xf32>
      %269 = vector.shape_cast %268 : vector<1x1x32xf32> to vector<1x32xf32>
      %270 = vector.shape_cast %267 : vector<1x32xf32> to vector<1x1x32xf32>
      tpu.vector_store %arg23[%c0_194, %c0_195, %c0_196], %270 {strides = array<i32>} : memref<1x1x32xf32, #tpu.memory_space<vmem>>, vector<1x1x32xf32>,
    } else {
    }
    return
  }
  func.func @transform_0(%arg0: i32, %arg1: i32) -> (i32, i32, i32) {
    %c0_i32 = arith.constant 0 : i32
    %c0_i32_0 = arith.constant 0 : i32
    %c0_i32_1 = arith.constant 0 : i32
    return %arg0, %c0_i32, %c0_i32_0 : i32, i32, i32
  }
  func.func @transform_1(%arg0: i32, %arg1: i32) -> (i32, i32) {
    %c0_i32 = arith.constant 0 : i32
    %c0_i32_0 = arith.constant 0 : i32
    %c0_i32_1 = arith.constant 0 : i32
    return %c0_i32, %c0_i32_0 : i32, i32
  }
  func.func @transform_2(%arg0: i32, %arg1: i32) -> (i32, i32) {
    %c0_i32 = arith.constant 0 : i32
    %c0_i32_0 = arith.constant 0 : i32
    %c0_i32_1 = arith.constant 0 : i32
    return %c0_i32, %c0_i32_0 : i32, i32
  }
  func.func @transform_3(%arg0: i32, %arg1: i32) -> (i32, i32) {
    %c0_i32 = arith.constant 0 : i32
    %c0_i32_0 = arith.constant 0 : i32
    %c0_i32_1 = arith.constant 0 : i32
    return %c0_i32, %c0_i32_0 : i32, i32
  }
  func.func @transform_4(%arg0: i32, %arg1: i32) -> (i32, i32) {
    %c0_i32 = arith.constant 0 : i32
    %c0_i32_0 = arith.constant 0 : i32
    %c0_i32_1 = arith.constant 0 : i32
    return %c0_i32, %c0_i32_0 : i32, i32
  }
  func.func @transform_5(%arg0: i32, %arg1: i32) -> (i32, i32) {
    %c0_i32 = arith.constant 0 : i32
    %c0_i32_0 = arith.constant 0 : i32
    %c0_i32_1 = arith.constant 0 : i32
    return %c0_i32, %c0_i32_0 : i32, i32
  }
  func.func @transform_6(%arg0: i32, %arg1: i32) -> (i32, i32, i32) {
    %c0_i32 = arith.constant 0 : i32
    %c0_i32_0 = arith.constant 0 : i32
    %c0_i32_1 = arith.constant 0 : i32
    return %arg1, %c0_i32, %c0_i32_0 : i32, i32, i32
  }
  func.func @transform_7(%arg0: i32, %arg1: i32) -> (i32, i32, i32) {
    %c0_i32 = arith.constant 0 : i32
    %c0_i32_0 = arith.constant 0 : i32
    %c0_i32_1 = arith.constant 0 : i32
    return %arg1, %c0_i32, %c0_i32_0 : i32, i32, i32
  }
  func.func @transform_8(%arg0: i32, %arg1: i32) -> (i32, i32, i32, i32) {
    %c0_i32 = arith.constant 0 : i32
    %c0_i32_0 = arith.constant 0 : i32
    %c0_i32_1 = arith.constant 0 : i32
    %c0_i32_2 = arith.constant 0 : i32
    return %arg1, %c0_i32, %c0_i32_0, %c0_i32_1 : i32, i32, i32, i32
  }
  func.func @transform_9(%arg0: i32, %arg1: i32) -> (i32, i32, i32, i32) {
    %c0_i32 = arith.constant 0 : i32
    %c0_i32_0 = arith.constant 0 : i32
    %c0_i32_1 = arith.constant 0 : i32
    %c0_i32_2 = arith.constant 0 : i32
    return %arg1, %c0_i32, %c0_i32_0, %c0_i32_1 : i32, i32, i32, i32
  }
  func.func @transform_10(%arg0: i32, %arg1: i32) -> (i32, i32, i32, i32) {
    %c0_i32 = arith.constant 0 : i32
    %c0_i32_0 = arith.constant 0 : i32
    %c0_i32_1 = arith.constant 0 : i32
    %c0_i32_2 = arith.constant 0 : i32
    return %arg1, %c0_i32, %c0_i32_0, %c0_i32_1 : i32, i32, i32, i32
  }
  func.func @transform_11(%arg0: i32, %arg1: i32) -> (i32, i32, i32) {
    %c0_i32 = arith.constant 0 : i32
    %c0_i32_0 = arith.constant 0 : i32
    %c0_i32_1 = arith.constant 0 : i32
    return %arg1, %c0_i32, %c0_i32_0 : i32, i32, i32
  }
  func.func @transform_12(%arg0: i32, %arg1: i32) -> (i32, i32, i32) {
    %c0_i32 = arith.constant 0 : i32
    %c0_i32_0 = arith.constant 0 : i32
    %c0_i32_1 = arith.constant 0 : i32
    return %arg1, %c0_i32, %c0_i32_0 : i32, i32, i32
  }
  func.func @transform_13(%arg0: i32, %arg1: i32) -> (i32, i32, i32) {
    %c0_i32 = arith.constant 0 : i32
    %c0_i32_0 = arith.constant 0 : i32
    %c0_i32_1 = arith.constant 0 : i32
    return %arg1, %c0_i32, %c0_i32_0 : i32, i32, i32
  }
  func.func @transform_14(%arg0: i32, %arg1: i32) -> (i32, i32, i32) {
    %c0_i32 = arith.constant 0 : i32
    %c0_i32_0 = arith.constant 0 : i32
    %c0_i32_1 = arith.constant 0 : i32
    return %arg1, %c0_i32, %c0_i32_0 : i32, i32, i32
  }
  func.func @transform_15(%arg0: i32, %arg1: i32) -> (i32, i32, i32) {
    %c0_i32 = arith.constant 0 : i32
    %c0_i32_0 = arith.constant 0 : i32
    %c0_i32_1 = arith.constant 0 : i32
    return %arg1, %c0_i32, %c0_i32_0 : i32, i32, i32
  }
  func.func @transform_16(%arg0: i32, %arg1: i32) -> (i32, i32, i32) {
    %c0_i32 = arith.constant 0 : i32
    %c0_i32_0 = arith.constant 0 : i32
    %c0_i32_1 = arith.constant 0 : i32
    return %arg1, %c0_i32, %c0_i32_0 : i32, i32, i32
  }
  func.func @transform_17(%arg0: i32, %arg1: i32) -> (i32, i32, i32) {
    %c0_i32 = arith.constant 0 : i32
    %c0_i32_0 = arith.constant 0 : i32
    %c0_i32_1 = arith.constant 0 : i32
    return %arg1, %c0_i32, %c0_i32_0 : i32, i32, i32
  }
  func.func @transform_18(%arg0: i32, %arg1: i32) -> (i32, i32) {
    %c0_i32 = arith.constant 0 : i32
    %c0_i32_0 = arith.constant 0 : i32
    %c0_i32_1 = arith.constant 0 : i32
    return %c0_i32, %c0_i32_0 : i32, i32
  }
  func.func @transform_19(%arg0: i32, %arg1: i32) -> (i32, i32) {
    %c0_i32 = arith.constant 0 : i32
    %c0_i32_0 = arith.constant 0 : i32
    %c0_i32_1 = arith.constant 0 : i32
    return %c0_i32, %c0_i32_0 : i32, i32
  }
  func.func @transform_20(%arg0: i32, %arg1: i32) -> (i32, i32) {
    %c0_i32 = arith.constant 0 : i32
    %c0_i32_0 = arith.constant 0 : i32
    %c0_i32_1 = arith.constant 0 : i32
    return %c0_i32, %c0_i32_0 : i32, i32
  }
  func.func @transform_21(%arg0: i32, %arg1: i32) -> (i32, i32, i32) {
    %c0_i32 = arith.constant 0 : i32
    %c0_i32_0 = arith.constant 0 : i32
    %c0_i32_1 = arith.constant 0 : i32
    return %arg0, %c0_i32, %c0_i32_0 : i32, i32, i32
  }
}

</mosaic_0001>

<llo_original>
// kernel: vit_forward.1
$region0: #{vit_forward.1}
  #allocation0 [shape = 'u32[]', space=smem, size = 0x4, offset = 0x4, fixed_abs, tag = 'smem constant byte address 0x4 - core index']
  #allocation1 [shape = 'u32[144,128]{1,0:T(1,128)}', space=vmem, size = 0x12000, scoped, tag = 'internal scratch']
  #allocation2 [shape = 'f32[17,64]{1,0:T(8,128)}', space=vmem, size = 0x3000, scoped, tag = 'scratch operand']
  %s0 = inlined_call_operand.vmem [shape: f32[2,16,192], index: 0, kind: input, shape index: {}]
  %s1 = inlined_call_operand.vmem [shape: f32[192,64], index: 1, kind: input, shape index: {}]
  %s2 = inlined_call_operand.vmem [shape: f32[1,64], index: 2, kind: input, shape index: {}]
  %s3 = inlined_call_operand.vmem [shape: f32[16,64], index: 3, kind: input, shape index: {}]
  %s4 = inlined_call_operand.vmem [shape: f32[1,64], index: 4, kind: input, shape index: {}]
  %s5 = inlined_call_operand.vmem [shape: f32[1,64], index: 5, kind: input, shape index: {}]
  %s6 = inlined_call_operand.vmem [shape: f32[2,1,64], index: 6, kind: input, shape index: {}]
  %s7 = inlined_call_operand.vmem [shape: f32[2,1,64], index: 7, kind: input, shape index: {}]
  %s8 = inlined_call_operand.vmem [shape: f32[2,12,64,16], index: 8, kind: input, shape index: {}]
  %s9 = inlined_call_operand.vmem [shape: f32[2,12,1,16], index: 9, kind: input, shape index: {}]
  %s10 = inlined_call_operand.vmem [shape: f32[2,4,16,64], index: 10, kind: input, shape index: {}]
  %s11 = inlined_call_operand.vmem [shape: f32[2,1,64], index: 11, kind: input, shape index: {}]
  %s12 = inlined_call_operand.vmem [shape: f32[2,1,64], index: 12, kind: input, shape index: {}]
  %s13 = inlined_call_operand.vmem [shape: f32[2,1,64], index: 13, kind: input, shape index: {}]
  %s14 = inlined_call_operand.vmem [shape: f32[2,64,256], index: 14, kind: input, shape index: {}]
  %s15 = inlined_call_operand.vmem [shape: f32[2,1,256], index: 15, kind: input, shape index: {}]
  %s16 = inlined_call_operand.vmem [shape: f32[2,256,64], index: 16, kind: input, shape index: {}]
  %s17 = inlined_call_operand.vmem [shape: f32[2,1,64], index: 17, kind: input, shape index: {}]
  %s18 = inlined_call_operand.vmem [shape: f32[1,64], index: 18, kind: input, shape index: {}]
  %s19 = inlined_call_operand.vmem [shape: f32[1,64], index: 19, kind: input, shape index: {}]
  %s20 = inlined_call_operand.vmem [shape: f32[64,32], index: 20, kind: input, shape index: {}]
  %s21 = inlined_call_operand.hbm [shape: f32[2,1,32], index: 21, kind: output, shape index: {}]
  %s22 = sld [smem:[#allocation0]]
  $region125: #{vit_forward.1} parent=0
    _
  %s24 = ssub.s32 1, %s22
  %s25 = scalar_select 0, %s24, %s22
  $region1: #{vit_forward.1} parent=0
    #allocation3 [shape = 'u8[1024]{0}', space=vmem, size = 0x400, scoped, tag = 'output window, operand 0']
    #allocation4 [shape = 's32[2]{0}', space=sflag, size = 0x8, scoped, tag = 'scoped memory for vit_forward.1']
    %26 = vsyncpa [#allocation4], 0
    %s27 = scalar_lea.sflag [#allocation4], 1
    %28 = vsyncpa %s27, 0
    loop: start=0, step=1, limit=6
    $region2: #{vit_forward.1} parent=1 // loop_pre_header
      _
    $region3: #{vit_forward.1} parent=1 // loop_header
      %s30 = sphi 0, %s34
      %p31 = scmp.ge.s32.totalorder %s30, 6
      %s37 = sphi 0, %s49
      %s38 = sphi 0, %s45
      %s39 = sphi 0, %s37
      %s40 = sphi 0, %s38
      %s41 = sphi 0, %s39
      %s42 = sphi 0, %s40
      %s52 = sphi 0, %s54
      %s55 = sphi 0, %s52
      %s56 = sphi 0, %s55
      %s72 = sphi 0, %s56
      %s76 = sphi 0, %s76
      %s78 = sphi 0, %s76
      %s79 = sphi 0, %s78
      %s93 = sphi 0, %s79
      %s97 = sphi 0, %s97
      %s99 = sphi 0, %s97
      %s100 = sphi 0, %s99
      %s114 = sphi 0, %s100
      %s118 = sphi 0, %s118
      %s120 = sphi 0, %s118
      %s121 = sphi 0, %s120
      %s135 = sphi 0, %s121
      %s139 = sphi 0, %s139
      %s141 = sphi 0, %s139
      %s142 = sphi 0, %s141
      %s156 = sphi 0, %s142
      %s160 = sphi 0, %s160
      %s162 = sphi 0, %s160
      %s163 = sphi 0, %s162
      %s177 = sphi 0, %s163
      %s183 = sphi 0, %s185
      %s186 = sphi 0, %s183
      %s187 = sphi 0, %s186
      %s203 = sphi 0, %s187
      %s209 = sphi 0, %s211
      %s212 = sphi 0, %s209
      %s213 = sphi 0, %s212
      %s229 = sphi 0, %s213
      %s235 = sphi 0, %s237
      %s238 = sphi 0, %s235
      %s239 = sphi 0, %s238
      %s255 = sphi 0, %s239
      %s261 = sphi 0, %s263
      %s264 = sphi 0, %s261
      %s265 = sphi 0, %s264
      %s281 = sphi 0, %s265
      %s287 = sphi 0, %s289
      %s290 = sphi 0, %s287
      %s291 = sphi 0, %s290
      %s307 = sphi 0, %s291
      %s313 = sphi 0, %s315
      %s316 = sphi 0, %s313
      %s317 = sphi 0, %s316
      %s333 = sphi 0, %s317
      %s339 = sphi 0, %s341
      %s342 = sphi 0, %s339
      %s343 = sphi 0, %s342
      %s359 = sphi 0, %s343
      %s365 = sphi 0, %s367
      %s368 = sphi 0, %s365
      %s369 = sphi 0, %s368
      %s385 = sphi 0, %s369
      %s391 = sphi 0, %s393
      %s394 = sphi 0, %s391
      %s395 = sphi 0, %s394
      %s411 = sphi 0, %s395
      %s417 = sphi 0, %s419
      %s420 = sphi 0, %s417
      %s421 = sphi 0, %s420
      %s437 = sphi 0, %s421
      %s443 = sphi 0, %s445
      %s446 = sphi 0, %s443
      %s447 = sphi 0, %s446
      %s463 = sphi 0, %s447
      %s469 = sphi 0, %s471
      %s472 = sphi 0, %s469
      %s473 = sphi 0, %s472
      %s489 = sphi 0, %s473
      %s493 = sphi 0, %s493
      %s495 = sphi 0, %s493
      %s496 = sphi 0, %s495
      %s510 = sphi 0, %s496
      %s514 = sphi 0, %s514
      %s516 = sphi 0, %s514
      %s517 = sphi 0, %s516
      %s531 = sphi 0, %s517
      %s535 = sphi 0, %s535
      %s537 = sphi 0, %s535
      %s538 = sphi 0, %s537
      %s552 = sphi 0, %s538
      %s558 = sphi 0, %s560
      %s561 = sphi 0, %s558
      %s562 = sphi 0, %s561
      %s578 = sphi 0, %s562
    $region4: #{vit_forward.1} parent=1 // loop_header_branch
      %33 = sbr.rel (%p31) target = $region8
    $region5: #{vit_forward.1} parent=1 // loop_body
      %s35 = ssub.s32 %s30, 1
      %s36 = ssub.s32 %s30, 2
      %s43 = sadd.s32 1, %s38
      %p44 = scmp.ge.s32.totalorder %s43, 2
      %s45 = scalar_select %p44, 0, %s43
      %s46 = sadd.s32 1, %s37
      %s47 = scalar_select %p44, %s46, %s37
      %p48 = scmp.ge.s32.totalorder %s47, 2
      %s49 = scalar_select %p48, 0, %s47
      %s50 = ssub.s32 %s37, %s49
      %p51 = scmp.eq.s32.totalorder %s50, 0
      %s53 = sadd.s32 %s52, 1
      %s54 = scalar_select %p51, %s52, %s53
      %p57 = pneg %p51
      %p58 = scmp.eq.s32.totalorder %s30, 3
      %p59 = por %p57, %p58
      %p60 = scmp.ne.s32.totalorder %s52, %s55
      %p61 = scmp.eq.s32.totalorder %s30, 0
      %p62 = por %p60, %p61
      %p63 = scmp.ne.s32.totalorder %s52, %s55
      %p64 = scmp.eq.s32.totalorder %s35, 3
      %p65 = por %p63, %p64
      %p66 = scmp.ne.s32.totalorder %s55, %s56
      %p67 = scmp.eq.s32.totalorder %s35, 0
      %p68 = por %p66, %p67
      %p69 = scmp.ne.s32.totalorder %s55, %s56
      %p70 = scmp.eq.s32.totalorder %s36, 3
      %p71 = por %p69, %p70
      %p73 = scmp.ne.s32.totalorder %s56, %s72
      %p74 = scmp.eq.s32.totalorder %s36, 0
      %p75 = por %p73, %p74
      %s77 = sadd.s32 %s76, 1
      %p80 = scmp.eq.s32.totalorder %s30, 3
      %p81 = scmp.ne.s32.totalorder %s76, %s78
      %p82 = scmp.eq.s32.totalorder %s30, 0
      %p83 = por %p81, %p82
      %p84 = scmp.ne.s32.totalorder %s76, %s78
      %p85 = scmp.eq.s32.totalorder %s35, 3
      %p86 = por %p84, %p85
      %p87 = scmp.ne.s32.totalorder %s78, %s79
      %p88 = scmp.eq.s32.totalorder %s35, 0
      %p89 = por %p87, %p88
      %p90 = scmp.ne.s32.totalorder %s78, %s79
      %p91 = scmp.eq.s32.totalorder %s36, 3
      %p92 = por %p90, %p91
      %p94 = scmp.ne.s32.totalorder %s79, %s93
      %p95 = scmp.eq.s32.totalorder %s36, 0
      %p96 = por %p94, %p95
      %s98 = sadd.s32 %s97, 1
      %p101 = scmp.eq.s32.totalorder %s30, 3
      %p102 = scmp.ne.s32.totalorder %s97, %s99
      %p103 = scmp.eq.s32.totalorder %s30, 0
      %p104 = por %p102, %p103
      %p105 = scmp.ne.s32.totalorder %s97, %s99
      %p106 = scmp.eq.s32.totalorder %s35, 3
      %p107 = por %p105, %p106
      %p108 = scmp.ne.s32.totalorder %s99, %s100
      %p109 = scmp.eq.s32.totalorder %s35, 0
      %p110 = por %p108, %p109
      %p111 = scmp.ne.s32.totalorder %s99, %s100
      %p112 = scmp.eq.s32.totalorder %s36, 3
      %p113 = por %p111, %p112
      %p115 = scmp.ne.s32.totalorder %s100, %s114
      %p116 = scmp.eq.s32.totalorder %s36, 0
      %p117 = por %p115, %p116
      %s119 = sadd.s32 %s118, 1
      %p122 = scmp.eq.s32.totalorder %s30, 3
      %p123 = scmp.ne.s32.totalorder %s118, %s120
      %p124 = scmp.eq.s32.totalorder %s30, 0
      %p125 = por %p123, %p124
      %p126 = scmp.ne.s32.totalorder %s118, %s120
      %p127 = scmp.eq.s32.totalorder %s35, 3
      %p128 = por %p126, %p127
      %p129 = scmp.ne.s32.totalorder %s120, %s121
      %p130 = scmp.eq.s32.totalorder %s35, 0
      %p131 = por %p129, %p130
      %p132 = scmp.ne.s32.totalorder %s120, %s121
      %p133 = scmp.eq.s32.totalorder %s36, 3
      %p134 = por %p132, %p133
      %p136 = scmp.ne.s32.totalorder %s121, %s135
      %p137 = scmp.eq.s32.totalorder %s36, 0
      %p138 = por %p136, %p137
      %s140 = sadd.s32 %s139, 1
      %p143 = scmp.eq.s32.totalorder %s30, 3
      %p144 = scmp.ne.s32.totalorder %s139, %s141
      %p145 = scmp.eq.s32.totalorder %s30, 0
      %p146 = por %p144, %p145
      %p147 = scmp.ne.s32.totalorder %s139, %s141
      %p148 = scmp.eq.s32.totalorder %s35, 3
      %p149 = por %p147, %p148
      %p150 = scmp.ne.s32.totalorder %s141, %s142
      %p151 = scmp.eq.s32.totalorder %s35, 0
      %p152 = por %p150, %p151
      %p153 = scmp.ne.s32.totalorder %s141, %s142
      %p154 = scmp.eq.s32.totalorder %s36, 3
      %p155 = por %p153, %p154
      %p157 = scmp.ne.s32.totalorder %s142, %s156
      %p158 = scmp.eq.s32.totalorder %s36, 0
      %p159 = por %p157, %p158
      %s161 = sadd.s32 %s160, 1
      %p164 = scmp.eq.s32.totalorder %s30, 3
      %p165 = scmp.ne.s32.totalorder %s160, %s162
      %p166 = scmp.eq.s32.totalorder %s30, 0
      %p167 = por %p165, %p166
      %p168 = scmp.ne.s32.totalorder %s160, %s162
      %p169 = scmp.eq.s32.totalorder %s35, 3
      %p170 = por %p168, %p169
      %p171 = scmp.ne.s32.totalorder %s162, %s163
      %p172 = scmp.eq.s32.totalorder %s35, 0
      %p173 = por %p171, %p172
      %p174 = scmp.ne.s32.totalorder %s162, %s163
      %p175 = scmp.eq.s32.totalorder %s36, 3
      %p176 = por %p174, %p175
      %p178 = scmp.ne.s32.totalorder %s163, %s177
      %p179 = scmp.eq.s32.totalorder %s36, 0
      %p180 = por %p178, %p179
      %s181 = ssub.s32 %s38, %s45
      %p182 = scmp.eq.s32.totalorder %s181, 0
      %s184 = sadd.s32 %s183, 1
      %s185 = scalar_select %p182, %s183, %s184
      %p188 = pneg %p182
      %p189 = scmp.eq.s32.totalorder %s30, 3
      %p190 = por %p188, %p189
      %p191 = scmp.ne.s32.totalorder %s183, %s186
      %p192 = scmp.eq.s32.totalorder %s30, 0
      %p193 = por %p191, %p192
      %p194 = scmp.ne.s32.totalorder %s183, %s186
      %p195 = scmp.eq.s32.totalorder %s35, 3
      %p196 = por %p194, %p195
      %p197 = scmp.ne.s32.totalorder %s186, %s187
      %p198 = scmp.eq.s32.totalorder %s35, 0
      %p199 = por %p197, %p198
      %p200 = scmp.ne.s32.totalorder %s186, %s187
      %p201 = scmp.eq.s32.totalorder %s36, 3
      %p202 = por %p200, %p201
      %p204 = scmp.ne.s32.totalorder %s187, %s203
      %p205 = scmp.eq.s32.totalorder %s36, 0
      %p206 = por %p204, %p205
      %s207 = ssub.s32 %s38, %s45
      %p208 = scmp.eq.s32.totalorder %s207, 0
      %s210 = sadd.s32 %s209, 1
      %s211 = scalar_select %p208, %s209, %s210
      %p214 = pneg %p208
      %p215 = scmp.eq.s32.totalorder %s30, 3
      %p216 = por %p214, %p215
      %p217 = scmp.ne.s32.totalorder %s209, %s212
      %p218 = scmp.eq.s32.totalorder %s30, 0
      %p219 = por %p217, %p218
      %p220 = scmp.ne.s32.totalorder %s209, %s212
      %p221 = scmp.eq.s32.totalorder %s35, 3
      %p222 = por %p220, %p221
      %p223 = scmp.ne.s32.totalorder %s212, %s213
      %p224 = scmp.eq.s32.totalorder %s35, 0
      %p225 = por %p223, %p224
      %p226 = scmp.ne.s32.totalorder %s212, %s213
      %p227 = scmp.eq.s32.totalorder %s36, 3
      %p228 = por %p226, %p227
      %p230 = scmp.ne.s32.totalorder %s213, %s229
      %p231 = scmp.eq.s32.totalorder %s36, 0
      %p232 = por %p230, %p231
      %s233 = ssub.s32 %s38, %s45
      %p234 = scmp.eq.s32.totalorder %s233, 0
      %s236 = sadd.s32 %s235, 1
      %s237 = scalar_select %p234, %s235, %s236
      %p240 = pneg %p234
      %p241 = scmp.eq.s32.totalorder %s30, 3
      %p242 = por %p240, %p241
      %p243 = scmp.ne.s32.totalorder %s235, %s238
      %p244 = scmp.eq.s32.totalorder %s30, 0
      %p245 = por %p243, %p244
      %p246 = scmp.ne.s32.totalorder %s235, %s238
      %p247 = scmp.eq.s32.totalorder %s35, 3
      %p248 = por %p246, %p247
      %p249 = scmp.ne.s32.totalorder %s238, %s239
      %p250 = scmp.eq.s32.totalorder %s35, 0
      %p251 = por %p249, %p250
      %p252 = scmp.ne.s32.totalorder %s238, %s239
      %p253 = scmp.eq.s32.totalorder %s36, 3
      %p254 = por %p252, %p253
      %p256 = scmp.ne.s32.totalorder %s239, %s255
      %p257 = scmp.eq.s32.totalorder %s36, 0
      %p258 = por %p256, %p257
      %s259 = ssub.s32 %s38, %s45
      %p260 = scmp.eq.s32.totalorder %s259, 0
      %s262 = sadd.s32 %s261, 1
      %s263 = scalar_select %p260, %s261, %s262
      %p266 = pneg %p260
      %p267 = scmp.eq.s32.totalorder %s30, 3
      %p268 = por %p266, %p267
      %p269 = scmp.ne.s32.totalorder %s261, %s264
      %p270 = scmp.eq.s32.totalorder %s30, 0
      %p271 = por %p269, %p270
      %p272 = scmp.ne.s32.totalorder %s261, %s264
      %p273 = scmp.eq.s32.totalorder %s35, 3
      %p274 = por %p272, %p273
      %p275 = scmp.ne.s32.totalorder %s264, %s265
      %p276 = scmp.eq.s32.totalorder %s35, 0
      %p277 = por %p275, %p276
      %p278 = scmp.ne.s32.totalorder %s264, %s265
      %p279 = scmp.eq.s32.totalorder %s36, 3
      %p280 = por %p278, %p279
      %p282 = scmp.ne.s32.totalorder %s265, %s281
      %p283 = scmp.eq.s32.totalorder %s36, 0
      %p284 = por %p282, %p283
      %s285 = ssub.s32 %s38, %s45
      %p286 = scmp.eq.s32.totalorder %s285, 0
      %s288 = sadd.s32 %s287, 1
      %s289 = scalar_select %p286, %s287, %s288
      %p292 = pneg %p286
      %p293 = scmp.eq.s32.totalorder %s30, 3
      %p294 = por %p292, %p293
      %p295 = scmp.ne.s32.totalorder %s287, %s290
      %p296 = scmp.eq.s32.totalorder %s30, 0
      %p297 = por %p295, %p296
      %p298 = scmp.ne.s32.totalorder %s287, %s290
      %p299 = scmp.eq.s32.totalorder %s35, 3
      %p300 = por %p298, %p299
      %p301 = scmp.ne.s32.totalorder %s290, %s291
      %p302 = scmp.eq.s32.totalorder %s35, 0
      %p303 = por %p301, %p302
      %p304 = scmp.ne.s32.totalorder %s290, %s291
      %p305 = scmp.eq.s32.totalorder %s36, 3
      %p306 = por %p304, %p305
      %p308 = scmp.ne.s32.totalorder %s291, %s307
      %p309 = scmp.eq.s32.totalorder %s36, 0
      %p310 = por %p308, %p309
      %s311 = ssub.s32 %s38, %s45
      %p312 = scmp.eq.s32.totalorder %s311, 0
      %s314 = sadd.s32 %s313, 1
      %s315 = scalar_select %p312, %s313, %s314
      %p318 = pneg %p312
      %p319 = scmp.eq.s32.totalorder %s30, 3
      %p320 = por %p318, %p319
      %p321 = scmp.ne.s32.totalorder %s313, %s316
      %p322 = scmp.eq.s32.totalorder %s30, 0
      %p323 = por %p321, %p322
      %p324 = scmp.ne.s32.totalorder %s313, %s316
      %p325 = scmp.eq.s32.totalorder %s35, 3
      %p326 = por %p324, %p325
      %p327 = scmp.ne.s32.totalorder %s316, %s317
      %p328 = scmp.eq.s32.totalorder %s35, 0
      %p329 = por %p327, %p328
      %p330 = scmp.ne.s32.totalorder %s316, %s317
      %p331 = scmp.eq.s32.totalorder %s36, 3
      %p332 = por %p330, %p331
      %p334 = scmp.ne.s32.totalorder %s317, %s333
      %p335 = scmp.eq.s32.totalorder %s36, 0
      %p336 = por %p334, %p335
      %s337 = ssub.s32 %s38, %s45
      %p338 = scmp.eq.s32.totalorder %s337, 0
      %s340 = sadd.s32 %s339, 1
      %s341 = scalar_select %p338, %s339, %s340
      %p344 = pneg %p338
      %p345 = scmp.eq.s32.totalorder %s30, 3
      %p346 = por %p344, %p345
      %p347 = scmp.ne.s32.totalorder %s339, %s342
      %p348 = scmp.eq.s32.totalorder %s30, 0
      %p349 = por %p347, %p348
      %p350 = scmp.ne.s32.totalorder %s339, %s342
      %p351 = scmp.eq.s32.totalorder %s35, 3
      %p352 = por %p350, %p351
      %p353 = scmp.ne.s32.totalorder %s342, %s343
      %p354 = scmp.eq.s32.totalorder %s35, 0
      %p355 = por %p353, %p354
      %p356 = scmp.ne.s32.totalorder %s342, %s343
      %p357 = scmp.eq.s32.totalorder %s36, 3
      %p358 = por %p356, %p357
      %p360 = scmp.ne.s32.totalorder %s343, %s359
      %p361 = scmp.eq.s32.totalorder %s36, 0
      %p362 = por %p360, %p361
      %s363 = ssub.s32 %s38, %s45
      %p364 = scmp.eq.s32.totalorder %s363, 0
      %s366 = sadd.s32 %s365, 1
      %s367 = scalar_select %p364, %s365, %s366
      %p370 = pneg %p364
      %p371 = scmp.eq.s32.totalorder %s30, 3
      %p372 = por %p370, %p371
      %p373 = scmp.ne.s32.totalorder %s365, %s368
      %p374 = scmp.eq.s32.totalorder %s30, 0
      %p375 = por %p373, %p374
      %p376 = scmp.ne.s32.totalorder %s365, %s368
      %p377 = scmp.eq.s32.totalorder %s35, 3
      %p378 = por %p376, %p377
      %p379 = scmp.ne.s32.totalorder %s368, %s369
      %p380 = scmp.eq.s32.totalorder %s35, 0
      %p381 = por %p379, %p380
      %p382 = scmp.ne.s32.totalorder %s368, %s369
      %p383 = scmp.eq.s32.totalorder %s36, 3
      %p384 = por %p382, %p383
      %p386 = scmp.ne.s32.totalorder %s369, %s385
      %p387 = scmp.eq.s32.totalorder %s36, 0
      %p388 = por %p386, %p387
      %s389 = ssub.s32 %s38, %s45
      %p390 = scmp.eq.s32.totalorder %s389, 0
      %s392 = sadd.s32 %s391, 1
      %s393 = scalar_select %p390, %s391, %s392
      %p396 = pneg %p390
      %p397 = scmp.eq.s32.totalorder %s30, 3
      %p398 = por %p396, %p397
      %p399 = scmp.ne.s32.totalorder %s391, %s394
      %p400 = scmp.eq.s32.totalorder %s30, 0
      %p401 = por %p399, %p400
      %p402 = scmp.ne.s32.totalorder %s391, %s394
      %p403 = scmp.eq.s32.totalorder %s35, 3
      %p404 = por %p402, %p403
      %p405 = scmp.ne.s32.totalorder %s394, %s395
      %p406 = scmp.eq.s32.totalorder %s35, 0
      %p407 = por %p405, %p406
      %p408 = scmp.ne.s32.totalorder %s394, %s395
      %p409 = scmp.eq.s32.totalorder %s36, 3
      %p410 = por %p408, %p409
      %p412 = scmp.ne.s32.totalorder %s395, %s411
      %p413 = scmp.eq.s32.totalorder %s36, 0
      %p414 = por %p412, %p413
      %s415 = ssub.s32 %s38, %s45
      %p416 = scmp.eq.s32.totalorder %s415, 0
      %s418 = sadd.s32 %s417, 1
      %s419 = scalar_select %p416, %s417, %s418
      %p422 = pneg %p416
      %p423 = scmp.eq.s32.totalorder %s30, 3
      %p424 = por %p422, %p423
      %p425 = scmp.ne.s32.totalorder %s417, %s420
      %p426 = scmp.eq.s32.totalorder %s30, 0
      %p427 = por %p425, %p426
      %p428 = scmp.ne.s32.totalorder %s417, %s420
      %p429 = scmp.eq.s32.totalorder %s35, 3
      %p430 = por %p428, %p429
      %p431 = scmp.ne.s32.totalorder %s420, %s421
      %p432 = scmp.eq.s32.totalorder %s35, 0
      %p433 = por %p431, %p432
      %p434 = scmp.ne.s32.totalorder %s420, %s421
      %p435 = scmp.eq.s32.totalorder %s36, 3
      %p436 = por %p434, %p435
      %p438 = scmp.ne.s32.totalorder %s421, %s437
      %p439 = scmp.eq.s32.totalorder %s36, 0
      %p440 = por %p438, %p439
      %s441 = ssub.s32 %s38, %s45
      %p442 = scmp.eq.s32.totalorder %s441, 0
      %s444 = sadd.s32 %s443, 1
      %s445 = scalar_select %p442, %s443, %s444
      %p448 = pneg %p442
      %p449 = scmp.eq.s32.totalorder %s30, 3
      %p450 = por %p448, %p449
      %p451 = scmp.ne.s32.totalorder %s443, %s446
      %p452 = scmp.eq.s32.totalorder %s30, 0
      %p453 = por %p451, %p452
      %p454 = scmp.ne.s32.totalorder %s443, %s446
      %p455 = scmp.eq.s32.totalorder %s35, 3
      %p456 = por %p454, %p455
      %p457 = scmp.ne.s32.totalorder %s446, %s447
      %p458 = scmp.eq.s32.totalorder %s35, 0
      %p459 = por %p457, %p458
      %p460 = scmp.ne.s32.totalorder %s446, %s447
      %p461 = scmp.eq.s32.totalorder %s36, 3
      %p462 = por %p460, %p461
      %p464 = scmp.ne.s32.totalorder %s447, %s463
      %p465 = scmp.eq.s32.totalorder %s36, 0
      %p466 = por %p464, %p465
      %s467 = ssub.s32 %s38, %s45
      %p468 = scmp.eq.s32.totalorder %s467, 0
      %s470 = sadd.s32 %s469, 1
      %s471 = scalar_select %p468, %s469, %s470
      %p474 = pneg %p468
      %p475 = scmp.eq.s32.totalorder %s30, 3
      %p476 = por %p474, %p475
      %p477 = scmp.ne.s32.totalorder %s469, %s472
      %p478 = scmp.eq.s32.totalorder %s30, 0
      %p479 = por %p477, %p478
      %p480 = scmp.ne.s32.totalorder %s469, %s472
      %p481 = scmp.eq.s32.totalorder %s35, 3
      %p482 = por %p480, %p481
      %p483 = scmp.ne.s32.totalorder %s472, %s473
      %p484 = scmp.eq.s32.totalorder %s35, 0
      %p485 = por %p483, %p484
      %p486 = scmp.ne.s32.totalorder %s472, %s473
      %p487 = scmp.eq.s32.totalorder %s36, 3
      %p488 = por %p486, %p487
      %p490 = scmp.ne.s32.totalorder %s473, %s489
      %p491 = scmp.eq.s32.totalorder %s36, 0
      %p492 = por %p490, %p491
      %s494 = sadd.s32 %s493, 1
      %p497 = scmp.eq.s32.totalorder %s30, 3
      %p498 = scmp.ne.s32.totalorder %s493, %s495
      %p499 = scmp.eq.s32.totalorder %s30, 0
      %p500 = por %p498, %p499
      %p501 = scmp.ne.s32.totalorder %s493, %s495
      %p502 = scmp.eq.s32.totalorder %s35, 3
      %p503 = por %p501, %p502
      %p504 = scmp.ne.s32.totalorder %s495, %s496
      %p505 = scmp.eq.s32.totalorder %s35, 0
      %p506 = por %p504, %p505
      %p507 = scmp.ne.s32.totalorder %s495, %s496
      %p508 = scmp.eq.s32.totalorder %s36, 3
      %p509 = por %p507, %p508
      %p511 = scmp.ne.s32.totalorder %s496, %s510
      %p512 = scmp.eq.s32.totalorder %s36, 0
      %p513 = por %p511, %p512
      %s515 = sadd.s32 %s514, 1
      %p518 = scmp.eq.s32.totalorder %s30, 3
      %p519 = scmp.ne.s32.totalorder %s514, %s516
      %p520 = scmp.eq.s32.totalorder %s30, 0
      %p521 = por %p519, %p520
      %p522 = scmp.ne.s32.totalorder %s514, %s516
      %p523 = scmp.eq.s32.totalorder %s35, 3
      %p524 = por %p522, %p523
      %p525 = scmp.ne.s32.totalorder %s516, %s517
      %p526 = scmp.eq.s32.totalorder %s35, 0
      %p527 = por %p525, %p526
      %p528 = scmp.ne.s32.totalorder %s516, %s517
      %p529 = scmp.eq.s32.totalorder %s36, 3
      %p530 = por %p528, %p529
      %p532 = scmp.ne.s32.totalorder %s517, %s531
      %p533 = scmp.eq.s32.totalorder %s36, 0
      %p534 = por %p532, %p533
      %s536 = sadd.s32 %s535, 1
      %p539 = scmp.eq.s32.totalorder %s30, 3
      %p540 = scmp.ne.s32.totalorder %s535, %s537
      %p541 = scmp.eq.s32.totalorder %s30, 0
      %p542 = por %p540, %p541
      %p543 = scmp.ne.s32.totalorder %s535, %s537
      %p544 = scmp.eq.s32.totalorder %s35, 3
      %p545 = por %p543, %p544
      %p546 = scmp.ne.s32.totalorder %s537, %s538
      %p547 = scmp.eq.s32.totalorder %s35, 0
      %p548 = por %p546, %p547
      %p549 = scmp.ne.s32.totalorder %s537, %s538
      %p550 = scmp.eq.s32.totalorder %s36, 3
      %p551 = por %p549, %p550
      %p553 = scmp.ne.s32.totalorder %s538, %s552
      %p554 = scmp.eq.s32.totalorder %s36, 0
      %p555 = por %p553, %p554
      %s556 = ssub.s32 %s37, %s49
      %p557 = scmp.eq.s32.totalorder %s556, 0
      %s559 = sadd.s32 %s558, 1
      %s560 = scalar_select %p557, %s558, %s559
      %p563 = pneg %p557
      %p564 = scmp.eq.s32.totalorder %s30, 3
      %p565 = por %p563, %p564
      %p566 = scmp.ne.s32.totalorder %s558, %s561
      %p567 = scmp.eq.s32.totalorder %s30, 0
      %p568 = por %p566, %p567
      %p569 = scmp.ne.s32.totalorder %s558, %s561
      %p570 = scmp.eq.s32.totalorder %s35, 3
      %p571 = por %p569, %p570
      %p572 = scmp.ne.s32.totalorder %s561, %s562
      %p573 = scmp.eq.s32.totalorder %s35, 0
      %p574 = por %p572, %p573
      %p575 = scmp.ne.s32.totalorder %s561, %s562
      %p576 = scmp.eq.s32.totalorder %s36, 3
      %p577 = por %p575, %p576
      %p579 = scmp.ne.s32.totalorder %s562, %s578
      %p580 = scmp.eq.s32.totalorder %s36, 0
      %p581 = por %p579, %p580
      %p582 = scmp.le.s32.totalorder 1, %s30
      %p583 = scmp.lt.s32.totalorder %s30, 5
      %p584 = pnand %p582, %p583
      %p585 = pneg %p584
      // Predicated region
      $region9: #{vit_forward.1} parent=5 // pred_check
        _
      $region10: #{vit_forward.1} parent=5 // pred_check_branch
        %587 = sbr.rel (%p584) target = $region12
      $region11: #{vit_forward.1} parent=5 // pred_region
        %s588 = ssub.s32 %s30, 1
        // Predicated region
        $region13: #{vit_forward.1} parent=11 // pred_check
          %p589 = pneg %p89
        $region14: #{vit_forward.1} parent=11 // pred_check_branch
          %591 = sbr.rel (%p589) target = $region16
        $region15: #{vit_forward.1} parent=11 // pred_region
          _
        $region16: #{vit_forward.1} parent=11 // pred_fallthru
          _
        // Predicated region
        $region17: #{vit_forward.1} parent=11 // pred_check
          %p592 = pneg %p110
        $region18: #{vit_forward.1} parent=11 // pred_check_branch
          %594 = sbr.rel (%p592) target = $region20
        $region19: #{vit_forward.1} parent=11 // pred_region
          _
        $region20: #{vit_forward.1} parent=11 // pred_fallthru
          _
        // Predicated region
        $region21: #{vit_forward.1} parent=11 // pred_check
          %p595 = pneg %p131
        $region22: #{vit_forward.1} parent=11 // pred_check_branch
          %597 = sbr.rel (%p595) target = $region24
        $region23: #{vit_forward.1} parent=11 // pred_region
          _
        $region24: #{vit_forward.1} parent=11 // pred_fallthru
          _
        // Predicated region
        $region25: #{vit_forward.1} parent=11 // pred_check
          %p598 = pneg %p152
        $region26: #{vit_forward.1} parent=11 // pred_check_branch
          %600 = sbr.rel (%p598) target = $region28
        $region27: #{vit_forward.1} parent=11 // pred_region
          _
        $region28: #{vit_forward.1} parent=11 // pred_fallthru
          _
        // Predicated region
        $region29: #{vit_forward.1} parent=11 // pred_check
          %p601 = pneg %p173
        $region30: #{vit_forward.1} parent=11 // pred_check_branch
          %603 = sbr.rel (%p601) target = $region32
        $region31: #{vit_forward.1} parent=11 // pred_region
          _
        $region32: #{vit_forward.1} parent=11 // pred_fallthru
          _
        // Predicated region
        $region33: #{vit_forward.1} parent=11 // pred_check
          %p604 = pneg %p506
        $region34: #{vit_forward.1} parent=11 // pred_check_branch
          %606 = sbr.rel (%p604) target = $region36
        $region35: #{vit_forward.1} parent=11 // pred_region
          _
        $region36: #{vit_forward.1} parent=11 // pred_fallthru
          _
        // Predicated region
        $region37: #{vit_forward.1} parent=11 // pred_check
          %p607 = pneg %p527
        $region38: #{vit_forward.1} parent=11 // pred_check_branch
          %609 = sbr.rel (%p607) target = $region40
        $region39: #{vit_forward.1} parent=11 // pred_region
          _
        $region40: #{vit_forward.1} parent=11 // pred_fallthru
          _
        // Predicated region
        $region41: #{vit_forward.1} parent=11 // pred_check
          %p610 = pneg %p548
        $region42: #{vit_forward.1} parent=11 // pred_check_branch
          %612 = sbr.rel (%p610) target = $region44
        $region43: #{vit_forward.1} parent=11 // pred_region
          _
        $region44: #{vit_forward.1} parent=11 // pred_fallthru
          _
      $region12: #{vit_forward.1} parent=5 // pred_fallthru
        _
      %p613 = scmp.lt.s32.totalorder %s30, 4
      // Predicated region
      $region45: #{vit_forward.1} parent=5 // pred_check
        %p614 = pneg %p613
      $region46: #{vit_forward.1} parent=5 // pred_check_branch
        %616 = sbr.rel (%p614) target = $region48
      $region47: #{vit_forward.1} parent=5 // pred_region
        // Predicated region
        $region49: #{vit_forward.1} parent=47 // pred_check
          %p617 = pneg %p62
        $region50: #{vit_forward.1} parent=47 // pred_check_branch
          %619 = sbr.rel (%p617) target = $region52
        $region51: #{vit_forward.1} parent=47 // pred_region
          %p620 = scmp.lt.s32.totalorder %s37, 1
          %s621 = scalar_select %p620, %s37, 1
          %s622 = smul.addr %s621, 4
          %s623 = smul.addr %s622, 8
          %s624 = scalar_lea.vmem %s0, %s623
        $region52: #{vit_forward.1} parent=47 // pred_fallthru
          _
        // Predicated region
        $region53: #{vit_forward.1} parent=47 // pred_check
          %p625 = pneg %p193
        $region54: #{vit_forward.1} parent=47 // pred_check_branch
          %627 = sbr.rel (%p625) target = $region56
        $region55: #{vit_forward.1} parent=47 // pred_region
          %p628 = scmp.lt.s32.totalorder %s38, 1
          %s629 = scalar_select %p628, %s38, 1
          %s630 = scalar_lea.vmem %s6, %s629
        $region56: #{vit_forward.1} parent=47 // pred_fallthru
          _
        // Predicated region
        $region57: #{vit_forward.1} parent=47 // pred_check
          %p631 = pneg %p219
        $region58: #{vit_forward.1} parent=47 // pred_check_branch
          %633 = sbr.rel (%p631) target = $region60
        $region59: #{vit_forward.1} parent=47 // pred_region
          %p634 = scmp.lt.s32.totalorder %s38, 1
          %s635 = scalar_select %p634, %s38, 1
          %s636 = scalar_lea.vmem %s7, %s635
        $region60: #{vit_forward.1} parent=47 // pred_fallthru
          _
        // Predicated region
        $region61: #{vit_forward.1} parent=47 // pred_check
          %p637 = pneg %p245
        $region62: #{vit_forward.1} parent=47 // pred_check_branch
          %639 = sbr.rel (%p637) target = $region64
        $region63: #{vit_forward.1} parent=47 // pred_region
          %p640 = scmp.lt.s32.totalorder %s38, 1
          %s641 = scalar_select %p640, %s38, 1
          %s642 = smul.addr %s641, 96
          %s643 = smul.addr %s642, 8
          %s644 = scalar_lea.vmem %s8, %s643
        $region64: #{vit_forward.1} parent=47 // pred_fallthru
          _
        // Predicated region
        $region65: #{vit_forward.1} parent=47 // pred_check
          %p645 = pneg %p271
        $region66: #{vit_forward.1} parent=47 // pred_check_branch
          %647 = sbr.rel (%p645) target = $region68
        $region67: #{vit_forward.1} parent=47 // pred_region
          %p648 = scmp.lt.s32.totalorder %s38, 1
          %s649 = scalar_select %p648, %s38, 1
          %s650 = smul.addr %s649, 12
          %s651 = scalar_lea.vmem %s9, %s650
        $region68: #{vit_forward.1} parent=47 // pred_fallthru
          _
        // Predicated region
        $region69: #{vit_forward.1} parent=47 // pred_check
          %p652 = pneg %p297
        $region70: #{vit_forward.1} parent=47 // pred_check_branch
          %654 = sbr.rel (%p652) target = $region72
        $region71: #{vit_forward.1} parent=47 // pred_region
          %p655 = scmp.lt.s32.totalorder %s38, 1
          %s656 = scalar_select %p655, %s38, 1
          %s657 = smul.addr %s656, 8
          %s658 = smul.addr %s657, 8
          %s659 = scalar_lea.vmem %s10, %s658
        $region72: #{vit_forward.1} parent=47 // pred_fallthru
          _
        // Predicated region
        $region73: #{vit_forward.1} parent=47 // pred_check
          %p660 = pneg %p323
        $region74: #{vit_forward.1} parent=47 // pred_check_branch
          %662 = sbr.rel (%p660) target = $region76
        $region75: #{vit_forward.1} parent=47 // pred_region
          %p663 = scmp.lt.s32.totalorder %s38, 1
          %s664 = scalar_select %p663, %s38, 1
          %s665 = scalar_lea.vmem %s11, %s664
        $region76: #{vit_forward.1} parent=47 // pred_fallthru
          _
        // Predicated region
        $region77: #{vit_forward.1} parent=47 // pred_check
          %p666 = pneg %p349
        $region78: #{vit_forward.1} parent=47 // pred_check_branch
          %668 = sbr.rel (%p666) target = $region80
        $region79: #{vit_forward.1} parent=47 // pred_region
          %p669 = scmp.lt.s32.totalorder %s38, 1
          %s670 = scalar_select %p669, %s38, 1
          %s671 = scalar_lea.vmem %s12, %s670
        $region80: #{vit_forward.1} parent=47 // pred_fallthru
          _
        // Predicated region
        $region81: #{vit_forward.1} parent=47 // pred_check
          %p672 = pneg %p375
        $region82: #{vit_forward.1} parent=47 // pred_check_branch
          %674 = sbr.rel (%p672) target = $region84
        $region83: #{vit_forward.1} parent=47 // pred_region
          %p675 = scmp.lt.s32.totalorder %s38, 1
          %s676 = scalar_select %p675, %s38, 1
          %s677 = scalar_lea.vmem %s13, %s676
        $region84: #{vit_forward.1} parent=47 // pred_fallthru
          _
        // Predicated region
        $region85: #{vit_forward.1} parent=47 // pred_check
          %p678 = pneg %p401
        $region86: #{vit_forward.1} parent=47 // pred_check_branch
          %680 = sbr.rel (%p678) target = $region88
        $region87: #{vit_forward.1} parent=47 // pred_region
          %p681 = scmp.lt.s32.totalorder %s38, 1
          %s682 = scalar_select %p681, %s38, 1
          %s683 = smul.addr %s682, 16
          %s684 = smul.addr %s683, 8
          %s685 = scalar_lea.vmem %s14, %s684
        $region88: #{vit_forward.1} parent=47 // pred_fallthru
          _
        // Predicated region
        $region89: #{vit_forward.1} parent=47 // pred_check
          %p686 = pneg %p427
        $region90: #{vit_forward.1} parent=47 // pred_check_branch
          %688 = sbr.rel (%p686) target = $region92
        $region91: #{vit_forward.1} parent=47 // pred_region
          %p689 = scmp.lt.s32.totalorder %s38, 1
          %s690 = scalar_select %p689, %s38, 1
          %s691 = smul.addr %s690, 2
          %s692 = scalar_lea.vmem %s15, %s691
        $region92: #{vit_forward.1} parent=47 // pred_fallthru
          _
        // Predicated region
        $region93: #{vit_forward.1} parent=47 // pred_check
          %p693 = pneg %p453
        $region94: #{vit_forward.1} parent=47 // pred_check_branch
          %695 = sbr.rel (%p693) target = $region96
        $region95: #{vit_forward.1} parent=47 // pred_region
          %p696 = scmp.lt.s32.totalorder %s38, 1
          %s697 = scalar_select %p696, %s38, 1
          %s698 = smul.addr %s697, 32
          %s699 = smul.addr %s698, 8
          %s700 = scalar_lea.vmem %s16, %s699
        $region96: #{vit_forward.1} parent=47 // pred_fallthru
          _
        // Predicated region
        $region97: #{vit_forward.1} parent=47 // pred_check
          %p701 = pneg %p479
        $region98: #{vit_forward.1} parent=47 // pred_check_branch
          %703 = sbr.rel (%p701) target = $region100
        $region99: #{vit_forward.1} parent=47 // pred_region
          %p704 = scmp.lt.s32.totalorder %s38, 1
          %s705 = scalar_select %p704, %s38, 1
          %s706 = scalar_lea.vmem %s17, %s705
        $region100: #{vit_forward.1} parent=47 // pred_fallthru
          _
      $region48: #{vit_forward.1} parent=5 // pred_fallthru
        _
      %p707 = scmp.le.s32.totalorder 1, %s30
      %p708 = scmp.lt.s32.totalorder %s30, 5
      %p709 = pnand %p707, %p708
      %p710 = pneg %p709
      // Predicated region
      $region101: #{vit_forward.1} parent=5 // pred_check
        _
      $region102: #{vit_forward.1} parent=5 // pred_check_branch
        %712 = sbr.rel (%p709) target = $region104
      $region103: #{vit_forward.1} parent=5 // pred_region
        %s713 = ssub.s32 %s30, 1
        %p714 = scmp.lt.s32.totalorder %s39, 1
        %s715 = scalar_select %p714, %s39, 1
        %s716 = smul.addr %s715, 4
        %s717 = smul.addr %s716, 8
        %s718 = scalar_lea.vmem %s0, %s717
        %p719 = pneg %p68
        %p720 = pneg %p65
        %p721 = pneg %p89
        %p722 = pneg %p86
        %p723 = pneg %p110
        %p724 = pneg %p107
        %p725 = pneg %p131
        %p726 = pneg %p128
        %p727 = pneg %p152
        %p728 = pneg %p149
        %p729 = pneg %p173
        %p730 = pneg %p170
        %p731 = scmp.lt.s32.totalorder %s40, 1
        %s732 = scalar_select %p731, %s40, 1
        %s733 = scalar_lea.vmem %s6, %s732
        %p734 = pneg %p199
        %p735 = pneg %p196
        %p736 = scmp.lt.s32.totalorder %s40, 1
        %s737 = scalar_select %p736, %s40, 1
        %s738 = scalar_lea.vmem %s7, %s737
        %p739 = pneg %p225
        %p740 = pneg %p222
        %p741 = scmp.lt.s32.totalorder %s40, 1
        %s742 = scalar_select %p741, %s40, 1
        %s743 = smul.addr %s742, 96
        %s744 = smul.addr %s743, 8
        %s745 = scalar_lea.vmem %s8, %s744
        %p746 = pneg %p251
        %p747 = pneg %p248
        %p748 = scmp.lt.s32.totalorder %s40, 1
        %s749 = scalar_select %p748, %s40, 1
        %s750 = smul.addr %s749, 12
        %s751 = scalar_lea.vmem %s9, %s750
        %p752 = pneg %p277
        %p753 = pneg %p274
        %p754 = scmp.lt.s32.totalorder %s40, 1
        %s755 = scalar_select %p754, %s40, 1
        %s756 = smul.addr %s755, 8
        %s757 = smul.addr %s756, 8
        %s758 = scalar_lea.vmem %s10, %s757
        %p759 = pneg %p303
        %p760 = pneg %p300
        %p761 = scmp.lt.s32.totalorder %s40, 1
        %s762 = scalar_select %p761, %s40, 1
        %s763 = scalar_lea.vmem %s11, %s762
        %p764 = pneg %p329
        %p765 = pneg %p326
        %p766 = scmp.lt.s32.totalorder %s40, 1
        %s767 = scalar_select %p766, %s40, 1
        %s768 = scalar_lea.vmem %s12, %s767
        %p769 = pneg %p355
        %p770 = pneg %p352
        %p771 = scmp.lt.s32.totalorder %s40, 1
        %s772 = scalar_select %p771, %s40, 1
        %s773 = scalar_lea.vmem %s13, %s772
        %p774 = pneg %p381
        %p775 = pneg %p378
        %p776 = scmp.lt.s32.totalorder %s40, 1
        %s777 = scalar_select %p776, %s40, 1
        %s778 = smul.addr %s777, 16
        %s779 = smul.addr %s778, 8
        %s780 = scalar_lea.vmem %s14, %s779
        %p781 = pneg %p407
        %p782 = pneg %p404
        %p783 = scmp.lt.s32.totalorder %s40, 1
        %s784 = scalar_select %p783, %s40, 1
        %s785 = smul.addr %s784, 2
        %s786 = scalar_lea.vmem %s15, %s785
        %p787 = pneg %p433
        %p788 = pneg %p430
        %p789 = scmp.lt.s32.totalorder %s40, 1
        %s790 = scalar_select %p789, %s40, 1
        %s791 = smul.addr %s790, 32
        %s792 = smul.addr %s791, 8
        %s793 = scalar_lea.vmem %s16, %s792
        %p794 = pneg %p459
        %p795 = pneg %p456
        %p796 = scmp.lt.s32.totalorder %s40, 1
        %s797 = scalar_select %p796, %s40, 1
        %s798 = scalar_lea.vmem %s17, %s797
        %p799 = pneg %p485
        %p800 = pneg %p482
        %p801 = pneg %p506
        %p802 = pneg %p503
        %p803 = pneg %p527
        %p804 = pneg %p524
        %p805 = pneg %p548
        %p806 = pneg %p545
        %p807 = pneg %p574
        %p808 = pneg %p571
        %s809 = sand.u32 %s561, 1
        %s810 = scalar_lea.sflag [#allocation4], %s809
        %s811 = sand.u32 %s561, 1
        %s812 = scalar_lea.vmem [#allocation3], %s811
        %p813 = scmp.lt.s32.totalorder %s39, 1
        %s814 = scalar_select %p813, %s39, 1
        %s815 = smul.addr %s814, 4
        %s816 = smul.addr %s815, 8
        %s817 = scalar_lea.vmem %s0, %s816
        %p818 = scmp.lt.s32.totalorder %s40, 1
        %s819 = scalar_select %p818, %s40, 1
        %s820 = scalar_lea.vmem %s6, %s819
        %p821 = scmp.lt.s32.totalorder %s40, 1
        %s822 = scalar_select %p821, %s40, 1
        %s823 = scalar_lea.vmem %s7, %s822
        %p824 = scmp.lt.s32.totalorder %s40, 1
        %s825 = scalar_select %p824, %s40, 1
        %s826 = smul.addr %s825, 96
        %s827 = smul.addr %s826, 8
        %s828 = scalar_lea.vmem %s8, %s827
        %p829 = scmp.lt.s32.totalorder %s40, 1
        %s830 = scalar_select %p829, %s40, 1
        %s831 = smul.addr %s830, 12
        %s832 = scalar_lea.vmem %s9, %s831
        %p833 = scmp.lt.s32.totalorder %s40, 1
        %s834 = scalar_select %p833, %s40, 1
        %s835 = smul.addr %s834, 8
        %s836 = smul.addr %s835, 8
        %s837 = scalar_lea.vmem %s10, %s836
        %p838 = scmp.lt.s32.totalorder %s40, 1
        %s839 = scalar_select %p838, %s40, 1
        %s840 = scalar_lea.vmem %s11, %s839
        %p841 = scmp.lt.s32.totalorder %s40, 1
        %s842 = scalar_select %p841, %s40, 1
        %s843 = scalar_lea.vmem %s12, %s842
        %p844 = scmp.lt.s32.totalorder %s40, 1
        %s845 = scalar_select %p844, %s40, 1
        %s846 = scalar_lea.vmem %s13, %s845
        %p847 = scmp.lt.s32.totalorder %s40, 1
        %s848 = scalar_select %p847, %s40, 1
        %s849 = smul.addr %s848, 16
        %s850 = smul.addr %s849, 8
        %s851 = scalar_lea.vmem %s14, %s850
        %p852 = scmp.lt.s32.totalorder %s40, 1
        %s853 = scalar_select %p852, %s40, 1
        %s854 = smul.addr %s853, 2
        %s855 = scalar_lea.vmem %s15, %s854
        %p856 = scmp.lt.s32.totalorder %s40, 1
        %s857 = scalar_select %p856, %s40, 1
        %s858 = smul.addr %s857, 32
        %s859 = smul.addr %s858, 8
        %s860 = scalar_lea.vmem %s16, %s859
        %p861 = scmp.lt.s32.totalorder %s40, 1
        %s862 = scalar_select %p861, %s40, 1
        %s863 = scalar_lea.vmem %s17, %s862
        %p864 = scmp.eq.s32.totalorder %s40, 0
        // Predicated region
        $region105: #{vit_forward.1} parent=103 // pred_check
          %p865 = pneg %p864
        $region106: #{vit_forward.1} parent=103 // pred_check_branch
          %867 = sbr.rel (%p865) target = $region108
        $region107: #{vit_forward.1} parent=103 // pred_region
          %v868 = vld [vmem:[%s817] sm:$0xff]
          %v869 = vld [vmem:[%s817 + $0x8] sm:$0xff]
          %v870 = vld [vmem:[%s817 + $0x10] sm:$0xff]
          %v871 = vld [vmem:[%s817 + $0x18] sm:$0xff]
          %v872 = vld [vmem:[%s1] sm:$0xff]
          %v873 = vld [vmem:[%s1 + $0x8] sm:$0xff]
          %v874 = vld [vmem:[%s1 + $0x10] sm:$0xff]
          %v875 = vld [vmem:[%s1 + $0x18] sm:$0xff]
          %v876 = vld [vmem:[%s1 + $0x20] sm:$0xff]
          %v877 = vld [vmem:[%s1 + $0x28] sm:$0xff]
          %v878 = vld [vmem:[%s1 + $0x30] sm:$0xff]
          %v879 = vld [vmem:[%s1 + $0x38] sm:$0xff]
          %v880 = vld [vmem:[%s1 + $0x40] sm:$0xff]
          %v881 = vld [vmem:[%s1 + $0x48] sm:$0xff]
          %v882 = vld [vmem:[%s1 + $0x50] sm:$0xff]
          %v883 = vld [vmem:[%s1 + $0x58] sm:$0xff]
          %v884 = vld [vmem:[%s1 + $0x60] sm:$0xff]
          %v885 = vld [vmem:[%s1 + $0x68] sm:$0xff]
          %v886 = vld [vmem:[%s1 + $0x70] sm:$0xff]
          %v887 = vld [vmem:[%s1 + $0x78] sm:$0xff]
          %v888 = vld [vmem:[%s1 + $0x80] sm:$0xff]
          %v889 = vld [vmem:[%s1 + $0x88] sm:$0xff]
          %v890 = vld [vmem:[%s1 + $0x90] sm:$0xff]
          %v891 = vld [vmem:[%s1 + $0x98] sm:$0xff]
          %v892 = vld [vmem:[%s1 + $0xa0] sm:$0xff]
          %v893 = vld [vmem:[%s1 + $0xa8] sm:$0xff]
          %v894 = vld [vmem:[%s1 + $0xb0] sm:$0xff]
          %v895 = vld [vmem:[%s1 + $0xb8] sm:$0xff]
          %v896 = vld [vmem:[%s3] sm:$0xff]
          %v897 = vld [vmem:[%s3 + $0x8] sm:$0xff]
          %vm898 = vcmask 523264
          %v900 = vsel %vm898, %v869, 0
          %v903 = vsel %vm898, %v871, 0
          %905 = vmatprep.subr.mxu0 0.0
          %906 = vmatpush1.msra.mxu0 %v887
          %907 = vmatprep.subr.mxu0 0.0
          %908 = vmatpush1.msra.mxu0 %v886
          %909 = vmatprep.subr.mxu0 0.0
          %910 = vmatpush1.msra.mxu0 %v885
          %911 = vmatprep.subr.mxu0 0.0
          %912 = vmatpush1.msra.mxu0 %v884
          %913 = vmatprep.subr.mxu0 0.0
          %914 = vmatpush1.msra.mxu0 %v883
          %915 = vmatprep.subr.mxu0 0.0
          %916 = vmatpush1.msra.mxu0 %v882
          %917 = vmatprep.subr.mxu0 0.0
          %918 = vmatpush1.msra.mxu0 %v881
          %919 = vmatprep.subr.mxu0 0.0
          %920 = vmatpush1.msra.mxu0 %v880
          %921 = vmatprep.subr.mxu0 0.0
          %922 = vmatpush1.msra.mxu0 %v879
          %923 = vmatprep.subr.mxu0 0.0
          %924 = vmatpush1.msra.mxu0 %v878
          %925 = vmatprep.subr.mxu0 0.0
          %926 = vmatpush1.msra.mxu0 %v877
          %927 = vmatprep.subr.mxu0 0.0
          %928 = vmatpush1.msra.mxu0 %v876
          %929 = vmatprep.subr.mxu0 0.0
          %930 = vmatpush1.msra.mxu0 %v875
          %931 = vmatprep.subr.mxu0 0.0
          %932 = vmatpush1.msra.mxu0 %v874
          %933 = vmatprep.subr.mxu0 0.0
          %934 = vmatpush1.msra.mxu0 %v873
          %935 = vmatprep.subr.mxu0 0.0
          %936 = vmatpush1.msra.mxu0 %v872
          %937 = vmatprep.subr.mxu0 0.0
          %938 = vmatpush2.msra.mxu0 0.0
          %939 = vmatprep.subr.mxu0 0.0
          %940 = vmatpush2.msra.mxu0 0.0
          %941 = vmatprep.subr.mxu0 0.0
          %942 = vmatpush2.msra.mxu0 0.0
          %943 = vmatprep.subr.mxu0 0.0
          %944 = vmatpush2.msra.mxu0 0.0
          %945 = vmatprep.subr.mxu0 0.0
          %946 = vmatpush2.msra.mxu0 0.0
          %947 = vmatprep.subr.mxu0 0.0
          %948 = vmatpush2.msra.mxu0 0.0
          %949 = vmatprep.subr.mxu0 0.0
          %950 = vmatpush2.msra.mxu0 0.0
          %951 = vmatprep.subr.mxu0 0.0
          %952 = vmatpush2.msra.mxu0 0.0
          %953 = vmatprep.subr.mxu0 0.0
          %954 = vmatpush2.msra.mxu0 %v895
          %955 = vmatprep.subr.mxu0 0.0
          %956 = vmatpush2.msra.mxu0 %v894
          %957 = vmatprep.subr.mxu0 0.0
          %958 = vmatpush2.msra.mxu0 %v893
          %959 = vmatprep.subr.mxu0 0.0
          %960 = vmatpush2.msra.mxu0 %v892
          %961 = vmatprep.subr.mxu0 0.0
          %962 = vmatpush2.msra.mxu0 %v891
          %963 = vmatprep.subr.mxu0 0.0
          %964 = vmatpush2.msra.mxu0 %v890
          %965 = vmatprep.subr.mxu0 0.0
          %966 = vmatpush2.msra.mxu0 %v889
          %967 = vmatprep.subr.mxu0 0.0
          %968 = vmatpush2.msra.mxu0 %v888
          %969 = vmatprep.mubr.f32.mxu0 %v900
          %970 = vmatmul.mubr.f32.gmra.mxu0 %v868
          %v971 = vpop.f32.mrf.mxu0
          %v972 = vadd.f32 %v896, %v971
          %v973 = vpop.f32.mrf.mxu0
          %974 = vmatprep.mubr.f32.mxu0 %v903
          %975 = vmatmul.mubr.f32.gmra.mxu0 %v870
          %v976 = vpop.f32.mrf.mxu0
          %v977 = vadd.f32 %v897, %v976
          %v978 = vpop.f32.mrf.mxu0
          %979 = vdwg.mxu0
          %980 = vst.msk [vmem:[#allocation2] sm:$0xff] %vm898, %v972
          %981 = vst.msk [vmem:[#allocation2 + $0x8] sm:$0xff] %vm898, %v977
          %v982 = vld [vmem:[%s2] sm:$0x1]
          %vm983 = vcmask 516096
          %984 = vst.msk [vmem:[#allocation2 + $0x10] sm:$0x1] %vm983, %v982
          %v985 = vld [vmem:[#allocation2] sm:$0xff]
          %v986 = vld [vmem:[#allocation2 + $0x8] sm:$0xff]
          %v987 = vld [vmem:[#allocation2 + $0x10] sm:$0x1]
          %v988 = vld [vmem:[%s4] sm:$0x1]
          %v989 = vld [vmem:[%s5] sm:$0x1]
          %v990 = vsel %vm898, %v985, 0.0
          %991 = vadd.xlane.f32.xlu0 %v990
          %v992 = vpop.xlane.xlu0 %991
          %v993 = vsel %vm898, %v986, 0.0
          %994 = vadd.xlane.f32.xlu0 %v993
          %v995 = vpop.xlane.xlu0 %994
          %v996 = vsel %vm983, %v987, 0.0
          %997 = vadd.xlane.f32.xlu0 %v996
          %v998 = vpop.xlane.xlu0 %997
          %v999 = vrcp.pop 64.0
          %v1000 = vmul.f32 %v992, %v999
          %v1001 = vmul.f32 %v995, %v999
          %v1002 = vmul.f32 %v998, %v999
          %v1003 = vsub.f32 %v985, %v1000
          %v1004 = vsub.f32 %v986, %v1001
          %v1005 = vsub.f32 %v987, %v1002
          %v1006 = vmul.f32 %v1003, %v1003
          %v1007 = vmul.f32 %v1004, %v1004
          %v1008 = vmul.f32 %v1005, %v1005
          %v1009 = vsel %vm898, %v1006, 0.0
          %1010 = vadd.xlane.f32.xlu0 %v1009
          %v1011 = vpop.xlane.xlu0 %1010
          %v1012 = vsel %vm898, %v1007, 0.0
          %1013 = vadd.xlane.f32.xlu0 %v1012
          %v1014 = vpop.xlane.xlu0 %1013
          %v1015 = vsel %vm983, %v1008, 0.0
          %1016 = vadd.xlane.f32.xlu0 %v1015
          %v1017 = vpop.xlane.xlu0 %1016
          %v1018 = vmul.f32 %v1011, %v999
          %v1019 = vmul.f32 %v1014, %v999
          %v1020 = vmul.f32 %v1017, %v999
          %v1021 = vadd.f32 %v1018, 1e-05
          %v1022 = vadd.f32 %v1019, 1e-05
          %v1023 = vadd.f32 %v1020, 1e-05
          %v1024 = vrsqrt.pop %v1021
          %v1025 = vrsqrt.pop %v1022
          %v1026 = vrsqrt.pop %v1023
          %v1027 = vmul.f32 %v1003, %v1024
          %v1028 = vmul.f32 %v1004, %v1025
          %v1029 = vmul.f32 %v1005, %v1026
          %v1031 = vlaneseq
          %v1032 = vshrl.u32 %v1031, 7
          %v1033 = vsub.s32 0, %v1032
          %v1034 = vrot.slane %v988, %v1033
          %v1036 = vmul.f32 %v1027, %v1034
          %v1037 = vmul.f32 %v1028, %v1034
          %v1038 = vmul.f32 %v1029, %v1034
          %v1040 = vlaneseq
          %v1041 = vshrl.u32 %v1040, 7
          %v1042 = vsub.s32 0, %v1041
          %v1043 = vrot.slane %v989, %v1042
          %v1045 = vadd.f32 %v1036, %v1043
          %v1046 = vadd.f32 %v1037, %v1043
          %v1047 = vadd.f32 %v1038, %v1043
          %1048 = vst.msk [vmem:[#allocation2] sm:$0xff] %vm898, %v1045
          %1049 = vst.msk [vmem:[#allocation2 + $0x8] sm:$0xff] %vm898, %v1046
          %1050 = vst.msk [vmem:[#allocation2 + $0x10] sm:$0x1] %vm983, %v1047
        $region108: #{vit_forward.1} parent=103 // pred_fallthru
          _
        %v1051 = vld [vmem:[#allocation2] sm:$0xff]
        %v1052 = vld [vmem:[#allocation2 + $0x8] sm:$0xff]
        %v1053 = vld [vmem:[#allocation2 + $0x10] sm:$0x1]
        %v1054 = vld [vmem:[%s820] sm:$0x1]
        %v1055 = vld [vmem:[%s823] sm:$0x1]
        %vm1056 = vcmask 523264
        %v1057 = vsel %vm1056, %v1051, 0.0
        %1058 = vadd.xlane.f32.xlu0 %v1057
        %v1059 = vpop.xlane.xlu0 %1058
        %v1060 = vsel %vm1056, %v1052, 0.0
        %1061 = vadd.xlane.f32.xlu0 %v1060
        %v1062 = vpop.xlane.xlu0 %1061
        %vm1063 = vcmask 516096
        %v1064 = vsel %vm1063, %v1053, 0.0
        %1065 = vadd.xlane.f32.xlu0 %v1064
        %v1066 = vpop.xlane.xlu0 %1065
        %v1067 = vrcp.pop 64.0
        %v1068 = vmul.f32 %v1059, %v1067
        %v1069 = vmul.f32 %v1062, %v1067
        %v1070 = vmul.f32 %v1066, %v1067
        %v1071 = vsub.f32 %v1051, %v1068
        %v1072 = vsub.f32 %v1052, %v1069
        %v1073 = vsub.f32 %v1053, %v1070
        %v1074 = vmul.f32 %v1071, %v1071
        %v1075 = vmul.f32 %v1072, %v1072
        %v1076 = vmul.f32 %v1073, %v1073
        %v1077 = vsel %vm1056, %v1074, 0.0
        %1078 = vadd.xlane.f32.xlu0 %v1077
        %v1079 = vpop.xlane.xlu0 %1078
        %v1080 = vsel %vm1056, %v1075, 0.0
        %1081 = vadd.xlane.f32.xlu0 %v1080
        %v1082 = vpop.xlane.xlu0 %1081
        %v1083 = vsel %vm1063, %v1076, 0.0
        %1084 = vadd.xlane.f32.xlu0 %v1083
        %v1085 = vpop.xlane.xlu0 %1084
        %v1086 = vmul.f32 %v1079, %v1067
        %v1087 = vmul.f32 %v1082, %v1067
        %v1088 = vmul.f32 %v1085, %v1067
        %v1089 = vadd.f32 %v1086, 1e-05
        %v1090 = vadd.f32 %v1087, 1e-05
        %v1091 = vadd.f32 %v1088, 1e-05
        %v1092 = vrsqrt.pop %v1089
        %v1093 = vrsqrt.pop %v1090
        %v1094 = vrsqrt.pop %v1091
        %v1095 = vmul.f32 %v1071, %v1092
        %v1096 = vmul.f32 %v1072, %v1093
        %v1097 = vmul.f32 %v1073, %v1094
        %v1099 = vlaneseq
        %v1100 = vshrl.u32 %v1099, 7
        %v1101 = vsub.s32 0, %v1100
        %v1102 = vrot.slane %v1054, %v1101
        %v1104 = vmul.f32 %v1095, %v1102
        %v1105 = vmul.f32 %v1096, %v1102
        %v1106 = vmul.f32 %v1097, %v1102
        %v1108 = vlaneseq
        %v1109 = vshrl.u32 %v1108, 7
        %v1110 = vsub.s32 0, %v1109
        %v1111 = vrot.slane %v1055, %v1110
        %v1113 = vadd.f32 %v1104, %v1111
        %v1114 = vadd.f32 %v1105, %v1111
        %v1115 = vadd.f32 %v1106, %v1111
        %v1116 = vld [vmem:[%s840] sm:$0x1]
        %v1118 = vlaneseq
        %v1119 = vshrl.u32 %v1118, 7
        %v1120 = vsub.s32 0, %v1119
        %v1121 = vrot.slane %v1116, %v1120
        %v1123 = vadd.f32 %v1051, %v1121
        %v1124 = vadd.f32 %v1052, %v1121
        %v1125 = vadd.f32 %v1053, %v1121
        %v1126 = vld [vmem:[%s828] sm:$0xff]
        %v1127 = vld [vmem:[%s828 + $0x8] sm:$0xff]
        %v1128 = vld [vmem:[%s828 + $0x10] sm:$0xff]
        %v1129 = vld [vmem:[%s828 + $0x18] sm:$0xff]
        %v1130 = vld [vmem:[%s828 + $0x20] sm:$0xff]
        %v1131 = vld [vmem:[%s828 + $0x28] sm:$0xff]
        %v1132 = vld [vmem:[%s828 + $0x30] sm:$0xff]
        %v1133 = vld [vmem:[%s828 + $0x38] sm:$0xff]
        %v1134 = vld [vmem:[%s832] sm:$0x1]
        %v1136 = vlaneseq
        %v1137 = vshrl.u32 %v1136, 7
        %v1138 = vsub.s32 0, %v1137
        %v1139 = vrot.slane %v1134, %v1138
        %v1142 = vsel %vm1056, %v1113, 0
        %v1145 = vsel %vm1056, %v1114, 0
        %v1148 = vsel %vm1056, %v1115, 0
        %1150 = vmatprep.subr.mxu0 0.0
        %1151 = vmatpush1.msra.mxu0 0.0
        %1152 = vmatprep.subr.mxu0 0.0
        %1153 = vmatpush1.msra.mxu0 0.0
        %1154 = vmatprep.subr.mxu0 0.0
        %1155 = vmatpush1.msra.mxu0 0.0
        %1156 = vmatprep.subr.mxu0 0.0
        %1157 = vmatpush1.msra.mxu0 0.0
        %1158 = vmatprep.subr.mxu0 0.0
        %1159 = vmatpush1.msra.mxu0 0.0
        %1160 = vmatprep.subr.mxu0 0.0
        %1161 = vmatpush1.msra.mxu0 0.0
        %1162 = vmatprep.subr.mxu0 0.0
        %1163 = vmatpush1.msra.mxu0 0.0
        %1164 = vmatprep.subr.mxu0 0.0
        %1165 = vmatpush1.msra.mxu0 0.0
        %1166 = vmatprep.subr.mxu0 0.0
        %1167 = vmatpush1.msra.mxu0 %v1133
        %1168 = vmatprep.subr.mxu0 0.0
        %1169 = vmatpush1.msra.mxu0 %v1132
        %1170 = vmatprep.subr.mxu0 0.0
        %1171 = vmatpush1.msra.mxu0 %v1131
        %1172 = vmatprep.subr.mxu0 0.0
        %1173 = vmatpush1.msra.mxu0 %v1130
        %1174 = vmatprep.subr.mxu0 0.0
        %1175 = vmatpush1.msra.mxu0 %v1129
        %1176 = vmatprep.subr.mxu0 0.0
        %1177 = vmatpush1.msra.mxu0 %v1128
        %1178 = vmatprep.subr.mxu0 0.0
        %1179 = vmatpush1.msra.mxu0 %v1127
        %1180 = vmatprep.subr.mxu0 0.0
        %1181 = vmatpush1.msra.mxu0 %v1126
        %1182 = vmatprep.subr.mxu0 0.0
        %1183 = vmatpush2.msra.mxu0 0.0
        %1184 = vmatprep.subr.mxu0 0.0
        %1185 = vmatpush2.msra.mxu0 0.0
        %1186 = vmatprep.subr.mxu0 0.0
        %1187 = vmatpush2.msra.mxu0 0.0
        %1188 = vmatprep.subr.mxu0 0.0
        %1189 = vmatpush2.msra.mxu0 0.0
        %1190 = vmatprep.subr.mxu0 0.0
        %1191 = vmatpush2.msra.mxu0 0.0
        %1192 = vmatprep.subr.mxu0 0.0
        %1193 = vmatpush2.msra.mxu0 0.0
        %1194 = vmatprep.subr.mxu0 0.0
        %1195 = vmatpush2.msra.mxu0 0.0
        %1196 = vmatprep.subr.mxu0 0.0
        %1197 = vmatpush2.msra.mxu0 0.0
        %1198 = vmatprep.subr.mxu0 0.0
        %1199 = vmatpush2.msra.mxu0 0.0
        %1200 = vmatprep.subr.mxu0 0.0
        %1201 = vmatpush2.msra.mxu0 0.0
        %1202 = vmatprep.subr.mxu0 0.0
        %1203 = vmatpush2.msra.mxu0 0.0
        %1204 = vmatprep.subr.mxu0 0.0
        %1205 = vmatpush2.msra.mxu0 0.0
        %1206 = vmatprep.subr.mxu0 0.0
        %1207 = vmatpush2.msra.mxu0 0.0
        %1208 = vmatprep.subr.mxu0 0.0
        %1209 = vmatpush2.msra.mxu0 0.0
        %1210 = vmatprep.subr.mxu0 0.0
        %1211 = vmatpush2.msra.mxu0 0.0
        %1212 = vmatprep.subr.mxu0 0.0
        %1213 = vmatpush2.msra.mxu0 0.0
        %1214 = vmatprep.mubr.f32.mxu0 0.0
        %1215 = vmatmul.mubr.f32.gmra.mxu0 %v1142
        %v1216 = vpop.f32.mrf.mxu0
        %v1217 = vadd.f32 %v1139, %v1216
        %v1218 = vpop.f32.mrf.mxu0
        %1219 = vmatprep.mubr.f32.mxu0 0.0
        %1220 = vmatmul.mubr.f32.gmra.mxu0 %v1145
        %v1221 = vpop.f32.mrf.mxu0
        %v1222 = vadd.f32 %v1139, %v1221
        %v1223 = vpop.f32.mrf.mxu0
        %1224 = vmatprep.mubr.f32.mxu0 0.0
        %1225 = vmatmul.mubr.f32.gmra.mxu0 %v1148
        %v1226 = vpop.f32.mrf.mxu0
        %v1227 = vadd.f32 %v1139, %v1226
        %v1228 = vpop.f32.mrf.mxu0
        %1229 = vdwg.mxu0
        %s1230 = scalar_lea.vmem %s828, 256
        %v1231 = vld [vmem:[%s1230] sm:$0xff]
        %v1232 = vld [vmem:[%s1230 + $0x8] sm:$0xff]
        %v1233 = vld [vmem:[%s1230 + $0x10] sm:$0xff]
        %v1234 = vld [vmem:[%s1230 + $0x18] sm:$0xff]
        %v1235 = vld [vmem:[%s1230 + $0x20] sm:$0xff]
        %v1236 = vld [vmem:[%s1230 + $0x28] sm:$0xff]
        %v1237 = vld [vmem:[%s1230 + $0x30] sm:$0xff]
        %v1238 = vld [vmem:[%s1230 + $0x38] sm:$0xff]
        %s1239 = scalar_lea.vmem %s832, 4
        %v1240 = vld [vmem:[%s1239] sm:$0x1]
        %v1242 = vlaneseq
        %v1243 = vshrl.u32 %v1242, 7
        %v1244 = vsub.s32 0, %v1243
        %v1245 = vrot.slane %v1240, %v1244
        %1247 = vmatprep.subr.mxu0 0.0
        %1248 = vmatpush1.msra.mxu0 0.0
        %1249 = vmatprep.subr.mxu0 0.0
        %1250 = vmatpush1.msra.mxu0 0.0
        %1251 = vmatprep.subr.mxu0 0.0
        %1252 = vmatpush1.msra.mxu0 0.0
        %1253 = vmatprep.subr.mxu0 0.0
        %1254 = vmatpush1.msra.mxu0 0.0
        %1255 = vmatprep.subr.mxu0 0.0
        %1256 = vmatpush1.msra.mxu0 0.0
        %1257 = vmatprep.subr.mxu0 0.0
        %1258 = vmatpush1.msra.mxu0 0.0
        %1259 = vmatprep.subr.mxu0 0.0
        %1260 = vmatpush1.msra.mxu0 0.0
        %1261 = vmatprep.subr.mxu0 0.0
        %1262 = vmatpush1.msra.mxu0 0.0
        %1263 = vmatprep.subr.mxu0 0.0
        %1264 = vmatpush1.msra.mxu0 %v1238
        %1265 = vmatprep.subr.mxu0 0.0
        %1266 = vmatpush1.msra.mxu0 %v1237
        %1267 = vmatprep.subr.mxu0 0.0
        %1268 = vmatpush1.msra.mxu0 %v1236
        %1269 = vmatprep.subr.mxu0 0.0
        %1270 = vmatpush1.msra.mxu0 %v1235
        %1271 = vmatprep.subr.mxu0 0.0
        %1272 = vmatpush1.msra.mxu0 %v1234
        %1273 = vmatprep.subr.mxu0 0.0
        %1274 = vmatpush1.msra.mxu0 %v1233
        %1275 = vmatprep.subr.mxu0 0.0
        %1276 = vmatpush1.msra.mxu0 %v1232
        %1277 = vmatprep.subr.mxu0 0.0
        %1278 = vmatpush1.msra.mxu0 %v1231
        %1279 = vmatprep.subr.mxu0 0.0
        %1280 = vmatpush2.msra.mxu0 0.0
        %1281 = vmatprep.subr.mxu0 0.0
        %1282 = vmatpush2.msra.mxu0 0.0
        %1283 = vmatprep.subr.mxu0 0.0
        %1284 = vmatpush2.msra.mxu0 0.0
        %1285 = vmatprep.subr.mxu0 0.0
        %1286 = vmatpush2.msra.mxu0 0.0
        %1287 = vmatprep.subr.mxu0 0.0
        %1288 = vmatpush2.msra.mxu0 0.0
        %1289 = vmatprep.subr.mxu0 0.0
        %1290 = vmatpush2.msra.mxu0 0.0
        %1291 = vmatprep.subr.mxu0 0.0
        %1292 = vmatpush2.msra.mxu0 0.0
        %1293 = vmatprep.subr.mxu0 0.0
        %1294 = vmatpush2.msra.mxu0 0.0
        %1295 = vmatprep.subr.mxu0 0.0
        %1296 = vmatpush2.msra.mxu0 0.0
        %1297 = vmatprep.subr.mxu0 0.0
        %1298 = vmatpush2.msra.mxu0 0.0
        %1299 = vmatprep.subr.mxu0 0.0
        %1300 = vmatpush2.msra.mxu0 0.0
        %1301 = vmatprep.subr.mxu0 0.0
        %1302 = vmatpush2.msra.mxu0 0.0
        %1303 = vmatprep.subr.mxu0 0.0
        %1304 = vmatpush2.msra.mxu0 0.0
        %1305 = vmatprep.subr.mxu0 0.0
        %1306 = vmatpush2.msra.mxu0 0.0
        %1307 = vmatprep.subr.mxu0 0.0
        %1308 = vmatpush2.msra.mxu0 0.0
        %1309 = vmatprep.subr.mxu0 0.0
        %1310 = vmatpush2.msra.mxu0 0.0
        %1311 = vmatprep.mubr.f32.mxu0 0.0
        %1312 = vmatmul.mubr.f32.gmra.mxu0 %v1142
        %v1313 = vpop.f32.mrf.mxu0
        %v1314 = vadd.f32 %v1245, %v1313
        %v1315 = vpop.f32.mrf.mxu0
        %1316 = vmatprep.mubr.f32.mxu0 0.0
        %1317 = vmatmul.mubr.f32.gmra.mxu0 %v1145
        %v1318 = vpop.f32.mrf.mxu0
        %v1319 = vadd.f32 %v1245, %v1318
        %v1320 = vpop.f32.mrf.mxu0
        %1321 = vmatprep.mubr.f32.mxu0 0.0
        %1322 = vmatmul.mubr.f32.gmra.mxu0 %v1148
        %v1323 = vpop.f32.mrf.mxu0
        %v1324 = vadd.f32 %v1245, %v1323
        %v1325 = vpop.f32.mrf.mxu0
        %1326 = vdwg.mxu0
        %s1327 = scalar_lea.vmem %s828, 512
        %v1328 = vld [vmem:[%s1327] sm:$0xff]
        %v1329 = vld [vmem:[%s1327 + $0x8] sm:$0xff]
        %v1330 = vld [vmem:[%s1327 + $0x10] sm:$0xff]
        %v1331 = vld [vmem:[%s1327 + $0x18] sm:$0xff]
        %v1332 = vld [vmem:[%s1327 + $0x20] sm:$0xff]
        %v1333 = vld [vmem:[%s1327 + $0x28] sm:$0xff]
        %v1334 = vld [vmem:[%s1327 + $0x30] sm:$0xff]
        %v1335 = vld [vmem:[%s1327 + $0x38] sm:$0xff]
        %s1336 = scalar_lea.vmem %s832, 8
        %v1337 = vld [vmem:[%s1336] sm:$0x1]
        %v1339 = vlaneseq
        %v1340 = vshrl.u32 %v1339, 7
        %v1341 = vsub.s32 0, %v1340
        %v1342 = vrot.slane %v1337, %v1341
        %1344 = vmatprep.subr.mxu0 0.0
        %1345 = vmatpush1.msra.mxu0 0.0
        %1346 = vmatprep.subr.mxu0 0.0
        %1347 = vmatpush1.msra.mxu0 0.0
        %1348 = vmatprep.subr.mxu0 0.0
        %1349 = vmatpush1.msra.mxu0 0.0
        %1350 = vmatprep.subr.mxu0 0.0
        %1351 = vmatpush1.msra.mxu0 0.0
        %1352 = vmatprep.subr.mxu0 0.0
        %1353 = vmatpush1.msra.mxu0 0.0
        %1354 = vmatprep.subr.mxu0 0.0
        %1355 = vmatpush1.msra.mxu0 0.0
        %1356 = vmatprep.subr.mxu0 0.0
        %1357 = vmatpush1.msra.mxu0 0.0
        %1358 = vmatprep.subr.mxu0 0.0
        %1359 = vmatpush1.msra.mxu0 0.0
        %1360 = vmatprep.subr.mxu0 0.0
        %1361 = vmatpush1.msra.mxu0 %v1335
        %1362 = vmatprep.subr.mxu0 0.0
        %1363 = vmatpush1.msra.mxu0 %v1334
        %1364 = vmatprep.subr.mxu0 0.0
        %1365 = vmatpush1.msra.mxu0 %v1333
        %1366 = vmatprep.subr.mxu0 0.0
        %1367 = vmatpush1.msra.mxu0 %v1332
        %1368 = vmatprep.subr.mxu0 0.0
        %1369 = vmatpush1.msra.mxu0 %v1331
        %1370 = vmatprep.subr.mxu0 0.0
        %1371 = vmatpush1.msra.mxu0 %v1330
        %1372 = vmatprep.subr.mxu0 0.0
        %1373 = vmatpush1.msra.mxu0 %v1329
        %1374 = vmatprep.subr.mxu0 0.0
        %1375 = vmatpush1.msra.mxu0 %v1328
        %1376 = vmatprep.subr.mxu0 0.0
        %1377 = vmatpush2.msra.mxu0 0.0
        %1378 = vmatprep.subr.mxu0 0.0
        %1379 = vmatpush2.msra.mxu0 0.0
        %1380 = vmatprep.subr.mxu0 0.0
        %1381 = vmatpush2.msra.mxu0 0.0
        %1382 = vmatprep.subr.mxu0 0.0
        %1383 = vmatpush2.msra.mxu0 0.0
        %1384 = vmatprep.subr.mxu0 0.0
        %1385 = vmatpush2.msra.mxu0 0.0
        %1386 = vmatprep.subr.mxu0 0.0
        %1387 = vmatpush2.msra.mxu0 0.0
        %1388 = vmatprep.subr.mxu0 0.0
        %1389 = vmatpush2.msra.mxu0 0.0
        %1390 = vmatprep.subr.mxu0 0.0
        %1391 = vmatpush2.msra.mxu0 0.0
        %1392 = vmatprep.subr.mxu0 0.0
        %1393 = vmatpush2.msra.mxu0 0.0
        %1394 = vmatprep.subr.mxu0 0.0
        %1395 = vmatpush2.msra.mxu0 0.0
        %1396 = vmatprep.subr.mxu0 0.0
        %1397 = vmatpush2.msra.mxu0 0.0
        %1398 = vmatprep.subr.mxu0 0.0
        %1399 = vmatpush2.msra.mxu0 0.0
        %1400 = vmatprep.subr.mxu0 0.0
        %1401 = vmatpush2.msra.mxu0 0.0
        %1402 = vmatprep.subr.mxu0 0.0
        %1403 = vmatpush2.msra.mxu0 0.0
        %1404 = vmatprep.subr.mxu0 0.0
        %1405 = vmatpush2.msra.mxu0 0.0
        %1406 = vmatprep.subr.mxu0 0.0
        %1407 = vmatpush2.msra.mxu0 0.0
        %1408 = vmatprep.mubr.f32.mxu0 0.0
        %1409 = vmatmul.mubr.f32.gmra.mxu0 %v1142
        %v1410 = vpop.f32.mrf.mxu0
        %v1411 = vadd.f32 %v1342, %v1410
        %v1412 = vpop.f32.mrf.mxu0
        %1413 = vmatprep.mubr.f32.mxu0 0.0
        %1414 = vmatmul.mubr.f32.gmra.mxu0 %v1145
        %v1415 = vpop.f32.mrf.mxu0
        %v1416 = vadd.f32 %v1342, %v1415
        %v1417 = vpop.f32.mrf.mxu0
        %1418 = vmatprep.mubr.f32.mxu0 0.0
        %1419 = vmatmul.mubr.f32.gmra.mxu0 %v1148
        %v1420 = vpop.f32.mrf.mxu0
        %v1421 = vadd.f32 %v1342, %v1420
        %v1422 = vpop.f32.mrf.mxu0
        %1423 = vdwg.mxu0
        %v1424 = vmul.f32 %v1217, 0.25
        %v1425 = vmul.f32 %v1222, 0.25
        %v1426 = vmul.f32 %v1227, 0.25
        %vm1427 = vcmask 130048
        %v1429 = vsel %vm1427, %v1424, 0
        %v1432 = vsel %vm1427, %v1425, 0
        %v1435 = vsel %vm1427, %v1426, 0
        %v1438 = vsel %vm1427, %v1314, 0
        %v1441 = vsel %vm1427, %v1319, 0
        %v1444 = vsel %vm1427, %v1324, 0
        %1446 = vmatprep.subr.mxu0 0.0
        %1447 = vmatpush1.xpose.msra.mxu0 0.0
        %1448 = vmatprep.subr.mxu0 0.0
        %1449 = vmatpush1.xpose.msra.mxu0 0.0
        %1450 = vmatprep.subr.mxu0 0.0
        %1451 = vmatpush1.xpose.msra.mxu0 0.0
        %1452 = vmatprep.subr.mxu0 0.0
        %1453 = vmatpush1.xpose.msra.mxu0 0.0
        %1454 = vmatprep.subr.mxu0 0.0
        %1455 = vmatpush1.xpose.msra.mxu0 0.0
        %1456 = vmatprep.subr.mxu0 0.0
        %1457 = vmatpush1.xpose.msra.mxu0 0.0
        %1458 = vmatprep.subr.mxu0 0.0
        %1459 = vmatpush1.xpose.msra.mxu0 0.0
        %1460 = vmatprep.subr.mxu0 0.0
        %1461 = vmatpush1.xpose.msra.mxu0 0.0
        %1462 = vmatprep.subr.mxu0 0.0
        %1463 = vmatpush1.xpose.msra.mxu0 0.0
        %1464 = vmatprep.subr.mxu0 0.0
        %1465 = vmatpush1.xpose.msra.mxu0 0.0
        %1466 = vmatprep.subr.mxu0 0.0
        %1467 = vmatpush1.xpose.msra.mxu0 0.0
        %1468 = vmatprep.subr.mxu0 0.0
        %1469 = vmatpush1.xpose.msra.mxu0 0.0
        %1470 = vmatprep.subr.mxu0 0.0
        %1471 = vmatpush1.xpose.msra.mxu0 0.0
        %1472 = vmatprep.subr.mxu0 0.0
        %1473 = vmatpush1.xpose.msra.mxu0 %v1444
        %1474 = vmatprep.subr.mxu0 0.0
        %1475 = vmatpush1.xpose.msra.mxu0 %v1441
        %1476 = vmatprep.subr.mxu0 0.0
        %1477 = vmatpush1.xpose.msra.mxu0 %v1438
        %1478 = vmatprep.subr.mxu0 0.0
        %1479 = vmatpush2.xpose.msra.mxu0 0.0
        %1480 = vmatprep.subr.mxu0 0.0
        %1481 = vmatpush2.xpose.msra.mxu0 0.0
        %1482 = vmatprep.subr.mxu0 0.0
        %1483 = vmatpush2.xpose.msra.mxu0 0.0
        %1484 = vmatprep.subr.mxu0 0.0
        %1485 = vmatpush2.xpose.msra.mxu0 0.0
        %1486 = vmatprep.subr.mxu0 0.0
        %1487 = vmatpush2.xpose.msra.mxu0 0.0
        %1488 = vmatprep.subr.mxu0 0.0
        %1489 = vmatpush2.xpose.msra.mxu0 0.0
        %1490 = vmatprep.subr.mxu0 0.0
        %1491 = vmatpush2.xpose.msra.mxu0 0.0
        %1492 = vmatprep.subr.mxu0 0.0
        %1493 = vmatpush2.xpose.msra.mxu0 0.0
        %1494 = vmatprep.subr.mxu0 0.0
        %1495 = vmatpush2.xpose.msra.mxu0 0.0
        %1496 = vmatprep.subr.mxu0 0.0
        %1497 = vmatpush2.xpose.msra.mxu0 0.0
        %1498 = vmatprep.subr.mxu0 0.0
        %1499 = vmatpush2.xpose.msra.mxu0 0.0
        %1500 = vmatprep.subr.mxu0 0.0
        %1501 = vmatpush2.xpose.msra.mxu0 0.0
        %1502 = vmatprep.subr.mxu0 0.0
        %1503 = vmatpush2.xpose.msra.mxu0 0.0
        %1504 = vmatprep.subr.mxu0 0.0
        %1505 = vmatpush2.xpose.msra.mxu0 0.0
        %1506 = vmatprep.subr.mxu0 0.0
        %1507 = vmatpush2.xpose.msra.mxu0 0.0
        %1508 = vmatprep.subr.mxu0 0.0
        %1509 = vmatpush2.xpose.msra.mxu0 0.0
        %1510 = vmatprep.mubr.f32.mxu0 0.0
        %1511 = vmatmul.mubr.f32.gmra.mxu0 %v1429
        %v1512 = vpop.f32.mrf.mxu0
        %v1513 = vadd.f32 0.0, %v1512
        %v1514 = vpop.f32.mrf.mxu0
        %1515 = vmatprep.mubr.f32.mxu0 0.0
        %1516 = vmatmul.mubr.f32.gmra.mxu0 %v1432
        %v1517 = vpop.f32.mrf.mxu0
        %v1518 = vadd.f32 0.0, %v1517
        %v1519 = vpop.f32.mrf.mxu0
        %1520 = vmatprep.mubr.f32.mxu0 0.0
        %1521 = vmatmul.mubr.f32.gmra.mxu0 %v1435
        %v1522 = vpop.f32.mrf.mxu0
        %v1523 = vadd.f32 0.0, %v1522
        %v1524 = vpop.f32.mrf.mxu0
        %1525 = vdwg.mxu0
        %vm1526 = vcmask 138240
        %v1527 = vsel %vm1526, %v1513, -inf
        %1528 = vmax.xlane.f32.xlu0 %v1527
        %v1529 = vpop.xlane.xlu0 %1528
        %v1530 = vsel %vm1526, %v1518, -inf
        %1531 = vmax.xlane.f32.xlu0 %v1530
        %v1532 = vpop.xlane.xlu0 %1531
        %vm1533 = vcmask 131072
        %v1534 = vsel %vm1533, %v1523, -inf
        %1535 = vmax.xlane.f32.xlu0 %v1534
        %v1536 = vpop.xlane.xlu0 %1535
        %v1537 = vsub.f32 %v1513, %v1529
        %v1538 = vsub.f32 %v1518, %v1532
        %v1539 = vsub.f32 %v1523, %v1536
        %v1540 = vmul.f32 %v1537, 1.442695
        %v1541 = vpow.pop %v1540
        %v1542 = vmul.f32 %v1538, 1.442695
        %v1543 = vpow.pop %v1542
        %v1544 = vmul.f32 %v1539, 1.442695
        %v1545 = vpow.pop %v1544
        %v1546 = vsel %vm1526, %v1541, 0.0
        %1547 = vadd.xlane.f32.xlu0 %v1546
        %v1548 = vpop.xlane.xlu0 %1547
        %v1549 = vsel %vm1526, %v1543, 0.0
        %1550 = vadd.xlane.f32.xlu0 %v1549
        %v1551 = vpop.xlane.xlu0 %1550
        %v1552 = vsel %vm1533, %v1545, 0.0
        %1553 = vadd.xlane.f32.xlu0 %v1552
        %v1554 = vpop.xlane.xlu0 %1553
        %v1555 = vrcp.pop %v1548
        %v1556 = vrcp.pop %v1551
        %v1557 = vrcp.pop %v1554
        %v1558 = vmul.f32 %v1541, %v1555
        %v1559 = vmul.f32 %v1543, %v1556
        %v1560 = vmul.f32 %v1545, %v1557
        %v1562 = vsel %vm1526, %v1558, 0
        %v1565 = vsel %vm1526, %v1559, 0
        %v1568 = vsel %vm1526, %v1560, 0
        %vm1570 = vcmask 1040384
        %v1572 = vsel %vm1570, %v1421, 0
        %1574 = vmatprep.subr.mxu0 0.0
        %1575 = vmatpush1.msra.mxu0 0.0
        %1576 = vmatprep.subr.mxu0 0.0
        %1577 = vmatpush1.msra.mxu0 0.0
        %1578 = vmatprep.subr.mxu0 0.0
        %1579 = vmatpush1.msra.mxu0 0.0
        %1580 = vmatprep.subr.mxu0 0.0
        %1581 = vmatpush1.msra.mxu0 0.0
        %1582 = vmatprep.subr.mxu0 0.0
        %1583 = vmatpush1.msra.mxu0 0.0
        %1584 = vmatprep.subr.mxu0 0.0
        %1585 = vmatpush1.msra.mxu0 0.0
        %1586 = vmatprep.subr.mxu0 0.0
        %1587 = vmatpush1.msra.mxu0 0.0
        %1588 = vmatprep.subr.mxu0 0.0
        %1589 = vmatpush1.msra.mxu0 0.0
        %1590 = vmatprep.subr.mxu0 0.0
        %1591 = vmatpush1.msra.mxu0 0.0
        %1592 = vmatprep.subr.mxu0 0.0
        %1593 = vmatpush1.msra.mxu0 0.0
        %1594 = vmatprep.subr.mxu0 0.0
        %1595 = vmatpush1.msra.mxu0 0.0
        %1596 = vmatprep.subr.mxu0 0.0
        %1597 = vmatpush1.msra.mxu0 0.0
        %1598 = vmatprep.subr.mxu0 0.0
        %1599 = vmatpush1.msra.mxu0 0.0
        %1600 = vmatprep.subr.mxu0 0.0
        %1601 = vmatpush1.msra.mxu0 %v1572
        %1602 = vmatprep.subr.mxu0 0.0
        %1603 = vmatpush1.msra.mxu0 %v1416
        %1604 = vmatprep.subr.mxu0 0.0
        %1605 = vmatpush1.msra.mxu0 %v1411
        %1606 = vmatprep.subr.mxu0 0.0
        %1607 = vmatpush2.msra.mxu0 0.0
        %1608 = vmatprep.subr.mxu0 0.0
        %1609 = vmatpush2.msra.mxu0 0.0
        %1610 = vmatprep.subr.mxu0 0.0
        %1611 = vmatpush2.msra.mxu0 0.0
        %1612 = vmatprep.subr.mxu0 0.0
        %1613 = vmatpush2.msra.mxu0 0.0
        %1614 = vmatprep.subr.mxu0 0.0
        %1615 = vmatpush2.msra.mxu0 0.0
        %1616 = vmatprep.subr.mxu0 0.0
        %1617 = vmatpush2.msra.mxu0 0.0
        %1618 = vmatprep.subr.mxu0 0.0
        %1619 = vmatpush2.msra.mxu0 0.0
        %1620 = vmatprep.subr.mxu0 0.0
        %1621 = vmatpush2.msra.mxu0 0.0
        %1622 = vmatprep.subr.mxu0 0.0
        %1623 = vmatpush2.msra.mxu0 0.0
        %1624 = vmatprep.subr.mxu0 0.0
        %1625 = vmatpush2.msra.mxu0 0.0
        %1626 = vmatprep.subr.mxu0 0.0
        %1627 = vmatpush2.msra.mxu0 0.0
        %1628 = vmatprep.subr.mxu0 0.0
        %1629 = vmatpush2.msra.mxu0 0.0
        %1630 = vmatprep.subr.mxu0 0.0
        %1631 = vmatpush2.msra.mxu0 0.0
        %1632 = vmatprep.subr.mxu0 0.0
        %1633 = vmatpush2.msra.mxu0 0.0
        %1634 = vmatprep.subr.mxu0 0.0
        %1635 = vmatpush2.msra.mxu0 0.0
        %1636 = vmatprep.subr.mxu0 0.0
        %1637 = vmatpush2.msra.mxu0 0.0
        %1638 = vmatprep.mubr.f32.mxu0 0.0
        %1639 = vmatmul.mubr.f32.gmra.mxu0 %v1562
        %v1640 = vpop.f32.mrf.mxu0
        %v1641 = vadd.f32 0.0, %v1640
        %v1642 = vpop.f32.mrf.mxu0
        %1643 = vmatprep.mubr.f32.mxu0 0.0
        %1644 = vmatmul.mubr.f32.gmra.mxu0 %v1565
        %v1645 = vpop.f32.mrf.mxu0
        %v1646 = vadd.f32 0.0, %v1645
        %v1647 = vpop.f32.mrf.mxu0
        %1648 = vmatprep.mubr.f32.mxu0 0.0
        %1649 = vmatmul.mubr.f32.gmra.mxu0 %v1568
        %v1650 = vpop.f32.mrf.mxu0
        %v1651 = vadd.f32 0.0, %v1650
        %v1652 = vpop.f32.mrf.mxu0
        %1653 = vdwg.mxu0
        %v1654 = vld [vmem:[%s837] sm:$0xff]
        %v1655 = vld [vmem:[%s837 + $0x8] sm:$0xff]
        %v1657 = vsel %vm1427, %v1641, 0
        %v1660 = vsel %vm1427, %v1646, 0
        %v1663 = vsel %vm1427, %v1651, 0
        %1665 = vmatprep.subr.mxu0 0.0
        %1666 = vmatpush1.msra.mxu0 0.0
        %1667 = vmatprep.subr.mxu0 0.0
        %1668 = vmatpush1.msra.mxu0 0.0
        %1669 = vmatprep.subr.mxu0 0.0
        %1670 = vmatpush1.msra.mxu0 0.0
        %1671 = vmatprep.subr.mxu0 0.0
        %1672 = vmatpush1.msra.mxu0 0.0
        %1673 = vmatprep.subr.mxu0 0.0
        %1674 = vmatpush1.msra.mxu0 0.0
        %1675 = vmatprep.subr.mxu0 0.0
        %1676 = vmatpush1.msra.mxu0 0.0
        %1677 = vmatprep.subr.mxu0 0.0
        %1678 = vmatpush1.msra.mxu0 0.0
        %1679 = vmatprep.subr.mxu0 0.0
        %1680 = vmatpush1.msra.mxu0 0.0
        %1681 = vmatprep.subr.mxu0 0.0
        %1682 = vmatpush1.msra.mxu0 0.0
        %1683 = vmatprep.subr.mxu0 0.0
        %1684 = vmatpush1.msra.mxu0 0.0
        %1685 = vmatprep.subr.mxu0 0.0
        %1686 = vmatpush1.msra.mxu0 0.0
        %1687 = vmatprep.subr.mxu0 0.0
        %1688 = vmatpush1.msra.mxu0 0.0
        %1689 = vmatprep.subr.mxu0 0.0
        %1690 = vmatpush1.msra.mxu0 0.0
        %1691 = vmatprep.subr.mxu0 0.0
        %1692 = vmatpush1.msra.mxu0 0.0
        %1693 = vmatprep.subr.mxu0 0.0
        %1694 = vmatpush1.msra.mxu0 %v1655
        %1695 = vmatprep.subr.mxu0 0.0
        %1696 = vmatpush1.msra.mxu0 %v1654
        %1697 = vmatprep.subr.mxu0 0.0
        %1698 = vmatpush2.msra.mxu0 0.0
        %1699 = vmatprep.subr.mxu0 0.0
        %1700 = vmatpush2.msra.mxu0 0.0
        %1701 = vmatprep.subr.mxu0 0.0
        %1702 = vmatpush2.msra.mxu0 0.0
        %1703 = vmatprep.subr.mxu0 0.0
        %1704 = vmatpush2.msra.mxu0 0.0
        %1705 = vmatprep.subr.mxu0 0.0
        %1706 = vmatpush2.msra.mxu0 0.0
        %1707 = vmatprep.subr.mxu0 0.0
        %1708 = vmatpush2.msra.mxu0 0.0
        %1709 = vmatprep.subr.mxu0 0.0
        %1710 = vmatpush2.msra.mxu0 0.0
        %1711 = vmatprep.subr.mxu0 0.0
        %1712 = vmatpush2.msra.mxu0 0.0
        %1713 = vmatprep.subr.mxu0 0.0
        %1714 = vmatpush2.msra.mxu0 0.0
        %1715 = vmatprep.subr.mxu0 0.0
        %1716 = vmatpush2.msra.mxu0 0.0
        %1717 = vmatprep.subr.mxu0 0.0
        %1718 = vmatpush2.msra.mxu0 0.0
        %1719 = vmatprep.subr.mxu0 0.0
        %1720 = vmatpush2.msra.mxu0 0.0
        %1721 = vmatprep.subr.mxu0 0.0
        %1722 = vmatpush2.msra.mxu0 0.0
        %1723 = vmatprep.subr.mxu0 0.0
        %1724 = vmatpush2.msra.mxu0 0.0
        %1725 = vmatprep.subr.mxu0 0.0
        %1726 = vmatpush2.msra.mxu0 0.0
        %1727 = vmatprep.subr.mxu0 0.0
        %1728 = vmatpush2.msra.mxu0 0.0
        %1729 = vmatprep.mubr.f32.mxu0 0.0
        %1730 = vmatmul.mubr.f32.gmra.mxu0 %v1657
        %v1731 = vpop.f32.mrf.mxu0
        %v1732 = vadd.f32 0.0, %v1731
        %v1733 = vpop.f32.mrf.mxu0
        %1734 = vmatprep.mubr.f32.mxu0 0.0
        %1735 = vmatmul.mubr.f32.gmra.mxu0 %v1660
        %v1736 = vpop.f32.mrf.mxu0
        %v1737 = vadd.f32 0.0, %v1736
        %v1738 = vpop.f32.mrf.mxu0
        %1739 = vmatprep.mubr.f32.mxu0 0.0
        %1740 = vmatmul.mubr.f32.gmra.mxu0 %v1663
        %v1741 = vpop.f32.mrf.mxu0
        %v1742 = vadd.f32 0.0, %v1741
        %v1743 = vpop.f32.mrf.mxu0
        %1744 = vdwg.mxu0
        %v1745 = vadd.f32 %v1123, %v1732
        %v1746 = vadd.f32 %v1124, %v1737
        %v1747 = vadd.f32 %v1125, %v1742
        %s1748 = scalar_lea.vmem %s828, 64
        %v1749 = vld [vmem:[%s1748] sm:$0xff]
        %v1750 = vld [vmem:[%s1748 + $0x8] sm:$0xff]
        %v1751 = vld [vmem:[%s1748 + $0x10] sm:$0xff]
        %v1752 = vld [vmem:[%s1748 + $0x18] sm:$0xff]
        %v1753 = vld [vmem:[%s1748 + $0x20] sm:$0xff]
        %v1754 = vld [vmem:[%s1748 + $0x28] sm:$0xff]
        %v1755 = vld [vmem:[%s1748 + $0x30] sm:$0xff]
        %v1756 = vld [vmem:[%s1748 + $0x38] sm:$0xff]
        %s1757 = scalar_lea.vmem %s832, 1
        %v1758 = vld [vmem:[%s1757] sm:$0x1]
        %v1760 = vlaneseq
        %v1761 = vshrl.u32 %v1760, 7
        %v1762 = vsub.s32 0, %v1761
        %v1763 = vrot.slane %v1758, %v1762
        %1765 = vmatprep.subr.mxu0 0.0
        %1766 = vmatpush1.msra.mxu0 0.0
        %1767 = vmatprep.subr.mxu0 0.0
        %1768 = vmatpush1.msra.mxu0 0.0
        %1769 = vmatprep.subr.mxu0 0.0
        %1770 = vmatpush1.msra.mxu0 0.0
        %1771 = vmatprep.subr.mxu0 0.0
        %1772 = vmatpush1.msra.mxu0 0.0
        %1773 = vmatprep.subr.mxu0 0.0
        %1774 = vmatpush1.msra.mxu0 0.0
        %1775 = vmatprep.subr.mxu0 0.0
        %1776 = vmatpush1.msra.mxu0 0.0
        %1777 = vmatprep.subr.mxu0 0.0
        %1778 = vmatpush1.msra.mxu0 0.0
        %1779 = vmatprep.subr.mxu0 0.0
        %1780 = vmatpush1.msra.mxu0 0.0
        %1781 = vmatprep.subr.mxu0 0.0
        %1782 = vmatpush1.msra.mxu0 %v1756
        %1783 = vmatprep.subr.mxu0 0.0
        %1784 = vmatpush1.msra.mxu0 %v1755
        %1785 = vmatprep.subr.mxu0 0.0
        %1786 = vmatpush1.msra.mxu0 %v1754
        %1787 = vmatprep.subr.mxu0 0.0
        %1788 = vmatpush1.msra.mxu0 %v1753
        %1789 = vmatprep.subr.mxu0 0.0
        %1790 = vmatpush1.msra.mxu0 %v1752
        %1791 = vmatprep.subr.mxu0 0.0
        %1792 = vmatpush1.msra.mxu0 %v1751
        %1793 = vmatprep.subr.mxu0 0.0
        %1794 = vmatpush1.msra.mxu0 %v1750
        %1795 = vmatprep.subr.mxu0 0.0
        %1796 = vmatpush1.msra.mxu0 %v1749
        %1797 = vmatprep.subr.mxu0 0.0
        %1798 = vmatpush2.msra.mxu0 0.0
        %1799 = vmatprep.subr.mxu0 0.0
        %1800 = vmatpush2.msra.mxu0 0.0
        %1801 = vmatprep.subr.mxu0 0.0
        %1802 = vmatpush2.msra.mxu0 0.0
        %1803 = vmatprep.subr.mxu0 0.0
        %1804 = vmatpush2.msra.mxu0 0.0
        %1805 = vmatprep.subr.mxu0 0.0
        %1806 = vmatpush2.msra.mxu0 0.0
        %1807 = vmatprep.subr.mxu0 0.0
        %1808 = vmatpush2.msra.mxu0 0.0
        %1809 = vmatprep.subr.mxu0 0.0
        %1810 = vmatpush2.msra.mxu0 0.0
        %1811 = vmatprep.subr.mxu0 0.0
        %1812 = vmatpush2.msra.mxu0 0.0
        %1813 = vmatprep.subr.mxu0 0.0
        %1814 = vmatpush2.msra.mxu0 0.0
        %1815 = vmatprep.subr.mxu0 0.0
        %1816 = vmatpush2.msra.mxu0 0.0
        %1817 = vmatprep.subr.mxu0 0.0
        %1818 = vmatpush2.msra.mxu0 0.0
        %1819 = vmatprep.subr.mxu0 0.0
        %1820 = vmatpush2.msra.mxu0 0.0
        %1821 = vmatprep.subr.mxu0 0.0
        %1822 = vmatpush2.msra.mxu0 0.0
        %1823 = vmatprep.subr.mxu0 0.0
        %1824 = vmatpush2.msra.mxu0 0.0
        %1825 = vmatprep.subr.mxu0 0.0
        %1826 = vmatpush2.msra.mxu0 0.0
        %1827 = vmatprep.subr.mxu0 0.0
        %1828 = vmatpush2.msra.mxu0 0.0
        %1829 = vmatprep.mubr.f32.mxu0 0.0
        %1830 = vmatmul.mubr.f32.gmra.mxu0 %v1142
        %v1831 = vpop.f32.mrf.mxu0
        %v1832 = vadd.f32 %v1763, %v1831
        %v1833 = vpop.f32.mrf.mxu0
        %1834 = vmatprep.mubr.f32.mxu0 0.0
        %1835 = vmatmul.mubr.f32.gmra.mxu0 %v1145
        %v1836 = vpop.f32.mrf.mxu0
        %v1837 = vadd.f32 %v1763, %v1836
        %v1838 = vpop.f32.mrf.mxu0
        %1839 = vmatprep.mubr.f32.mxu0 0.0
        %1840 = vmatmul.mubr.f32.gmra.mxu0 %v1148
        %v1841 = vpop.f32.mrf.mxu0
        %v1842 = vadd.f32 %v1763, %v1841
        %v1843 = vpop.f32.mrf.mxu0
        %1844 = vdwg.mxu0
        %s1845 = scalar_lea.vmem %s828, 320
        %v1846 = vld [vmem:[%s1845] sm:$0xff]
        %v1847 = vld [vmem:[%s1845 + $0x8] sm:$0xff]
        %v1848 = vld [vmem:[%s1845 + $0x10] sm:$0xff]
        %v1849 = vld [vmem:[%s1845 + $0x18] sm:$0xff]
        %v1850 = vld [vmem:[%s1845 + $0x20] sm:$0xff]
        %v1851 = vld [vmem:[%s1845 + $0x28] sm:$0xff]
        %v1852 = vld [vmem:[%s1845 + $0x30] sm:$0xff]
        %v1853 = vld [vmem:[%s1845 + $0x38] sm:$0xff]
        %s1854 = scalar_lea.vmem %s832, 5
        %v1855 = vld [vmem:[%s1854] sm:$0x1]
        %v1857 = vlaneseq
        %v1858 = vshrl.u32 %v1857, 7
        %v1859 = vsub.s32 0, %v1858
        %v1860 = vrot.slane %v1855, %v1859
        %1862 = vmatprep.subr.mxu0 0.0
        %1863 = vmatpush1.msra.mxu0 0.0
        %1864 = vmatprep.subr.mxu0 0.0
        %1865 = vmatpush1.msra.mxu0 0.0
        %1866 = vmatprep.subr.mxu0 0.0
        %1867 = vmatpush1.msra.mxu0 0.0
        %1868 = vmatprep.subr.mxu0 0.0
        %1869 = vmatpush1.msra.mxu0 0.0
        %1870 = vmatprep.subr.mxu0 0.0
        %1871 = vmatpush1.msra.mxu0 0.0
        %1872 = vmatprep.subr.mxu0 0.0
        %1873 = vmatpush1.msra.mxu0 0.0
        %1874 = vmatprep.subr.mxu0 0.0
        %1875 = vmatpush1.msra.mxu0 0.0
        %1876 = vmatprep.subr.mxu0 0.0
        %1877 = vmatpush1.msra.mxu0 0.0
        %1878 = vmatprep.subr.mxu0 0.0
        %1879 = vmatpush1.msra.mxu0 %v1853
        %1880 = vmatprep.subr.mxu0 0.0
        %1881 = vmatpush1.msra.mxu0 %v1852
        %1882 = vmatprep.subr.mxu0 0.0
        %1883 = vmatpush1.msra.mxu0 %v1851
        %1884 = vmatprep.subr.mxu0 0.0
        %1885 = vmatpush1.msra.mxu0 %v1850
        %1886 = vmatprep.subr.mxu0 0.0
        %1887 = vmatpush1.msra.mxu0 %v1849
        %1888 = vmatprep.subr.mxu0 0.0
        %1889 = vmatpush1.msra.mxu0 %v1848
        %1890 = vmatprep.subr.mxu0 0.0
        %1891 = vmatpush1.msra.mxu0 %v1847
        %1892 = vmatprep.subr.mxu0 0.0
        %1893 = vmatpush1.msra.mxu0 %v1846
        %1894 = vmatprep.subr.mxu0 0.0
        %1895 = vmatpush2.msra.mxu0 0.0
        %1896 = vmatprep.subr.mxu0 0.0
        %1897 = vmatpush2.msra.mxu0 0.0
        %1898 = vmatprep.subr.mxu0 0.0
        %1899 = vmatpush2.msra.mxu0 0.0
        %1900 = vmatprep.subr.mxu0 0.0
        %1901 = vmatpush2.msra.mxu0 0.0
        %1902 = vmatprep.subr.mxu0 0.0
        %1903 = vmatpush2.msra.mxu0 0.0
        %1904 = vmatprep.subr.mxu0 0.0
        %1905 = vmatpush2.msra.mxu0 0.0
        %1906 = vmatprep.subr.mxu0 0.0
        %1907 = vmatpush2.msra.mxu0 0.0
        %1908 = vmatprep.subr.mxu0 0.0
        %1909 = vmatpush2.msra.mxu0 0.0
        %1910 = vmatprep.subr.mxu0 0.0
        %1911 = vmatpush2.msra.mxu0 0.0
        %1912 = vmatprep.subr.mxu0 0.0
        %1913 = vmatpush2.msra.mxu0 0.0
        %1914 = vmatprep.subr.mxu0 0.0
        %1915 = vmatpush2.msra.mxu0 0.0
        %1916 = vmatprep.subr.mxu0 0.0
        %1917 = vmatpush2.msra.mxu0 0.0
        %1918 = vmatprep.subr.mxu0 0.0
        %1919 = vmatpush2.msra.mxu0 0.0
        %1920 = vmatprep.subr.mxu0 0.0
        %1921 = vmatpush2.msra.mxu0 0.0
        %1922 = vmatprep.subr.mxu0 0.0
        %1923 = vmatpush2.msra.mxu0 0.0
        %1924 = vmatprep.subr.mxu0 0.0
        %1925 = vmatpush2.msra.mxu0 0.0
        %1926 = vmatprep.mubr.f32.mxu0 0.0
        %1927 = vmatmul.mubr.f32.gmra.mxu0 %v1142
        %v1928 = vpop.f32.mrf.mxu0
        %v1929 = vadd.f32 %v1860, %v1928
        %v1930 = vpop.f32.mrf.mxu0
        %1931 = vmatprep.mubr.f32.mxu0 0.0
        %1932 = vmatmul.mubr.f32.gmra.mxu0 %v1145
        %v1933 = vpop.f32.mrf.mxu0
        %v1934 = vadd.f32 %v1860, %v1933
        %v1935 = vpop.f32.mrf.mxu0
        %1936 = vmatprep.mubr.f32.mxu0 0.0
        %1937 = vmatmul.mubr.f32.gmra.mxu0 %v1148
        %v1938 = vpop.f32.mrf.mxu0
        %v1939 = vadd.f32 %v1860, %v1938
        %v1940 = vpop.f32.mrf.mxu0
        %1941 = vdwg.mxu0
        %s1942 = scalar_lea.vmem %s828, 576
        %v1943 = vld [vmem:[%s1942] sm:$0xff]
        %v1944 = vld [vmem:[%s1942 + $0x8] sm:$0xff]
        %v1945 = vld [vmem:[%s1942 + $0x10] sm:$0xff]
        %v1946 = vld [vmem:[%s1942 + $0x18] sm:$0xff]
        %v1947 = vld [vmem:[%s1942 + $0x20] sm:$0xff]
        %v1948 = vld [vmem:[%s1942 + $0x28] sm:$0xff]
        %v1949 = vld [vmem:[%s1942 + $0x30] sm:$0xff]
        %v1950 = vld [vmem:[%s1942 + $0x38] sm:$0xff]
        %s1951 = scalar_lea.vmem %s832, 9
        %v1952 = vld [vmem:[%s1951] sm:$0x1]
        %v1954 = vlaneseq
        %v1955 = vshrl.u32 %v1954, 7
        %v1956 = vsub.s32 0, %v1955
        %v1957 = vrot.slane %v1952, %v1956
        %1959 = vmatprep.subr.mxu0 0.0
        %1960 = vmatpush1.msra.mxu0 0.0
        %1961 = vmatprep.subr.mxu0 0.0
        %1962 = vmatpush1.msra.mxu0 0.0
        %1963 = vmatprep.subr.mxu0 0.0
        %1964 = vmatpush1.msra.mxu0 0.0
        %1965 = vmatprep.subr.mxu0 0.0
        %1966 = vmatpush1.msra.mxu0 0.0
        %1967 = vmatprep.subr.mxu0 0.0
        %1968 = vmatpush1.msra.mxu0 0.0
        %1969 = vmatprep.subr.mxu0 0.0
        %1970 = vmatpush1.msra.mxu0 0.0
        %1971 = vmatprep.subr.mxu0 0.0
        %1972 = vmatpush1.msra.mxu0 0.0
        %1973 = vmatprep.subr.mxu0 0.0
        %1974 = vmatpush1.msra.mxu0 0.0
        %1975 = vmatprep.subr.mxu0 0.0
        %1976 = vmatpush1.msra.mxu0 %v1950
        %1977 = vmatprep.subr.mxu0 0.0
        %1978 = vmatpush1.msra.mxu0 %v1949
        %1979 = vmatprep.subr.mxu0 0.0
        %1980 = vmatpush1.msra.mxu0 %v1948
        %1981 = vmatprep.subr.mxu0 0.0
        %1982 = vmatpush1.msra.mxu0 %v1947
        %1983 = vmatprep.subr.mxu0 0.0
        %1984 = vmatpush1.msra.mxu0 %v1946
        %1985 = vmatprep.subr.mxu0 0.0
        %1986 = vmatpush1.msra.mxu0 %v1945
        %1987 = vmatprep.subr.mxu0 0.0
        %1988 = vmatpush1.msra.mxu0 %v1944
        %1989 = vmatprep.subr.mxu0 0.0
        %1990 = vmatpush1.msra.mxu0 %v1943
        %1991 = vmatprep.subr.mxu0 0.0
        %1992 = vmatpush2.msra.mxu0 0.0
        %1993 = vmatprep.subr.mxu0 0.0
        %1994 = vmatpush2.msra.mxu0 0.0
        %1995 = vmatprep.subr.mxu0 0.0
        %1996 = vmatpush2.msra.mxu0 0.0
        %1997 = vmatprep.subr.mxu0 0.0
        %1998 = vmatpush2.msra.mxu0 0.0
        %1999 = vmatprep.subr.mxu0 0.0
        %2000 = vmatpush2.msra.mxu0 0.0
        %2001 = vmatprep.subr.mxu0 0.0
        %2002 = vmatpush2.msra.mxu0 0.0
        %2003 = vmatprep.subr.mxu0 0.0
        %2004 = vmatpush2.msra.mxu0 0.0
        %2005 = vmatprep.subr.mxu0 0.0
        %2006 = vmatpush2.msra.mxu0 0.0
        %2007 = vmatprep.subr.mxu0 0.0
        %2008 = vmatpush2.msra.mxu0 0.0
        %2009 = vmatprep.subr.mxu0 0.0
        %2010 = vmatpush2.msra.mxu0 0.0
        %2011 = vmatprep.subr.mxu0 0.0
        %2012 = vmatpush2.msra.mxu0 0.0
        %2013 = vmatprep.subr.mxu0 0.0
        %2014 = vmatpush2.msra.mxu0 0.0
        %2015 = vmatprep.subr.mxu0 0.0
        %2016 = vmatpush2.msra.mxu0 0.0
        %2017 = vmatprep.subr.mxu0 0.0
        %2018 = vmatpush2.msra.mxu0 0.0
        %2019 = vmatprep.subr.mxu0 0.0
        %2020 = vmatpush2.msra.mxu0 0.0
        %2021 = vmatprep.subr.mxu0 0.0
        %2022 = vmatpush2.msra.mxu0 0.0
        %2023 = vmatprep.mubr.f32.mxu0 0.0
        %2024 = vmatmul.mubr.f32.gmra.mxu0 %v1142
        %v2025 = vpop.f32.mrf.mxu0
        %v2026 = vadd.f32 %v1957, %v2025
        %v2027 = vpop.f32.mrf.mxu0
        %2028 = vmatprep.mubr.f32.mxu0 0.0
        %2029 = vmatmul.mubr.f32.gmra.mxu0 %v1145
        %v2030 = vpop.f32.mrf.mxu0
        %v2031 = vadd.f32 %v1957, %v2030
        %v2032 = vpop.f32.mrf.mxu0
        %2033 = vmatprep.mubr.f32.mxu0 0.0
        %2034 = vmatmul.mubr.f32.gmra.mxu0 %v1148
        %v2035 = vpop.f32.mrf.mxu0
        %v2036 = vadd.f32 %v1957, %v2035
        %v2037 = vpop.f32.mrf.mxu0
        %2038 = vdwg.mxu0
        %v2039 = vmul.f32 %v1832, 0.25
        %v2040 = vmul.f32 %v1837, 0.25
        %v2041 = vmul.f32 %v1842, 0.25
        %v2043 = vsel %vm1427, %v2039, 0
        %v2046 = vsel %vm1427, %v2040, 0
        %v2049 = vsel %vm1427, %v2041, 0
        %v2052 = vsel %vm1427, %v1929, 0
        %v2055 = vsel %vm1427, %v1934, 0
        %v2058 = vsel %vm1427, %v1939, 0
        %2060 = vmatprep.subr.mxu0 0.0
        %2061 = vmatpush1.xpose.msra.mxu0 0.0
        %2062 = vmatprep.subr.mxu0 0.0
        %2063 = vmatpush1.xpose.msra.mxu0 0.0
        %2064 = vmatprep.subr.mxu0 0.0
        %2065 = vmatpush1.xpose.msra.mxu0 0.0
        %2066 = vmatprep.subr.mxu0 0.0
        %2067 = vmatpush1.xpose.msra.mxu0 0.0
        %2068 = vmatprep.subr.mxu0 0.0
        %2069 = vmatpush1.xpose.msra.mxu0 0.0
        %2070 = vmatprep.subr.mxu0 0.0
        %2071 = vmatpush1.xpose.msra.mxu0 0.0
        %2072 = vmatprep.subr.mxu0 0.0
        %2073 = vmatpush1.xpose.msra.mxu0 0.0
        %2074 = vmatprep.subr.mxu0 0.0
        %2075 = vmatpush1.xpose.msra.mxu0 0.0
        %2076 = vmatprep.subr.mxu0 0.0
        %2077 = vmatpush1.xpose.msra.mxu0 0.0
        %2078 = vmatprep.subr.mxu0 0.0
        %2079 = vmatpush1.xpose.msra.mxu0 0.0
        %2080 = vmatprep.subr.mxu0 0.0
        %2081 = vmatpush1.xpose.msra.mxu0 0.0
        %2082 = vmatprep.subr.mxu0 0.0
        %2083 = vmatpush1.xpose.msra.mxu0 0.0
        %2084 = vmatprep.subr.mxu0 0.0
        %2085 = vmatpush1.xpose.msra.mxu0 0.0
        %2086 = vmatprep.subr.mxu0 0.0
        %2087 = vmatpush1.xpose.msra.mxu0 %v2058
        %2088 = vmatprep.subr.mxu0 0.0
        %2089 = vmatpush1.xpose.msra.mxu0 %v2055
        %2090 = vmatprep.subr.mxu0 0.0
        %2091 = vmatpush1.xpose.msra.mxu0 %v2052
        %2092 = vmatprep.subr.mxu0 0.0
        %2093 = vmatpush2.xpose.msra.mxu0 0.0
        %2094 = vmatprep.subr.mxu0 0.0
        %2095 = vmatpush2.xpose.msra.mxu0 0.0
        %2096 = vmatprep.subr.mxu0 0.0
        %2097 = vmatpush2.xpose.msra.mxu0 0.0
        %2098 = vmatprep.subr.mxu0 0.0
        %2099 = vmatpush2.xpose.msra.mxu0 0.0
        %2100 = vmatprep.subr.mxu0 0.0
        %2101 = vmatpush2.xpose.msra.mxu0 0.0
        %2102 = vmatprep.subr.mxu0 0.0
        %2103 = vmatpush2.xpose.msra.mxu0 0.0
        %2104 = vmatprep.subr.mxu0 0.0
        %2105 = vmatpush2.xpose.msra.mxu0 0.0
        %2106 = vmatprep.subr.mxu0 0.0
        %2107 = vmatpush2.xpose.msra.mxu0 0.0
        %2108 = vmatprep.subr.mxu0 0.0
        %2109 = vmatpush2.xpose.msra.mxu0 0.0
        %2110 = vmatprep.subr.mxu0 0.0
        %2111 = vmatpush2.xpose.msra.mxu0 0.0
        %2112 = vmatprep.subr.mxu0 0.0
        %2113 = vmatpush2.xpose.msra.mxu0 0.0
        %2114 = vmatprep.subr.mxu0 0.0
        %2115 = vmatpush2.xpose.msra.mxu0 0.0
        %2116 = vmatprep.subr.mxu0 0.0
        %2117 = vmatpush2.xpose.msra.mxu0 0.0
        %2118 = vmatprep.subr.mxu0 0.0
        %2119 = vmatpush2.xpose.msra.mxu0 0.0
        %2120 = vmatprep.subr.mxu0 0.0
        %2121 = vmatpush2.xpose.msra.mxu0 0.0
        %2122 = vmatprep.subr.mxu0 0.0
        %2123 = vmatpush2.xpose.msra.mxu0 0.0
        %2124 = vmatprep.mubr.f32.mxu0 0.0
        %2125 = vmatmul.mubr.f32.gmra.mxu0 %v2043
        %v2126 = vpop.f32.mrf.mxu0
        %v2127 = vadd.f32 0.0, %v2126
        %v2128 = vpop.f32.mrf.mxu0
        %2129 = vmatprep.mubr.f32.mxu0 0.0
        %2130 = vmatmul.mubr.f32.gmra.mxu0 %v2046
        %v2131 = vpop.f32.mrf.mxu0
        %v2132 = vadd.f32 0.0, %v2131
        %v2133 = vpop.f32.mrf.mxu0
        %2134 = vmatprep.mubr.f32.mxu0 0.0
        %2135 = vmatmul.mubr.f32.gmra.mxu0 %v2049
        %v2136 = vpop.f32.mrf.mxu0
        %v2137 = vadd.f32 0.0, %v2136
        %v2138 = vpop.f32.mrf.mxu0
        %2139 = vdwg.mxu0
        %v2140 = vsel %vm1526, %v2127, -inf
        %2141 = vmax.xlane.f32.xlu0 %v2140
        %v2142 = vpop.xlane.xlu0 %2141
        %v2143 = vsel %vm1526, %v2132, -inf
        %2144 = vmax.xlane.f32.xlu0 %v2143
        %v2145 = vpop.xlane.xlu0 %2144
        %v2146 = vsel %vm1533, %v2137, -inf
        %2147 = vmax.xlane.f32.xlu0 %v2146
        %v2148 = vpop.xlane.xlu0 %2147
        %v2149 = vsub.f32 %v2127, %v2142
        %v2150 = vsub.f32 %v2132, %v2145
        %v2151 = vsub.f32 %v2137, %v2148
        %v2152 = vmul.f32 %v2149, 1.442695
        %v2153 = vpow.pop %v2152
        %v2154 = vmul.f32 %v2150, 1.442695
        %v2155 = vpow.pop %v2154
        %v2156 = vmul.f32 %v2151, 1.442695
        %v2157 = vpow.pop %v2156
        %v2158 = vsel %vm1526, %v2153, 0.0
        %2159 = vadd.xlane.f32.xlu0 %v2158
        %v2160 = vpop.xlane.xlu0 %2159
        %v2161 = vsel %vm1526, %v2155, 0.0
        %2162 = vadd.xlane.f32.xlu0 %v2161
        %v2163 = vpop.xlane.xlu0 %2162
        %v2164 = vsel %vm1533, %v2157, 0.0
        %2165 = vadd.xlane.f32.xlu0 %v2164
        %v2166 = vpop.xlane.xlu0 %2165
        %v2167 = vrcp.pop %v2160
        %v2168 = vrcp.pop %v2163
        %v2169 = vrcp.pop %v2166
        %v2170 = vmul.f32 %v2153, %v2167
        %v2171 = vmul.f32 %v2155, %v2168
        %v2172 = vmul.f32 %v2157, %v2169
        %v2174 = vsel %vm1526, %v2170, 0
        %v2177 = vsel %vm1526, %v2171, 0
        %v2180 = vsel %vm1526, %v2172, 0
        %v2183 = vsel %vm1570, %v2036, 0
        %2185 = vmatprep.subr.mxu0 0.0
        %2186 = vmatpush1.msra.mxu0 0.0
        %2187 = vmatprep.subr.mxu0 0.0
        %2188 = vmatpush1.msra.mxu0 0.0
        %2189 = vmatprep.subr.mxu0 0.0
        %2190 = vmatpush1.msra.mxu0 0.0
        %2191 = vmatprep.subr.mxu0 0.0
        %2192 = vmatpush1.msra.mxu0 0.0
        %2193 = vmatprep.subr.mxu0 0.0
        %2194 = vmatpush1.msra.mxu0 0.0
        %2195 = vmatprep.subr.mxu0 0.0
        %2196 = vmatpush1.msra.mxu0 0.0
        %2197 = vmatprep.subr.mxu0 0.0
        %2198 = vmatpush1.msra.mxu0 0.0
        %2199 = vmatprep.subr.mxu0 0.0
        %2200 = vmatpush1.msra.mxu0 0.0
        %2201 = vmatprep.subr.mxu0 0.0
        %2202 = vmatpush1.msra.mxu0 0.0
        %2203 = vmatprep.subr.mxu0 0.0
        %2204 = vmatpush1.msra.mxu0 0.0
        %2205 = vmatprep.subr.mxu0 0.0
        %2206 = vmatpush1.msra.mxu0 0.0
        %2207 = vmatprep.subr.mxu0 0.0
        %2208 = vmatpush1.msra.mxu0 0.0
        %2209 = vmatprep.subr.mxu0 0.0
        %2210 = vmatpush1.msra.mxu0 0.0
        %2211 = vmatprep.subr.mxu0 0.0
        %2212 = vmatpush1.msra.mxu0 %v2183
        %2213 = vmatprep.subr.mxu0 0.0
        %2214 = vmatpush1.msra.mxu0 %v2031
        %2215 = vmatprep.subr.mxu0 0.0
        %2216 = vmatpush1.msra.mxu0 %v2026
        %2217 = vmatprep.subr.mxu0 0.0
        %2218 = vmatpush2.msra.mxu0 0.0
        %2219 = vmatprep.subr.mxu0 0.0
        %2220 = vmatpush2.msra.mxu0 0.0
        %2221 = vmatprep.subr.mxu0 0.0
        %2222 = vmatpush2.msra.mxu0 0.0
        %2223 = vmatprep.subr.mxu0 0.0
        %2224 = vmatpush2.msra.mxu0 0.0
        %2225 = vmatprep.subr.mxu0 0.0
        %2226 = vmatpush2.msra.mxu0 0.0
        %2227 = vmatprep.subr.mxu0 0.0
        %2228 = vmatpush2.msra.mxu0 0.0
        %2229 = vmatprep.subr.mxu0 0.0
        %2230 = vmatpush2.msra.mxu0 0.0
        %2231 = vmatprep.subr.mxu0 0.0
        %2232 = vmatpush2.msra.mxu0 0.0
        %2233 = vmatprep.subr.mxu0 0.0
        %2234 = vmatpush2.msra.mxu0 0.0
        %2235 = vmatprep.subr.mxu0 0.0
        %2236 = vmatpush2.msra.mxu0 0.0
        %2237 = vmatprep.subr.mxu0 0.0
        %2238 = vmatpush2.msra.mxu0 0.0
        %2239 = vmatprep.subr.mxu0 0.0
        %2240 = vmatpush2.msra.mxu0 0.0
        %2241 = vmatprep.subr.mxu0 0.0
        %2242 = vmatpush2.msra.mxu0 0.0
        %2243 = vmatprep.subr.mxu0 0.0
        %2244 = vmatpush2.msra.mxu0 0.0
        %2245 = vmatprep.subr.mxu0 0.0
        %2246 = vmatpush2.msra.mxu0 0.0
        %2247 = vmatprep.subr.mxu0 0.0
        %2248 = vmatpush2.msra.mxu0 0.0
        %2249 = vmatprep.mubr.f32.mxu0 0.0
        %2250 = vmatmul.mubr.f32.gmra.mxu0 %v2174
        %v2251 = vpop.f32.mrf.mxu0
        %v2252 = vadd.f32 0.0, %v2251
        %v2253 = vpop.f32.mrf.mxu0
        %2254 = vmatprep.mubr.f32.mxu0 0.0
        %2255 = vmatmul.mubr.f32.gmra.mxu0 %v2177
        %v2256 = vpop.f32.mrf.mxu0
        %v2257 = vadd.f32 0.0, %v2256
        %v2258 = vpop.f32.mrf.mxu0
        %2259 = vmatprep.mubr.f32.mxu0 0.0
        %2260 = vmatmul.mubr.f32.gmra.mxu0 %v2180
        %v2261 = vpop.f32.mrf.mxu0
        %v2262 = vadd.f32 0.0, %v2261
        %v2263 = vpop.f32.mrf.mxu0
        %2264 = vdwg.mxu0
        %s2265 = scalar_lea.vmem %s837, 16
        %v2266 = vld [vmem:[%s2265] sm:$0xff]
        %v2267 = vld [vmem:[%s2265 + $0x8] sm:$0xff]
        %v2269 = vsel %vm1427, %v2252, 0
        %v2272 = vsel %vm1427, %v2257, 0
        %v2275 = vsel %vm1427, %v2262, 0
        %2277 = vmatprep.subr.mxu0 0.0
        %2278 = vmatpush1.msra.mxu0 0.0
        %2279 = vmatprep.subr.mxu0 0.0
        %2280 = vmatpush1.msra.mxu0 0.0
        %2281 = vmatprep.subr.mxu0 0.0
        %2282 = vmatpush1.msra.mxu0 0.0
        %2283 = vmatprep.subr.mxu0 0.0
        %2284 = vmatpush1.msra.mxu0 0.0
        %2285 = vmatprep.subr.mxu0 0.0
        %2286 = vmatpush1.msra.mxu0 0.0
        %2287 = vmatprep.subr.mxu0 0.0
        %2288 = vmatpush1.msra.mxu0 0.0
        %2289 = vmatprep.subr.mxu0 0.0
        %2290 = vmatpush1.msra.mxu0 0.0
        %2291 = vmatprep.subr.mxu0 0.0
        %2292 = vmatpush1.msra.mxu0 0.0
        %2293 = vmatprep.subr.mxu0 0.0
        %2294 = vmatpush1.msra.mxu0 0.0
        %2295 = vmatprep.subr.mxu0 0.0
        %2296 = vmatpush1.msra.mxu0 0.0
        %2297 = vmatprep.subr.mxu0 0.0
        %2298 = vmatpush1.msra.mxu0 0.0
        %2299 = vmatprep.subr.mxu0 0.0
        %2300 = vmatpush1.msra.mxu0 0.0
        %2301 = vmatprep.subr.mxu0 0.0
        %2302 = vmatpush1.msra.mxu0 0.0
        %2303 = vmatprep.subr.mxu0 0.0
        %2304 = vmatpush1.msra.mxu0 0.0
        %2305 = vmatprep.subr.mxu0 0.0
        %2306 = vmatpush1.msra.mxu0 %v2267
        %2307 = vmatprep.subr.mxu0 0.0
        %2308 = vmatpush1.msra.mxu0 %v2266
        %2309 = vmatprep.subr.mxu0 0.0
        %2310 = vmatpush2.msra.mxu0 0.0
        %2311 = vmatprep.subr.mxu0 0.0
        %2312 = vmatpush2.msra.mxu0 0.0
        %2313 = vmatprep.subr.mxu0 0.0
        %2314 = vmatpush2.msra.mxu0 0.0
        %2315 = vmatprep.subr.mxu0 0.0
        %2316 = vmatpush2.msra.mxu0 0.0
        %2317 = vmatprep.subr.mxu0 0.0
        %2318 = vmatpush2.msra.mxu0 0.0
        %2319 = vmatprep.subr.mxu0 0.0
        %2320 = vmatpush2.msra.mxu0 0.0
        %2321 = vmatprep.subr.mxu0 0.0
        %2322 = vmatpush2.msra.mxu0 0.0
        %2323 = vmatprep.subr.mxu0 0.0
        %2324 = vmatpush2.msra.mxu0 0.0
        %2325 = vmatprep.subr.mxu0 0.0
        %2326 = vmatpush2.msra.mxu0 0.0
        %2327 = vmatprep.subr.mxu0 0.0
        %2328 = vmatpush2.msra.mxu0 0.0
        %2329 = vmatprep.subr.mxu0 0.0
        %2330 = vmatpush2.msra.mxu0 0.0
        %2331 = vmatprep.subr.mxu0 0.0
        %2332 = vmatpush2.msra.mxu0 0.0
        %2333 = vmatprep.subr.mxu0 0.0
        %2334 = vmatpush2.msra.mxu0 0.0
        %2335 = vmatprep.subr.mxu0 0.0
        %2336 = vmatpush2.msra.mxu0 0.0
        %2337 = vmatprep.subr.mxu0 0.0
        %2338 = vmatpush2.msra.mxu0 0.0
        %2339 = vmatprep.subr.mxu0 0.0
        %2340 = vmatpush2.msra.mxu0 0.0
        %2341 = vmatprep.mubr.f32.mxu0 0.0
        %2342 = vmatmul.mubr.f32.gmra.mxu0 %v2269
        %v2343 = vpop.f32.mrf.mxu0
        %v2344 = vadd.f32 0.0, %v2343
        %v2345 = vpop.f32.mrf.mxu0
        %2346 = vmatprep.mubr.f32.mxu0 0.0
        %2347 = vmatmul.mubr.f32.gmra.mxu0 %v2272
        %v2348 = vpop.f32.mrf.mxu0
        %v2349 = vadd.f32 0.0, %v2348
        %v2350 = vpop.f32.mrf.mxu0
        %2351 = vmatprep.mubr.f32.mxu0 0.0
        %2352 = vmatmul.mubr.f32.gmra.mxu0 %v2275
        %v2353 = vpop.f32.mrf.mxu0
        %v2354 = vadd.f32 0.0, %v2353
        %v2355 = vpop.f32.mrf.mxu0
        %2356 = vdwg.mxu0
        %v2357 = vadd.f32 %v1745, %v2344
        %v2358 = vadd.f32 %v1746, %v2349
        %v2359 = vadd.f32 %v1747, %v2354
        %s2360 = scalar_lea.vmem %s828, 128
        %v2361 = vld [vmem:[%s2360] sm:$0xff]
        %v2362 = vld [vmem:[%s2360 + $0x8] sm:$0xff]
        %v2363 = vld [vmem:[%s2360 + $0x10] sm:$0xff]
        %v2364 = vld [vmem:[%s2360 + $0x18] sm:$0xff]
        %v2365 = vld [vmem:[%s2360 + $0x20] sm:$0xff]
        %v2366 = vld [vmem:[%s2360 + $0x28] sm:$0xff]
        %v2367 = vld [vmem:[%s2360 + $0x30] sm:$0xff]
        %v2368 = vld [vmem:[%s2360 + $0x38] sm:$0xff]
        %s2369 = scalar_lea.vmem %s832, 2
        %v2370 = vld [vmem:[%s2369] sm:$0x1]
        %v2372 = vlaneseq
        %v2373 = vshrl.u32 %v2372, 7
        %v2374 = vsub.s32 0, %v2373
        %v2375 = vrot.slane %v2370, %v2374
        %2377 = vmatprep.subr.mxu0 0.0
        %2378 = vmatpush1.msra.mxu0 0.0
        %2379 = vmatprep.subr.mxu0 0.0
        %2380 = vmatpush1.msra.mxu0 0.0
        %2381 = vmatprep.subr.mxu0 0.0
        %2382 = vmatpush1.msra.mxu0 0.0
        %2383 = vmatprep.subr.mxu0 0.0
        %2384 = vmatpush1.msra.mxu0 0.0
        %2385 = vmatprep.subr.mxu0 0.0
        %2386 = vmatpush1.msra.mxu0 0.0
        %2387 = vmatprep.subr.mxu0 0.0
        %2388 = vmatpush1.msra.mxu0 0.0
        %2389 = vmatprep.subr.mxu0 0.0
        %2390 = vmatpush1.msra.mxu0 0.0
        %2391 = vmatprep.subr.mxu0 0.0
        %2392 = vmatpush1.msra.mxu0 0.0
        %2393 = vmatprep.subr.mxu0 0.0
        %2394 = vmatpush1.msra.mxu0 %v2368
        %2395 = vmatprep.subr.mxu0 0.0
        %2396 = vmatpush1.msra.mxu0 %v2367
        %2397 = vmatprep.subr.mxu0 0.0
        %2398 = vmatpush1.msra.mxu0 %v2366
        %2399 = vmatprep.subr.mxu0 0.0
        %2400 = vmatpush1.msra.mxu0 %v2365
        %2401 = vmatprep.subr.mxu0 0.0
        %2402 = vmatpush1.msra.mxu0 %v2364
        %2403 = vmatprep.subr.mxu0 0.0
        %2404 = vmatpush1.msra.mxu0 %v2363
        %2405 = vmatprep.subr.mxu0 0.0
        %2406 = vmatpush1.msra.mxu0 %v2362
        %2407 = vmatprep.subr.mxu0 0.0
        %2408 = vmatpush1.msra.mxu0 %v2361
        %2409 = vmatprep.subr.mxu0 0.0
        %2410 = vmatpush2.msra.mxu0 0.0
        %2411 = vmatprep.subr.mxu0 0.0
        %2412 = vmatpush2.msra.mxu0 0.0
        %2413 = vmatprep.subr.mxu0 0.0
        %2414 = vmatpush2.msra.mxu0 0.0
        %2415 = vmatprep.subr.mxu0 0.0
        %2416 = vmatpush2.msra.mxu0 0.0
        %2417 = vmatprep.subr.mxu0 0.0
        %2418 = vmatpush2.msra.mxu0 0.0
        %2419 = vmatprep.subr.mxu0 0.0
        %2420 = vmatpush2.msra.mxu0 0.0
        %2421 = vmatprep.subr.mxu0 0.0
        %2422 = vmatpush2.msra.mxu0 0.0
        %2423 = vmatprep.subr.mxu0 0.0
        %2424 = vmatpush2.msra.mxu0 0.0
        %2425 = vmatprep.subr.mxu0 0.0
        %2426 = vmatpush2.msra.mxu0 0.0
        %2427 = vmatprep.subr.mxu0 0.0
        %2428 = vmatpush2.msra.mxu0 0.0
        %2429 = vmatprep.subr.mxu0 0.0
        %2430 = vmatpush2.msra.mxu0 0.0
        %2431 = vmatprep.subr.mxu0 0.0
        %2432 = vmatpush2.msra.mxu0 0.0
        %2433 = vmatprep.subr.mxu0 0.0
        %2434 = vmatpush2.msra.mxu0 0.0
        %2435 = vmatprep.subr.mxu0 0.0
        %2436 = vmatpush2.msra.mxu0 0.0
        %2437 = vmatprep.subr.mxu0 0.0
        %2438 = vmatpush2.msra.mxu0 0.0
        %2439 = vmatprep.subr.mxu0 0.0
        %2440 = vmatpush2.msra.mxu0 0.0
        %2441 = vmatprep.mubr.f32.mxu0 0.0
        %2442 = vmatmul.mubr.f32.gmra.mxu0 %v1142
        %v2443 = vpop.f32.mrf.mxu0
        %v2444 = vadd.f32 %v2375, %v2443
        %v2445 = vpop.f32.mrf.mxu0
        %2446 = vmatprep.mubr.f32.mxu0 0.0
        %2447 = vmatmul.mubr.f32.gmra.mxu0 %v1145
        %v2448 = vpop.f32.mrf.mxu0
        %v2449 = vadd.f32 %v2375, %v2448
        %v2450 = vpop.f32.mrf.mxu0
        %2451 = vmatprep.mubr.f32.mxu0 0.0
        %2452 = vmatmul.mubr.f32.gmra.mxu0 %v1148
        %v2453 = vpop.f32.mrf.mxu0
        %v2454 = vadd.f32 %v2375, %v2453
        %v2455 = vpop.f32.mrf.mxu0
        %2456 = vdwg.mxu0
        %s2457 = scalar_lea.vmem %s828, 384
        %v2458 = vld [vmem:[%s2457] sm:$0xff]
        %v2459 = vld [vmem:[%s2457 + $0x8] sm:$0xff]
        %v2460 = vld [vmem:[%s2457 + $0x10] sm:$0xff]
        %v2461 = vld [vmem:[%s2457 + $0x18] sm:$0xff]
        %v2462 = vld [vmem:[%s2457 + $0x20] sm:$0xff]
        %v2463 = vld [vmem:[%s2457 + $0x28] sm:$0xff]
        %v2464 = vld [vmem:[%s2457 + $0x30] sm:$0xff]
        %v2465 = vld [vmem:[%s2457 + $0x38] sm:$0xff]
        %s2466 = scalar_lea.vmem %s832, 6
        %v2467 = vld [vmem:[%s2466] sm:$0x1]
        %v2469 = vlaneseq
        %v2470 = vshrl.u32 %v2469, 7
        %v2471 = vsub.s32 0, %v2470
        %v2472 = vrot.slane %v2467, %v2471
        %2474 = vmatprep.subr.mxu0 0.0
        %2475 = vmatpush1.msra.mxu0 0.0
        %2476 = vmatprep.subr.mxu0 0.0
        %2477 = vmatpush1.msra.mxu0 0.0
        %2478 = vmatprep.subr.mxu0 0.0
        %2479 = vmatpush1.msra.mxu0 0.0
        %2480 = vmatprep.subr.mxu0 0.0
        %2481 = vmatpush1.msra.mxu0 0.0
        %2482 = vmatprep.subr.mxu0 0.0
        %2483 = vmatpush1.msra.mxu0 0.0
        %2484 = vmatprep.subr.mxu0 0.0
        %2485 = vmatpush1.msra.mxu0 0.0
        %2486 = vmatprep.subr.mxu0 0.0
        %2487 = vmatpush1.msra.mxu0 0.0
        %2488 = vmatprep.subr.mxu0 0.0
        %2489 = vmatpush1.msra.mxu0 0.0
        %2490 = vmatprep.subr.mxu0 0.0
        %2491 = vmatpush1.msra.mxu0 %v2465
        %2492 = vmatprep.subr.mxu0 0.0
        %2493 = vmatpush1.msra.mxu0 %v2464
        %2494 = vmatprep.subr.mxu0 0.0
        %2495 = vmatpush1.msra.mxu0 %v2463
        %2496 = vmatprep.subr.mxu0 0.0
        %2497 = vmatpush1.msra.mxu0 %v2462
        %2498 = vmatprep.subr.mxu0 0.0
        %2499 = vmatpush1.msra.mxu0 %v2461
        %2500 = vmatprep.subr.mxu0 0.0
        %2501 = vmatpush1.msra.mxu0 %v2460
        %2502 = vmatprep.subr.mxu0 0.0
        %2503 = vmatpush1.msra.mxu0 %v2459
        %2504 = vmatprep.subr.mxu0 0.0
        %2505 = vmatpush1.msra.mxu0 %v2458
        %2506 = vmatprep.subr.mxu0 0.0
        %2507 = vmatpush2.msra.mxu0 0.0
        %2508 = vmatprep.subr.mxu0 0.0
        %2509 = vmatpush2.msra.mxu0 0.0
        %2510 = vmatprep.subr.mxu0 0.0
        %2511 = vmatpush2.msra.mxu0 0.0
        %2512 = vmatprep.subr.mxu0 0.0
        %2513 = vmatpush2.msra.mxu0 0.0
        %2514 = vmatprep.subr.mxu0 0.0
        %2515 = vmatpush2.msra.mxu0 0.0
        %2516 = vmatprep.subr.mxu0 0.0
        %2517 = vmatpush2.msra.mxu0 0.0
        %2518 = vmatprep.subr.mxu0 0.0
        %2519 = vmatpush2.msra.mxu0 0.0
        %2520 = vmatprep.subr.mxu0 0.0
        %2521 = vmatpush2.msra.mxu0 0.0
        %2522 = vmatprep.subr.mxu0 0.0
        %2523 = vmatpush2.msra.mxu0 0.0
        %2524 = vmatprep.subr.mxu0 0.0
        %2525 = vmatpush2.msra.mxu0 0.0
        %2526 = vmatprep.subr.mxu0 0.0
        %2527 = vmatpush2.msra.mxu0 0.0
        %2528 = vmatprep.subr.mxu0 0.0
        %2529 = vmatpush2.msra.mxu0 0.0
        %2530 = vmatprep.subr.mxu0 0.0
        %2531 = vmatpush2.msra.mxu0 0.0
        %2532 = vmatprep.subr.mxu0 0.0
        %2533 = vmatpush2.msra.mxu0 0.0
        %2534 = vmatprep.subr.mxu0 0.0
        %2535 = vmatpush2.msra.mxu0 0.0
        %2536 = vmatprep.subr.mxu0 0.0
        %2537 = vmatpush2.msra.mxu0 0.0
        %2538 = vmatprep.mubr.f32.mxu0 0.0
        %2539 = vmatmul.mubr.f32.gmra.mxu0 %v1142
        %v2540 = vpop.f32.mrf.mxu0
        %v2541 = vadd.f32 %v2472, %v2540
        %v2542 = vpop.f32.mrf.mxu0
        %2543 = vmatprep.mubr.f32.mxu0 0.0
        %2544 = vmatmul.mubr.f32.gmra.mxu0 %v1145
        %v2545 = vpop.f32.mrf.mxu0
        %v2546 = vadd.f32 %v2472, %v2545
        %v2547 = vpop.f32.mrf.mxu0
        %2548 = vmatprep.mubr.f32.mxu0 0.0
        %2549 = vmatmul.mubr.f32.gmra.mxu0 %v1148
        %v2550 = vpop.f32.mrf.mxu0
        %v2551 = vadd.f32 %v2472, %v2550
        %v2552 = vpop.f32.mrf.mxu0
        %2553 = vdwg.mxu0
        %s2554 = scalar_lea.vmem %s828, 640
        %v2555 = vld [vmem:[%s2554] sm:$0xff]
        %v2556 = vld [vmem:[%s2554 + $0x8] sm:$0xff]
        %v2557 = vld [vmem:[%s2554 + $0x10] sm:$0xff]
        %v2558 = vld [vmem:[%s2554 + $0x18] sm:$0xff]
        %v2559 = vld [vmem:[%s2554 + $0x20] sm:$0xff]
        %v2560 = vld [vmem:[%s2554 + $0x28] sm:$0xff]
        %v2561 = vld [vmem:[%s2554 + $0x30] sm:$0xff]
        %v2562 = vld [vmem:[%s2554 + $0x38] sm:$0xff]
        %s2563 = scalar_lea.vmem %s832, 10
        %v2564 = vld [vmem:[%s2563] sm:$0x1]
        %v2566 = vlaneseq
        %v2567 = vshrl.u32 %v2566, 7
        %v2568 = vsub.s32 0, %v2567
        %v2569 = vrot.slane %v2564, %v2568
        %2571 = vmatprep.subr.mxu0 0.0
        %2572 = vmatpush1.msra.mxu0 0.0
        %2573 = vmatprep.subr.mxu0 0.0
        %2574 = vmatpush1.msra.mxu0 0.0
        %2575 = vmatprep.subr.mxu0 0.0
        %2576 = vmatpush1.msra.mxu0 0.0
        %2577 = vmatprep.subr.mxu0 0.0
        %2578 = vmatpush1.msra.mxu0 0.0
        %2579 = vmatprep.subr.mxu0 0.0
        %2580 = vmatpush1.msra.mxu0 0.0
        %2581 = vmatprep.subr.mxu0 0.0
        %2582 = vmatpush1.msra.mxu0 0.0
        %2583 = vmatprep.subr.mxu0 0.0
        %2584 = vmatpush1.msra.mxu0 0.0
        %2585 = vmatprep.subr.mxu0 0.0
        %2586 = vmatpush1.msra.mxu0 0.0
        %2587 = vmatprep.subr.mxu0 0.0
        %2588 = vmatpush1.msra.mxu0 %v2562
        %2589 = vmatprep.subr.mxu0 0.0
        %2590 = vmatpush1.msra.mxu0 %v2561
        %2591 = vmatprep.subr.mxu0 0.0
        %2592 = vmatpush1.msra.mxu0 %v2560
        %2593 = vmatprep.subr.mxu0 0.0
        %2594 = vmatpush1.msra.mxu0 %v2559
        %2595 = vmatprep.subr.mxu0 0.0
        %2596 = vmatpush1.msra.mxu0 %v2558
        %2597 = vmatprep.subr.mxu0 0.0
        %2598 = vmatpush1.msra.mxu0 %v2557
        %2599 = vmatprep.subr.mxu0 0.0
        %2600 = vmatpush1.msra.mxu0 %v2556
        %2601 = vmatprep.subr.mxu0 0.0
        %2602 = vmatpush1.msra.mxu0 %v2555
        %2603 = vmatprep.subr.mxu0 0.0
        %2604 = vmatpush2.msra.mxu0 0.0
        %2605 = vmatprep.subr.mxu0 0.0
        %2606 = vmatpush2.msra.mxu0 0.0
        %2607 = vmatprep.subr.mxu0 0.0
        %2608 = vmatpush2.msra.mxu0 0.0
        %2609 = vmatprep.subr.mxu0 0.0
        %2610 = vmatpush2.msra.mxu0 0.0
        %2611 = vmatprep.subr.mxu0 0.0
        %2612 = vmatpush2.msra.mxu0 0.0
        %2613 = vmatprep.subr.mxu0 0.0
        %2614 = vmatpush2.msra.mxu0 0.0
        %2615 = vmatprep.subr.mxu0 0.0
        %2616 = vmatpush2.msra.mxu0 0.0
        %2617 = vmatprep.subr.mxu0 0.0
        %2618 = vmatpush2.msra.mxu0 0.0
        %2619 = vmatprep.subr.mxu0 0.0
        %2620 = vmatpush2.msra.mxu0 0.0
        %2621 = vmatprep.subr.mxu0 0.0
        %2622 = vmatpush2.msra.mxu0 0.0
        %2623 = vmatprep.subr.mxu0 0.0
        %2624 = vmatpush2.msra.mxu0 0.0
        %2625 = vmatprep.subr.mxu0 0.0
        %2626 = vmatpush2.msra.mxu0 0.0
        %2627 = vmatprep.subr.mxu0 0.0
        %2628 = vmatpush2.msra.mxu0 0.0
        %2629 = vmatprep.subr.mxu0 0.0
        %2630 = vmatpush2.msra.mxu0 0.0
        %2631 = vmatprep.subr.mxu0 0.0
        %2632 = vmatpush2.msra.mxu0 0.0
        %2633 = vmatprep.subr.mxu0 0.0
        %2634 = vmatpush2.msra.mxu0 0.0
        %2635 = vmatprep.mubr.f32.mxu0 0.0
        %2636 = vmatmul.mubr.f32.gmra.mxu0 %v1142
        %v2637 = vpop.f32.mrf.mxu0
        %v2638 = vadd.f32 %v2569, %v2637
        %v2639 = vpop.f32.mrf.mxu0
        %2640 = vmatprep.mubr.f32.mxu0 0.0
        %2641 = vmatmul.mubr.f32.gmra.mxu0 %v1145
        %v2642 = vpop.f32.mrf.mxu0
        %v2643 = vadd.f32 %v2569, %v2642
        %v2644 = vpop.f32.mrf.mxu0
        %2645 = vmatprep.mubr.f32.mxu0 0.0
        %2646 = vmatmul.mubr.f32.gmra.mxu0 %v1148
        %v2647 = vpop.f32.mrf.mxu0
        %v2648 = vadd.f32 %v2569, %v2647
        %v2649 = vpop.f32.mrf.mxu0
        %2650 = vdwg.mxu0
        %v2651 = vmul.f32 %v2444, 0.25
        %v2652 = vmul.f32 %v2449, 0.25
        %v2653 = vmul.f32 %v2454, 0.25
        %v2655 = vsel %vm1427, %v2651, 0
        %v2658 = vsel %vm1427, %v2652, 0
        %v2661 = vsel %vm1427, %v2653, 0
        %v2664 = vsel %vm1427, %v2541, 0
        %v2667 = vsel %vm1427, %v2546, 0
        %v2670 = vsel %vm1427, %v2551, 0
        %2672 = vmatprep.subr.mxu0 0.0
        %2673 = vmatpush1.xpose.msra.mxu0 0.0
        %2674 = vmatprep.subr.mxu0 0.0
        %2675 = vmatpush1.xpose.msra.mxu0 0.0
        %2676 = vmatprep.subr.mxu0 0.0
        %2677 = vmatpush1.xpose.msra.mxu0 0.0
        %2678 = vmatprep.subr.mxu0 0.0
        %2679 = vmatpush1.xpose.msra.mxu0 0.0
        %2680 = vmatprep.subr.mxu0 0.0
        %2681 = vmatpush1.xpose.msra.mxu0 0.0
        %2682 = vmatprep.subr.mxu0 0.0
        %2683 = vmatpush1.xpose.msra.mxu0 0.0
        %2684 = vmatprep.subr.mxu0 0.0
        %2685 = vmatpush1.xpose.msra.mxu0 0.0
        %2686 = vmatprep.subr.mxu0 0.0
        %2687 = vmatpush1.xpose.msra.mxu0 0.0
        %2688 = vmatprep.subr.mxu0 0.0
        %2689 = vmatpush1.xpose.msra.mxu0 0.0
        %2690 = vmatprep.subr.mxu0 0.0
        %2691 = vmatpush1.xpose.msra.mxu0 0.0
        %2692 = vmatprep.subr.mxu0 0.0
        %2693 = vmatpush1.xpose.msra.mxu0 0.0
        %2694 = vmatprep.subr.mxu0 0.0
        %2695 = vmatpush1.xpose.msra.mxu0 0.0
        %2696 = vmatprep.subr.mxu0 0.0
        %2697 = vmatpush1.xpose.msra.mxu0 0.0
        %2698 = vmatprep.subr.mxu0 0.0
        %2699 = vmatpush1.xpose.msra.mxu0 %v2670
        %2700 = vmatprep.subr.mxu0 0.0
        %2701 = vmatpush1.xpose.msra.mxu0 %v2667
        %2702 = vmatprep.subr.mxu0 0.0
        %2703 = vmatpush1.xpose.msra.mxu0 %v2664
        %2704 = vmatprep.subr.mxu0 0.0
        %2705 = vmatpush2.xpose.msra.mxu0 0.0
        %2706 = vmatprep.subr.mxu0 0.0
        %2707 = vmatpush2.xpose.msra.mxu0 0.0
        %2708 = vmatprep.subr.mxu0 0.0
        %2709 = vmatpush2.xpose.msra.mxu0 0.0
        %2710 = vmatprep.subr.mxu0 0.0
        %2711 = vmatpush2.xpose.msra.mxu0 0.0
        %2712 = vmatprep.subr.mxu0 0.0
        %2713 = vmatpush2.xpose.msra.mxu0 0.0
        %2714 = vmatprep.subr.mxu0 0.0
        %2715 = vmatpush2.xpose.msra.mxu0 0.0
        %2716 = vmatprep.subr.mxu0 0.0
        %2717 = vmatpush2.xpose.msra.mxu0 0.0
        %2718 = vmatprep.subr.mxu0 0.0
        %2719 = vmatpush2.xpose.msra.mxu0 0.0
        %2720 = vmatprep.subr.mxu0 0.0
        %2721 = vmatpush2.xpose.msra.mxu0 0.0
        %2722 = vmatprep.subr.mxu0 0.0
        %2723 = vmatpush2.xpose.msra.mxu0 0.0
        %2724 = vmatprep.subr.mxu0 0.0
        %2725 = vmatpush2.xpose.msra.mxu0 0.0
        %2726 = vmatprep.subr.mxu0 0.0
        %2727 = vmatpush2.xpose.msra.mxu0 0.0
        %2728 = vmatprep.subr.mxu0 0.0
        %2729 = vmatpush2.xpose.msra.mxu0 0.0
        %2730 = vmatprep.subr.mxu0 0.0
        %2731 = vmatpush2.xpose.msra.mxu0 0.0
        %2732 = vmatprep.subr.mxu0 0.0
        %2733 = vmatpush2.xpose.msra.mxu0 0.0
        %2734 = vmatprep.subr.mxu0 0.0
        %2735 = vmatpush2.xpose.msra.mxu0 0.0
        %2736 = vmatprep.mubr.f32.mxu0 0.0
        %2737 = vmatmul.mubr.f32.gmra.mxu0 %v2655
        %v2738 = vpop.f32.mrf.mxu0
        %v2739 = vadd.f32 0.0, %v2738
        %v2740 = vpop.f32.mrf.mxu0
        %2741 = vmatprep.mubr.f32.mxu0 0.0
        %2742 = vmatmul.mubr.f32.gmra.mxu0 %v2658
        %v2743 = vpop.f32.mrf.mxu0
        %v2744 = vadd.f32 0.0, %v2743
        %v2745 = vpop.f32.mrf.mxu0
        %2746 = vmatprep.mubr.f32.mxu0 0.0
        %2747 = vmatmul.mubr.f32.gmra.mxu0 %v2661
        %v2748 = vpop.f32.mrf.mxu0
        %v2749 = vadd.f32 0.0, %v2748
        %v2750 = vpop.f32.mrf.mxu0
        %2751 = vdwg.mxu0
        %v2752 = vsel %vm1526, %v2739, -inf
        %2753 = vmax.xlane.f32.xlu0 %v2752
        %v2754 = vpop.xlane.xlu0 %2753
        %v2755 = vsel %vm1526, %v2744, -inf
        %2756 = vmax.xlane.f32.xlu0 %v2755
        %v2757 = vpop.xlane.xlu0 %2756
        %v2758 = vsel %vm1533, %v2749, -inf
        %2759 = vmax.xlane.f32.xlu0 %v2758
        %v2760 = vpop.xlane.xlu0 %2759
        %v2761 = vsub.f32 %v2739, %v2754
        %v2762 = vsub.f32 %v2744, %v2757
        %v2763 = vsub.f32 %v2749, %v2760
        %v2764 = vmul.f32 %v2761, 1.442695
        %v2765 = vpow.pop %v2764
        %v2766 = vmul.f32 %v2762, 1.442695
        %v2767 = vpow.pop %v2766
        %v2768 = vmul.f32 %v2763, 1.442695
        %v2769 = vpow.pop %v2768
        %v2770 = vsel %vm1526, %v2765, 0.0
        %2771 = vadd.xlane.f32.xlu0 %v2770
        %v2772 = vpop.xlane.xlu0 %2771
        %v2773 = vsel %vm1526, %v2767, 0.0
        %2774 = vadd.xlane.f32.xlu0 %v2773
        %v2775 = vpop.xlane.xlu0 %2774
        %v2776 = vsel %vm1533, %v2769, 0.0
        %2777 = vadd.xlane.f32.xlu0 %v2776
        %v2778 = vpop.xlane.xlu0 %2777
        %v2779 = vrcp.pop %v2772
        %v2780 = vrcp.pop %v2775
        %v2781 = vrcp.pop %v2778
        %v2782 = vmul.f32 %v2765, %v2779
        %v2783 = vmul.f32 %v2767, %v2780
        %v2784 = vmul.f32 %v2769, %v2781
        %v2786 = vsel %vm1526, %v2782, 0
        %v2789 = vsel %vm1526, %v2783, 0
        %v2792 = vsel %vm1526, %v2784, 0
        %v2795 = vsel %vm1570, %v2648, 0
        %2797 = vmatprep.subr.mxu0 0.0
        %2798 = vmatpush1.msra.mxu0 0.0
        %2799 = vmatprep.subr.mxu0 0.0
        %2800 = vmatpush1.msra.mxu0 0.0
        %2801 = vmatprep.subr.mxu0 0.0
        %2802 = vmatpush1.msra.mxu0 0.0
        %2803 = vmatprep.subr.mxu0 0.0
        %2804 = vmatpush1.msra.mxu0 0.0
        %2805 = vmatprep.subr.mxu0 0.0
        %2806 = vmatpush1.msra.mxu0 0.0
        %2807 = vmatprep.subr.mxu0 0.0
        %2808 = vmatpush1.msra.mxu0 0.0
        %2809 = vmatprep.subr.mxu0 0.0
        %2810 = vmatpush1.msra.mxu0 0.0
        %2811 = vmatprep.subr.mxu0 0.0
        %2812 = vmatpush1.msra.mxu0 0.0
        %2813 = vmatprep.subr.mxu0 0.0
        %2814 = vmatpush1.msra.mxu0 0.0
        %2815 = vmatprep.subr.mxu0 0.0
        %2816 = vmatpush1.msra.mxu0 0.0
        %2817 = vmatprep.subr.mxu0 0.0
        %2818 = vmatpush1.msra.mxu0 0.0
        %2819 = vmatprep.subr.mxu0 0.0
        %2820 = vmatpush1.msra.mxu0 0.0
        %2821 = vmatprep.subr.mxu0 0.0
        %2822 = vmatpush1.msra.mxu0 0.0
        %2823 = vmatprep.subr.mxu0 0.0
        %2824 = vmatpush1.msra.mxu0 %v2795
        %2825 = vmatprep.subr.mxu0 0.0
        %2826 = vmatpush1.msra.mxu0 %v2643
        %2827 = vmatprep.subr.mxu0 0.0
        %2828 = vmatpush1.msra.mxu0 %v2638
        %2829 = vmatprep.subr.mxu0 0.0
        %2830 = vmatpush2.msra.mxu0 0.0
        %2831 = vmatprep.subr.mxu0 0.0
        %2832 = vmatpush2.msra.mxu0 0.0
        %2833 = vmatprep.subr.mxu0 0.0
        %2834 = vmatpush2.msra.mxu0 0.0
        %2835 = vmatprep.subr.mxu0 0.0
        %2836 = vmatpush2.msra.mxu0 0.0
        %2837 = vmatprep.subr.mxu0 0.0
        %2838 = vmatpush2.msra.mxu0 0.0
        %2839 = vmatprep.subr.mxu0 0.0
        %2840 = vmatpush2.msra.mxu0 0.0
        %2841 = vmatprep.subr.mxu0 0.0
        %2842 = vmatpush2.msra.mxu0 0.0
        %2843 = vmatprep.subr.mxu0 0.0
        %2844 = vmatpush2.msra.mxu0 0.0
        %2845 = vmatprep.subr.mxu0 0.0
        %2846 = vmatpush2.msra.mxu0 0.0
        %2847 = vmatprep.subr.mxu0 0.0
        %2848 = vmatpush2.msra.mxu0 0.0
        %2849 = vmatprep.subr.mxu0 0.0
        %2850 = vmatpush2.msra.mxu0 0.0
        %2851 = vmatprep.subr.mxu0 0.0
        %2852 = vmatpush2.msra.mxu0 0.0
        %2853 = vmatprep.subr.mxu0 0.0
        %2854 = vmatpush2.msra.mxu0 0.0
        %2855 = vmatprep.subr.mxu0 0.0
        %2856 = vmatpush2.msra.mxu0 0.0
        %2857 = vmatprep.subr.mxu0 0.0
        %2858 = vmatpush2.msra.mxu0 0.0
        %2859 = vmatprep.subr.mxu0 0.0
        %2860 = vmatpush2.msra.mxu0 0.0
        %2861 = vmatprep.mubr.f32.mxu0 0.0
        %2862 = vmatmul.mubr.f32.gmra.mxu0 %v2786
        %v2863 = vpop.f32.mrf.mxu0
        %v2864 = vadd.f32 0.0, %v2863
        %v2865 = vpop.f32.mrf.mxu0
        %2866 = vmatprep.mubr.f32.mxu0 0.0
        %2867 = vmatmul.mubr.f32.gmra.mxu0 %v2789
        %v2868 = vpop.f32.mrf.mxu0
        %v2869 = vadd.f32 0.0, %v2868
        %v2870 = vpop.f32.mrf.mxu0
        %2871 = vmatprep.mubr.f32.mxu0 0.0
        %2872 = vmatmul.mubr.f32.gmra.mxu0 %v2792
        %v2873 = vpop.f32.mrf.mxu0
        %v2874 = vadd.f32 0.0, %v2873
        %v2875 = vpop.f32.mrf.mxu0
        %2876 = vdwg.mxu0
        %s2877 = scalar_lea.vmem %s837, 32
        %v2878 = vld [vmem:[%s2877] sm:$0xff]
        %v2879 = vld [vmem:[%s2877 + $0x8] sm:$0xff]
        %v2881 = vsel %vm1427, %v2864, 0
        %v2884 = vsel %vm1427, %v2869, 0
        %v2887 = vsel %vm1427, %v2874, 0
        %2889 = vmatprep.subr.mxu0 0.0
        %2890 = vmatpush1.msra.mxu0 0.0
        %2891 = vmatprep.subr.mxu0 0.0
        %2892 = vmatpush1.msra.mxu0 0.0
        %2893 = vmatprep.subr.mxu0 0.0
        %2894 = vmatpush1.msra.mxu0 0.0
        %2895 = vmatprep.subr.mxu0 0.0
        %2896 = vmatpush1.msra.mxu0 0.0
        %2897 = vmatprep.subr.mxu0 0.0
        %2898 = vmatpush1.msra.mxu0 0.0
        %2899 = vmatprep.subr.mxu0 0.0
        %2900 = vmatpush1.msra.mxu0 0.0
        %2901 = vmatprep.subr.mxu0 0.0
        %2902 = vmatpush1.msra.mxu0 0.0
        %2903 = vmatprep.subr.mxu0 0.0
        %2904 = vmatpush1.msra.mxu0 0.0
        %2905 = vmatprep.subr.mxu0 0.0
        %2906 = vmatpush1.msra.mxu0 0.0
        %2907 = vmatprep.subr.mxu0 0.0
        %2908 = vmatpush1.msra.mxu0 0.0
        %2909 = vmatprep.subr.mxu0 0.0
        %2910 = vmatpush1.msra.mxu0 0.0
        %2911 = vmatprep.subr.mxu0 0.0
        %2912 = vmatpush1.msra.mxu0 0.0
        %2913 = vmatprep.subr.mxu0 0.0
        %2914 = vmatpush1.msra.mxu0 0.0
        %2915 = vmatprep.subr.mxu0 0.0
        %2916 = vmatpush1.msra.mxu0 0.0
        %2917 = vmatprep.subr.mxu0 0.0
        %2918 = vmatpush1.msra.mxu0 %v2879
        %2919 = vmatprep.subr.mxu0 0.0
        %2920 = vmatpush1.msra.mxu0 %v2878
        %2921 = vmatprep.subr.mxu0 0.0
        %2922 = vmatpush2.msra.mxu0 0.0
        %2923 = vmatprep.subr.mxu0 0.0
        %2924 = vmatpush2.msra.mxu0 0.0
        %2925 = vmatprep.subr.mxu0 0.0
        %2926 = vmatpush2.msra.mxu0 0.0
        %2927 = vmatprep.subr.mxu0 0.0
        %2928 = vmatpush2.msra.mxu0 0.0
        %2929 = vmatprep.subr.mxu0 0.0
        %2930 = vmatpush2.msra.mxu0 0.0
        %2931 = vmatprep.subr.mxu0 0.0
        %2932 = vmatpush2.msra.mxu0 0.0
        %2933 = vmatprep.subr.mxu0 0.0
        %2934 = vmatpush2.msra.mxu0 0.0
        %2935 = vmatprep.subr.mxu0 0.0
        %2936 = vmatpush2.msra.mxu0 0.0
        %2937 = vmatprep.subr.mxu0 0.0
        %2938 = vmatpush2.msra.mxu0 0.0
        %2939 = vmatprep.subr.mxu0 0.0
        %2940 = vmatpush2.msra.mxu0 0.0
        %2941 = vmatprep.subr.mxu0 0.0
        %2942 = vmatpush2.msra.mxu0 0.0
        %2943 = vmatprep.subr.mxu0 0.0
        %2944 = vmatpush2.msra.mxu0 0.0
        %2945 = vmatprep.subr.mxu0 0.0
        %2946 = vmatpush2.msra.mxu0 0.0
        %2947 = vmatprep.subr.mxu0 0.0
        %2948 = vmatpush2.msra.mxu0 0.0
        %2949 = vmatprep.subr.mxu0 0.0
        %2950 = vmatpush2.msra.mxu0 0.0
        %2951 = vmatprep.subr.mxu0 0.0
        %2952 = vmatpush2.msra.mxu0 0.0
        %2953 = vmatprep.mubr.f32.mxu0 0.0
        %2954 = vmatmul.mubr.f32.gmra.mxu0 %v2881
        %v2955 = vpop.f32.mrf.mxu0
        %v2956 = vadd.f32 0.0, %v2955
        %v2957 = vpop.f32.mrf.mxu0
        %2958 = vmatprep.mubr.f32.mxu0 0.0
        %2959 = vmatmul.mubr.f32.gmra.mxu0 %v2884
        %v2960 = vpop.f32.mrf.mxu0
        %v2961 = vadd.f32 0.0, %v2960
        %v2962 = vpop.f32.mrf.mxu0
        %2963 = vmatprep.mubr.f32.mxu0 0.0
        %2964 = vmatmul.mubr.f32.gmra.mxu0 %v2887
        %v2965 = vpop.f32.mrf.mxu0
        %v2966 = vadd.f32 0.0, %v2965
        %v2967 = vpop.f32.mrf.mxu0
        %2968 = vdwg.mxu0
        %v2969 = vadd.f32 %v2357, %v2956
        %v2970 = vadd.f32 %v2358, %v2961
        %v2971 = vadd.f32 %v2359, %v2966
        %s2972 = scalar_lea.vmem %s828, 192
        %v2973 = vld [vmem:[%s2972] sm:$0xff]
        %v2974 = vld [vmem:[%s2972 + $0x8] sm:$0xff]
        %v2975 = vld [vmem:[%s2972 + $0x10] sm:$0xff]
        %v2976 = vld [vmem:[%s2972 + $0x18] sm:$0xff]
        %v2977 = vld [vmem:[%s2972 + $0x20] sm:$0xff]
        %v2978 = vld [vmem:[%s2972 + $0x28] sm:$0xff]
        %v2979 = vld [vmem:[%s2972 + $0x30] sm:$0xff]
        %v2980 = vld [vmem:[%s2972 + $0x38] sm:$0xff]
        %s2981 = scalar_lea.vmem %s832, 3
        %v2982 = vld [vmem:[%s2981] sm:$0x1]
        %v2984 = vlaneseq
        %v2985 = vshrl.u32 %v2984, 7
        %v2986 = vsub.s32 0, %v2985
        %v2987 = vrot.slane %v2982, %v2986
        %2989 = vmatprep.subr.mxu0 0.0
        %2990 = vmatpush1.msra.mxu0 0.0
        %2991 = vmatprep.subr.mxu0 0.0
        %2992 = vmatpush1.msra.mxu0 0.0
        %2993 = vmatprep.subr.mxu0 0.0
        %2994 = vmatpush1.msra.mxu0 0.0
        %2995 = vmatprep.subr.mxu0 0.0
        %2996 = vmatpush1.msra.mxu0 0.0
        %2997 = vmatprep.subr.mxu0 0.0
        %2998 = vmatpush1.msra.mxu0 0.0
        %2999 = vmatprep.subr.mxu0 0.0
        %3000 = vmatpush1.msra.mxu0 0.0
        %3001 = vmatprep.subr.mxu0 0.0
        %3002 = vmatpush1.msra.mxu0 0.0
        %3003 = vmatprep.subr.mxu0 0.0
        %3004 = vmatpush1.msra.mxu0 0.0
        %3005 = vmatprep.subr.mxu0 0.0
        %3006 = vmatpush1.msra.mxu0 %v2980
        %3007 = vmatprep.subr.mxu0 0.0
        %3008 = vmatpush1.msra.mxu0 %v2979
        %3009 = vmatprep.subr.mxu0 0.0
        %3010 = vmatpush1.msra.mxu0 %v2978
        %3011 = vmatprep.subr.mxu0 0.0
        %3012 = vmatpush1.msra.mxu0 %v2977
        %3013 = vmatprep.subr.mxu0 0.0
        %3014 = vmatpush1.msra.mxu0 %v2976
        %3015 = vmatprep.subr.mxu0 0.0
        %3016 = vmatpush1.msra.mxu0 %v2975
        %3017 = vmatprep.subr.mxu0 0.0
        %3018 = vmatpush1.msra.mxu0 %v2974
        %3019 = vmatprep.subr.mxu0 0.0
        %3020 = vmatpush1.msra.mxu0 %v2973
        %3021 = vmatprep.subr.mxu0 0.0
        %3022 = vmatpush2.msra.mxu0 0.0
        %3023 = vmatprep.subr.mxu0 0.0
        %3024 = vmatpush2.msra.mxu0 0.0
        %3025 = vmatprep.subr.mxu0 0.0
        %3026 = vmatpush2.msra.mxu0 0.0
        %3027 = vmatprep.subr.mxu0 0.0
        %3028 = vmatpush2.msra.mxu0 0.0
        %3029 = vmatprep.subr.mxu0 0.0
        %3030 = vmatpush2.msra.mxu0 0.0
        %3031 = vmatprep.subr.mxu0 0.0
        %3032 = vmatpush2.msra.mxu0 0.0
        %3033 = vmatprep.subr.mxu0 0.0
        %3034 = vmatpush2.msra.mxu0 0.0
        %3035 = vmatprep.subr.mxu0 0.0
        %3036 = vmatpush2.msra.mxu0 0.0
        %3037 = vmatprep.subr.mxu0 0.0
        %3038 = vmatpush2.msra.mxu0 0.0
        %3039 = vmatprep.subr.mxu0 0.0
        %3040 = vmatpush2.msra.mxu0 0.0
        %3041 = vmatprep.subr.mxu0 0.0
        %3042 = vmatpush2.msra.mxu0 0.0
        %3043 = vmatprep.subr.mxu0 0.0
        %3044 = vmatpush2.msra.mxu0 0.0
        %3045 = vmatprep.subr.mxu0 0.0
        %3046 = vmatpush2.msra.mxu0 0.0
        %3047 = vmatprep.subr.mxu0 0.0
        %3048 = vmatpush2.msra.mxu0 0.0
        %3049 = vmatprep.subr.mxu0 0.0
        %3050 = vmatpush2.msra.mxu0 0.0
        %3051 = vmatprep.subr.mxu0 0.0
        %3052 = vmatpush2.msra.mxu0 0.0
        %3053 = vmatprep.mubr.f32.mxu0 0.0
        %3054 = vmatmul.mubr.f32.gmra.mxu0 %v1142
        %v3055 = vpop.f32.mrf.mxu0
        %v3056 = vadd.f32 %v2987, %v3055
        %v3057 = vpop.f32.mrf.mxu0
        %3058 = vmatprep.mubr.f32.mxu0 0.0
        %3059 = vmatmul.mubr.f32.gmra.mxu0 %v1145
        %v3060 = vpop.f32.mrf.mxu0
        %v3061 = vadd.f32 %v2987, %v3060
        %v3062 = vpop.f32.mrf.mxu0
        %3063 = vmatprep.mubr.f32.mxu0 0.0
        %3064 = vmatmul.mubr.f32.gmra.mxu0 %v1148
        %v3065 = vpop.f32.mrf.mxu0
        %v3066 = vadd.f32 %v2987, %v3065
        %v3067 = vpop.f32.mrf.mxu0
        %3068 = vdwg.mxu0
        %s3069 = scalar_lea.vmem %s828, 448
        %v3070 = vld [vmem:[%s3069] sm:$0xff]
        %v3071 = vld [vmem:[%s3069 + $0x8] sm:$0xff]
        %v3072 = vld [vmem:[%s3069 + $0x10] sm:$0xff]
        %v3073 = vld [vmem:[%s3069 + $0x18] sm:$0xff]
        %v3074 = vld [vmem:[%s3069 + $0x20] sm:$0xff]
        %v3075 = vld [vmem:[%s3069 + $0x28] sm:$0xff]
        %v3076 = vld [vmem:[%s3069 + $0x30] sm:$0xff]
        %v3077 = vld [vmem:[%s3069 + $0x38] sm:$0xff]
        %s3078 = scalar_lea.vmem %s832, 7
        %v3079 = vld [vmem:[%s3078] sm:$0x1]
        %v3081 = vlaneseq
        %v3082 = vshrl.u32 %v3081, 7
        %v3083 = vsub.s32 0, %v3082
        %v3084 = vrot.slane %v3079, %v3083
        %3086 = vmatprep.subr.mxu0 0.0
        %3087 = vmatpush1.msra.mxu0 0.0
        %3088 = vmatprep.subr.mxu0 0.0
        %3089 = vmatpush1.msra.mxu0 0.0
        %3090 = vmatprep.subr.mxu0 0.0
        %3091 = vmatpush1.msra.mxu0 0.0
        %3092 = vmatprep.subr.mxu0 0.0
        %3093 = vmatpush1.msra.mxu0 0.0
        %3094 = vmatprep.subr.mxu0 0.0
        %3095 = vmatpush1.msra.mxu0 0.0
        %3096 = vmatprep.subr.mxu0 0.0
        %3097 = vmatpush1.msra.mxu0 0.0
        %3098 = vmatprep.subr.mxu0 0.0
        %3099 = vmatpush1.msra.mxu0 0.0
        %3100 = vmatprep.subr.mxu0 0.0
        %3101 = vmatpush1.msra.mxu0 0.0
        %3102 = vmatprep.subr.mxu0 0.0
        %3103 = vmatpush1.msra.mxu0 %v3077
        %3104 = vmatprep.subr.mxu0 0.0
        %3105 = vmatpush1.msra.mxu0 %v3076
        %3106 = vmatprep.subr.mxu0 0.0
        %3107 = vmatpush1.msra.mxu0 %v3075
        %3108 = vmatprep.subr.mxu0 0.0
        %3109 = vmatpush1.msra.mxu0 %v3074
        %3110 = vmatprep.subr.mxu0 0.0
        %3111 = vmatpush1.msra.mxu0 %v3073
        %3112 = vmatprep.subr.mxu0 0.0
        %3113 = vmatpush1.msra.mxu0 %v3072
        %3114 = vmatprep.subr.mxu0 0.0
        %3115 = vmatpush1.msra.mxu0 %v3071
        %3116 = vmatprep.subr.mxu0 0.0
        %3117 = vmatpush1.msra.mxu0 %v3070
        %3118 = vmatprep.subr.mxu0 0.0
        %3119 = vmatpush2.msra.mxu0 0.0
        %3120 = vmatprep.subr.mxu0 0.0
        %3121 = vmatpush2.msra.mxu0 0.0
        %3122 = vmatprep.subr.mxu0 0.0
        %3123 = vmatpush2.msra.mxu0 0.0
        %3124 = vmatprep.subr.mxu0 0.0
        %3125 = vmatpush2.msra.mxu0 0.0
        %3126 = vmatprep.subr.mxu0 0.0
        %3127 = vmatpush2.msra.mxu0 0.0
        %3128 = vmatprep.subr.mxu0 0.0
        %3129 = vmatpush2.msra.mxu0 0.0
        %3130 = vmatprep.subr.mxu0 0.0
        %3131 = vmatpush2.msra.mxu0 0.0
        %3132 = vmatprep.subr.mxu0 0.0
        %3133 = vmatpush2.msra.mxu0 0.0
        %3134 = vmatprep.subr.mxu0 0.0
        %3135 = vmatpush2.msra.mxu0 0.0
        %3136 = vmatprep.subr.mxu0 0.0
        %3137 = vmatpush2.msra.mxu0 0.0
        %3138 = vmatprep.subr.mxu0 0.0
        %3139 = vmatpush2.msra.mxu0 0.0
        %3140 = vmatprep.subr.mxu0 0.0
        %3141 = vmatpush2.msra.mxu0 0.0
        %3142 = vmatprep.subr.mxu0 0.0
        %3143 = vmatpush2.msra.mxu0 0.0
        %3144 = vmatprep.subr.mxu0 0.0
        %3145 = vmatpush2.msra.mxu0 0.0
        %3146 = vmatprep.subr.mxu0 0.0
        %3147 = vmatpush2.msra.mxu0 0.0
        %3148 = vmatprep.subr.mxu0 0.0
        %3149 = vmatpush2.msra.mxu0 0.0
        %3150 = vmatprep.mubr.f32.mxu0 0.0
        %3151 = vmatmul.mubr.f32.gmra.mxu0 %v1142
        %v3152 = vpop.f32.mrf.mxu0
        %v3153 = vadd.f32 %v3084, %v3152
        %v3154 = vpop.f32.mrf.mxu0
        %3155 = vmatprep.mubr.f32.mxu0 0.0
        %3156 = vmatmul.mubr.f32.gmra.mxu0 %v1145
        %v3157 = vpop.f32.mrf.mxu0
        %v3158 = vadd.f32 %v3084, %v3157
        %v3159 = vpop.f32.mrf.mxu0
        %3160 = vmatprep.mubr.f32.mxu0 0.0
        %3161 = vmatmul.mubr.f32.gmra.mxu0 %v1148
        %v3162 = vpop.f32.mrf.mxu0
        %v3163 = vadd.f32 %v3084, %v3162
        %v3164 = vpop.f32.mrf.mxu0
        %3165 = vdwg.mxu0
        %s3166 = scalar_lea.vmem %s828, 704
        %v3167 = vld [vmem:[%s3166] sm:$0xff]
        %v3168 = vld [vmem:[%s3166 + $0x8] sm:$0xff]
        %v3169 = vld [vmem:[%s3166 + $0x10] sm:$0xff]
        %v3170 = vld [vmem:[%s3166 + $0x18] sm:$0xff]
        %v3171 = vld [vmem:[%s3166 + $0x20] sm:$0xff]
        %v3172 = vld [vmem:[%s3166 + $0x28] sm:$0xff]
        %v3173 = vld [vmem:[%s3166 + $0x30] sm:$0xff]
        %v3174 = vld [vmem:[%s3166 + $0x38] sm:$0xff]
        %s3175 = scalar_lea.vmem %s832, 11
        %v3176 = vld [vmem:[%s3175] sm:$0x1]
        %v3178 = vlaneseq
        %v3179 = vshrl.u32 %v3178, 7
        %v3180 = vsub.s32 0, %v3179
        %v3181 = vrot.slane %v3176, %v3180
        %3183 = vmatprep.subr.mxu0 0.0
        %3184 = vmatpush1.msra.mxu0 0.0
        %3185 = vmatprep.subr.mxu0 0.0
        %3186 = vmatpush1.msra.mxu0 0.0
        %3187 = vmatprep.subr.mxu0 0.0
        %3188 = vmatpush1.msra.mxu0 0.0
        %3189 = vmatprep.subr.mxu0 0.0
        %3190 = vmatpush1.msra.mxu0 0.0
        %3191 = vmatprep.subr.mxu0 0.0
        %3192 = vmatpush1.msra.mxu0 0.0
        %3193 = vmatprep.subr.mxu0 0.0
        %3194 = vmatpush1.msra.mxu0 0.0
        %3195 = vmatprep.subr.mxu0 0.0
        %3196 = vmatpush1.msra.mxu0 0.0
        %3197 = vmatprep.subr.mxu0 0.0
        %3198 = vmatpush1.msra.mxu0 0.0
        %3199 = vmatprep.subr.mxu0 0.0
        %3200 = vmatpush1.msra.mxu0 %v3174
        %3201 = vmatprep.subr.mxu0 0.0
        %3202 = vmatpush1.msra.mxu0 %v3173
        %3203 = vmatprep.subr.mxu0 0.0
        %3204 = vmatpush1.msra.mxu0 %v3172
        %3205 = vmatprep.subr.mxu0 0.0
        %3206 = vmatpush1.msra.mxu0 %v3171
        %3207 = vmatprep.subr.mxu0 0.0
        %3208 = vmatpush1.msra.mxu0 %v3170
        %3209 = vmatprep.subr.mxu0 0.0
        %3210 = vmatpush1.msra.mxu0 %v3169
        %3211 = vmatprep.subr.mxu0 0.0
        %3212 = vmatpush1.msra.mxu0 %v3168
        %3213 = vmatprep.subr.mxu0 0.0
        %3214 = vmatpush1.msra.mxu0 %v3167
        %3215 = vmatprep.subr.mxu0 0.0
        %3216 = vmatpush2.msra.mxu0 0.0
        %3217 = vmatprep.subr.mxu0 0.0
        %3218 = vmatpush2.msra.mxu0 0.0
        %3219 = vmatprep.subr.mxu0 0.0
        %3220 = vmatpush2.msra.mxu0 0.0
        %3221 = vmatprep.subr.mxu0 0.0
        %3222 = vmatpush2.msra.mxu0 0.0
        %3223 = vmatprep.subr.mxu0 0.0
        %3224 = vmatpush2.msra.mxu0 0.0
        %3225 = vmatprep.subr.mxu0 0.0
        %3226 = vmatpush2.msra.mxu0 0.0
        %3227 = vmatprep.subr.mxu0 0.0
        %3228 = vmatpush2.msra.mxu0 0.0
        %3229 = vmatprep.subr.mxu0 0.0
        %3230 = vmatpush2.msra.mxu0 0.0
        %3231 = vmatprep.subr.mxu0 0.0
        %3232 = vmatpush2.msra.mxu0 0.0
        %3233 = vmatprep.subr.mxu0 0.0
        %3234 = vmatpush2.msra.mxu0 0.0
        %3235 = vmatprep.subr.mxu0 0.0
        %3236 = vmatpush2.msra.mxu0 0.0
        %3237 = vmatprep.subr.mxu0 0.0
        %3238 = vmatpush2.msra.mxu0 0.0
        %3239 = vmatprep.subr.mxu0 0.0
        %3240 = vmatpush2.msra.mxu0 0.0
        %3241 = vmatprep.subr.mxu0 0.0
        %3242 = vmatpush2.msra.mxu0 0.0
        %3243 = vmatprep.subr.mxu0 0.0
        %3244 = vmatpush2.msra.mxu0 0.0
        %3245 = vmatprep.subr.mxu0 0.0
        %3246 = vmatpush2.msra.mxu0 0.0
        %3247 = vmatprep.mubr.f32.mxu0 0.0
        %3248 = vmatmul.mubr.f32.gmra.mxu0 %v1142
        %v3249 = vpop.f32.mrf.mxu0
        %v3250 = vadd.f32 %v3181, %v3249
        %v3251 = vpop.f32.mrf.mxu0
        %3252 = vmatprep.mubr.f32.mxu0 0.0
        %3253 = vmatmul.mubr.f32.gmra.mxu0 %v1145
        %v3254 = vpop.f32.mrf.mxu0
        %v3255 = vadd.f32 %v3181, %v3254
        %v3256 = vpop.f32.mrf.mxu0
        %3257 = vmatprep.mubr.f32.mxu0 0.0
        %3258 = vmatmul.mubr.f32.gmra.mxu0 %v1148
        %v3259 = vpop.f32.mrf.mxu0
        %v3260 = vadd.f32 %v3181, %v3259
        %v3261 = vpop.f32.mrf.mxu0
        %3262 = vdwg.mxu0
        %v3263 = vmul.f32 %v3056, 0.25
        %v3264 = vmul.f32 %v3061, 0.25
        %v3265 = vmul.f32 %v3066, 0.25
        %v3267 = vsel %vm1427, %v3263, 0
        %v3270 = vsel %vm1427, %v3264, 0
        %v3273 = vsel %vm1427, %v3265, 0
        %v3276 = vsel %vm1427, %v3153, 0
        %v3279 = vsel %vm1427, %v3158, 0
        %v3282 = vsel %vm1427, %v3163, 0
        %3284 = vmatprep.subr.mxu0 0.0
        %3285 = vmatpush1.xpose.msra.mxu0 0.0
        %3286 = vmatprep.subr.mxu0 0.0
        %3287 = vmatpush1.xpose.msra.mxu0 0.0
        %3288 = vmatprep.subr.mxu0 0.0
        %3289 = vmatpush1.xpose.msra.mxu0 0.0
        %3290 = vmatprep.subr.mxu0 0.0
        %3291 = vmatpush1.xpose.msra.mxu0 0.0
        %3292 = vmatprep.subr.mxu0 0.0
        %3293 = vmatpush1.xpose.msra.mxu0 0.0
        %3294 = vmatprep.subr.mxu0 0.0
        %3295 = vmatpush1.xpose.msra.mxu0 0.0
        %3296 = vmatprep.subr.mxu0 0.0
        %3297 = vmatpush1.xpose.msra.mxu0 0.0
        %3298 = vmatprep.subr.mxu0 0.0
        %3299 = vmatpush1.xpose.msra.mxu0 0.0
        %3300 = vmatprep.subr.mxu0 0.0
        %3301 = vmatpush1.xpose.msra.mxu0 0.0
        %3302 = vmatprep.subr.mxu0 0.0
        %3303 = vmatpush1.xpose.msra.mxu0 0.0
        %3304 = vmatprep.subr.mxu0 0.0
        %3305 = vmatpush1.xpose.msra.mxu0 0.0
        %3306 = vmatprep.subr.mxu0 0.0
        %3307 = vmatpush1.xpose.msra.mxu0 0.0
        %3308 = vmatprep.subr.mxu0 0.0
        %3309 = vmatpush1.xpose.msra.mxu0 0.0
        %3310 = vmatprep.subr.mxu0 0.0
        %3311 = vmatpush1.xpose.msra.mxu0 %v3282
        %3312 = vmatprep.subr.mxu0 0.0
        %3313 = vmatpush1.xpose.msra.mxu0 %v3279
        %3314 = vmatprep.subr.mxu0 0.0
        %3315 = vmatpush1.xpose.msra.mxu0 %v3276
        %3316 = vmatprep.subr.mxu0 0.0
        %3317 = vmatpush2.xpose.msra.mxu0 0.0
        %3318 = vmatprep.subr.mxu0 0.0
        %3319 = vmatpush2.xpose.msra.mxu0 0.0
        %3320 = vmatprep.subr.mxu0 0.0
        %3321 = vmatpush2.xpose.msra.mxu0 0.0
        %3322 = vmatprep.subr.mxu0 0.0
        %3323 = vmatpush2.xpose.msra.mxu0 0.0
        %3324 = vmatprep.subr.mxu0 0.0
        %3325 = vmatpush2.xpose.msra.mxu0 0.0
        %3326 = vmatprep.subr.mxu0 0.0
        %3327 = vmatpush2.xpose.msra.mxu0 0.0
        %3328 = vmatprep.subr.mxu0 0.0
        %3329 = vmatpush2.xpose.msra.mxu0 0.0
        %3330 = vmatprep.subr.mxu0 0.0
        %3331 = vmatpush2.xpose.msra.mxu0 0.0
        %3332 = vmatprep.subr.mxu0 0.0
        %3333 = vmatpush2.xpose.msra.mxu0 0.0
        %3334 = vmatprep.subr.mxu0 0.0
        %3335 = vmatpush2.xpose.msra.mxu0 0.0
        %3336 = vmatprep.subr.mxu0 0.0
        %3337 = vmatpush2.xpose.msra.mxu0 0.0
        %3338 = vmatprep.subr.mxu0 0.0
        %3339 = vmatpush2.xpose.msra.mxu0 0.0
        %3340 = vmatprep.subr.mxu0 0.0
        %3341 = vmatpush2.xpose.msra.mxu0 0.0
        %3342 = vmatprep.subr.mxu0 0.0
        %3343 = vmatpush2.xpose.msra.mxu0 0.0
        %3344 = vmatprep.subr.mxu0 0.0
        %3345 = vmatpush2.xpose.msra.mxu0 0.0
        %3346 = vmatprep.subr.mxu0 0.0
        %3347 = vmatpush2.xpose.msra.mxu0 0.0
        %3348 = vmatprep.mubr.f32.mxu0 0.0
        %3349 = vmatmul.mubr.f32.gmra.mxu0 %v3267
        %v3350 = vpop.f32.mrf.mxu0
        %v3351 = vadd.f32 0.0, %v3350
        %v3352 = vpop.f32.mrf.mxu0
        %3353 = vmatprep.mubr.f32.mxu0 0.0
        %3354 = vmatmul.mubr.f32.gmra.mxu0 %v3270
        %v3355 = vpop.f32.mrf.mxu0
        %v3356 = vadd.f32 0.0, %v3355
        %v3357 = vpop.f32.mrf.mxu0
        %3358 = vmatprep.mubr.f32.mxu0 0.0
        %3359 = vmatmul.mubr.f32.gmra.mxu0 %v3273
        %v3360 = vpop.f32.mrf.mxu0
        %v3361 = vadd.f32 0.0, %v3360
        %v3362 = vpop.f32.mrf.mxu0
        %3363 = vdwg.mxu0
        %v3364 = vsel %vm1526, %v3351, -inf
        %3365 = vmax.xlane.f32.xlu0 %v3364
        %v3366 = vpop.xlane.xlu0 %3365
        %v3367 = vsel %vm1526, %v3356, -inf
        %3368 = vmax.xlane.f32.xlu0 %v3367
        %v3369 = vpop.xlane.xlu0 %3368
        %v3370 = vsel %vm1533, %v3361, -inf
        %3371 = vmax.xlane.f32.xlu0 %v3370
        %v3372 = vpop.xlane.xlu0 %3371
        %v3373 = vsub.f32 %v3351, %v3366
        %v3374 = vsub.f32 %v3356, %v3369
        %v3375 = vsub.f32 %v3361, %v3372
        %v3376 = vmul.f32 %v3373, 1.442695
        %v3377 = vpow.pop %v3376
        %v3378 = vmul.f32 %v3374, 1.442695
        %v3379 = vpow.pop %v3378
        %v3380 = vmul.f32 %v3375, 1.442695
        %v3381 = vpow.pop %v3380
        %v3382 = vsel %vm1526, %v3377, 0.0
        %3383 = vadd.xlane.f32.xlu0 %v3382
        %v3384 = vpop.xlane.xlu0 %3383
        %v3385 = vsel %vm1526, %v3379, 0.0
        %3386 = vadd.xlane.f32.xlu0 %v3385
        %v3387 = vpop.xlane.xlu0 %3386
        %v3388 = vsel %vm1533, %v3381, 0.0
        %3389 = vadd.xlane.f32.xlu0 %v3388
        %v3390 = vpop.xlane.xlu0 %3389
        %v3391 = vrcp.pop %v3384
        %v3392 = vrcp.pop %v3387
        %v3393 = vrcp.pop %v3390
        %v3394 = vmul.f32 %v3377, %v3391
        %v3395 = vmul.f32 %v3379, %v3392
        %v3396 = vmul.f32 %v3381, %v3393
        %v3398 = vsel %vm1526, %v3394, 0
        %v3401 = vsel %vm1526, %v3395, 0
        %v3404 = vsel %vm1526, %v3396, 0
        %v3407 = vsel %vm1570, %v3260, 0
        %3409 = vmatprep.subr.mxu0 0.0
        %3410 = vmatpush1.msra.mxu0 0.0
        %3411 = vmatprep.subr.mxu0 0.0
        %3412 = vmatpush1.msra.mxu0 0.0
        %3413 = vmatprep.subr.mxu0 0.0
        %3414 = vmatpush1.msra.mxu0 0.0
        %3415 = vmatprep.subr.mxu0 0.0
        %3416 = vmatpush1.msra.mxu0 0.0
        %3417 = vmatprep.subr.mxu0 0.0
        %3418 = vmatpush1.msra.mxu0 0.0
        %3419 = vmatprep.subr.mxu0 0.0
        %3420 = vmatpush1.msra.mxu0 0.0
        %3421 = vmatprep.subr.mxu0 0.0
        %3422 = vmatpush1.msra.mxu0 0.0
        %3423 = vmatprep.subr.mxu0 0.0
        %3424 = vmatpush1.msra.mxu0 0.0
        %3425 = vmatprep.subr.mxu0 0.0
        %3426 = vmatpush1.msra.mxu0 0.0
        %3427 = vmatprep.subr.mxu0 0.0
        %3428 = vmatpush1.msra.mxu0 0.0
        %3429 = vmatprep.subr.mxu0 0.0
        %3430 = vmatpush1.msra.mxu0 0.0
        %3431 = vmatprep.subr.mxu0 0.0
        %3432 = vmatpush1.msra.mxu0 0.0
        %3433 = vmatprep.subr.mxu0 0.0
        %3434 = vmatpush1.msra.mxu0 0.0
        %3435 = vmatprep.subr.mxu0 0.0
        %3436 = vmatpush1.msra.mxu0 %v3407
        %3437 = vmatprep.subr.mxu0 0.0
        %3438 = vmatpush1.msra.mxu0 %v3255
        %3439 = vmatprep.subr.mxu0 0.0
        %3440 = vmatpush1.msra.mxu0 %v3250
        %3441 = vmatprep.subr.mxu0 0.0
        %3442 = vmatpush2.msra.mxu0 0.0
        %3443 = vmatprep.subr.mxu0 0.0
        %3444 = vmatpush2.msra.mxu0 0.0
        %3445 = vmatprep.subr.mxu0 0.0
        %3446 = vmatpush2.msra.mxu0 0.0
        %3447 = vmatprep.subr.mxu0 0.0
        %3448 = vmatpush2.msra.mxu0 0.0
        %3449 = vmatprep.subr.mxu0 0.0
        %3450 = vmatpush2.msra.mxu0 0.0
        %3451 = vmatprep.subr.mxu0 0.0
        %3452 = vmatpush2.msra.mxu0 0.0
        %3453 = vmatprep.subr.mxu0 0.0
        %3454 = vmatpush2.msra.mxu0 0.0
        %3455 = vmatprep.subr.mxu0 0.0
        %3456 = vmatpush2.msra.mxu0 0.0
        %3457 = vmatprep.subr.mxu0 0.0
        %3458 = vmatpush2.msra.mxu0 0.0
        %3459 = vmatprep.subr.mxu0 0.0
        %3460 = vmatpush2.msra.mxu0 0.0
        %3461 = vmatprep.subr.mxu0 0.0
        %3462 = vmatpush2.msra.mxu0 0.0
        %3463 = vmatprep.subr.mxu0 0.0
        %3464 = vmatpush2.msra.mxu0 0.0
        %3465 = vmatprep.subr.mxu0 0.0
        %3466 = vmatpush2.msra.mxu0 0.0
        %3467 = vmatprep.subr.mxu0 0.0
        %3468 = vmatpush2.msra.mxu0 0.0
        %3469 = vmatprep.subr.mxu0 0.0
        %3470 = vmatpush2.msra.mxu0 0.0
        %3471 = vmatprep.subr.mxu0 0.0
        %3472 = vmatpush2.msra.mxu0 0.0
        %3473 = vmatprep.mubr.f32.mxu0 0.0
        %3474 = vmatmul.mubr.f32.gmra.mxu0 %v3398
        %v3475 = vpop.f32.mrf.mxu0
        %v3476 = vadd.f32 0.0, %v3475
        %v3477 = vpop.f32.mrf.mxu0
        %3478 = vmatprep.mubr.f32.mxu0 0.0
        %3479 = vmatmul.mubr.f32.gmra.mxu0 %v3401
        %v3480 = vpop.f32.mrf.mxu0
        %v3481 = vadd.f32 0.0, %v3480
        %v3482 = vpop.f32.mrf.mxu0
        %3483 = vmatprep.mubr.f32.mxu0 0.0
        %3484 = vmatmul.mubr.f32.gmra.mxu0 %v3404
        %v3485 = vpop.f32.mrf.mxu0
        %v3486 = vadd.f32 0.0, %v3485
        %v3487 = vpop.f32.mrf.mxu0
        %3488 = vdwg.mxu0
        %s3489 = scalar_lea.vmem %s837, 48
        %v3490 = vld [vmem:[%s3489] sm:$0xff]
        %v3491 = vld [vmem:[%s3489 + $0x8] sm:$0xff]
        %v3493 = vsel %vm1427, %v3476, 0
        %v3496 = vsel %vm1427, %v3481, 0
        %v3499 = vsel %vm1427, %v3486, 0
        %3501 = vmatprep.subr.mxu0 0.0
        %3502 = vmatpush1.msra.mxu0 0.0
        %3503 = vmatprep.subr.mxu0 0.0
        %3504 = vmatpush1.msra.mxu0 0.0
        %3505 = vmatprep.subr.mxu0 0.0
        %3506 = vmatpush1.msra.mxu0 0.0
        %3507 = vmatprep.subr.mxu0 0.0
        %3508 = vmatpush1.msra.mxu0 0.0
        %3509 = vmatprep.subr.mxu0 0.0
        %3510 = vmatpush1.msra.mxu0 0.0
        %3511 = vmatprep.subr.mxu0 0.0
        %3512 = vmatpush1.msra.mxu0 0.0
        %3513 = vmatprep.subr.mxu0 0.0
        %3514 = vmatpush1.msra.mxu0 0.0
        %3515 = vmatprep.subr.mxu0 0.0
        %3516 = vmatpush1.msra.mxu0 0.0
        %3517 = vmatprep.subr.mxu0 0.0
        %3518 = vmatpush1.msra.mxu0 0.0
        %3519 = vmatprep.subr.mxu0 0.0
        %3520 = vmatpush1.msra.mxu0 0.0
        %3521 = vmatprep.subr.mxu0 0.0
        %3522 = vmatpush1.msra.mxu0 0.0
        %3523 = vmatprep.subr.mxu0 0.0
        %3524 = vmatpush1.msra.mxu0 0.0
        %3525 = vmatprep.subr.mxu0 0.0
        %3526 = vmatpush1.msra.mxu0 0.0
        %3527 = vmatprep.subr.mxu0 0.0
        %3528 = vmatpush1.msra.mxu0 0.0
        %3529 = vmatprep.subr.mxu0 0.0
        %3530 = vmatpush1.msra.mxu0 %v3491
        %3531 = vmatprep.subr.mxu0 0.0
        %3532 = vmatpush1.msra.mxu0 %v3490
        %3533 = vmatprep.subr.mxu0 0.0
        %3534 = vmatpush2.msra.mxu0 0.0
        %3535 = vmatprep.subr.mxu0 0.0
        %3536 = vmatpush2.msra.mxu0 0.0
        %3537 = vmatprep.subr.mxu0 0.0
        %3538 = vmatpush2.msra.mxu0 0.0
        %3539 = vmatprep.subr.mxu0 0.0
        %3540 = vmatpush2.msra.mxu0 0.0
        %3541 = vmatprep.subr.mxu0 0.0
        %3542 = vmatpush2.msra.mxu0 0.0
        %3543 = vmatprep.subr.mxu0 0.0
        %3544 = vmatpush2.msra.mxu0 0.0
        %3545 = vmatprep.subr.mxu0 0.0
        %3546 = vmatpush2.msra.mxu0 0.0
        %3547 = vmatprep.subr.mxu0 0.0
        %3548 = vmatpush2.msra.mxu0 0.0
        %3549 = vmatprep.subr.mxu0 0.0
        %3550 = vmatpush2.msra.mxu0 0.0
        %3551 = vmatprep.subr.mxu0 0.0
        %3552 = vmatpush2.msra.mxu0 0.0
        %3553 = vmatprep.subr.mxu0 0.0
        %3554 = vmatpush2.msra.mxu0 0.0
        %3555 = vmatprep.subr.mxu0 0.0
        %3556 = vmatpush2.msra.mxu0 0.0
        %3557 = vmatprep.subr.mxu0 0.0
        %3558 = vmatpush2.msra.mxu0 0.0
        %3559 = vmatprep.subr.mxu0 0.0
        %3560 = vmatpush2.msra.mxu0 0.0
        %3561 = vmatprep.subr.mxu0 0.0
        %3562 = vmatpush2.msra.mxu0 0.0
        %3563 = vmatprep.subr.mxu0 0.0
        %3564 = vmatpush2.msra.mxu0 0.0
        %3565 = vmatprep.mubr.f32.mxu0 0.0
        %3566 = vmatmul.mubr.f32.gmra.mxu0 %v3493
        %v3567 = vpop.f32.mrf.mxu0
        %v3568 = vadd.f32 0.0, %v3567
        %v3569 = vpop.f32.mrf.mxu0
        %3570 = vmatprep.mubr.f32.mxu0 0.0
        %3571 = vmatmul.mubr.f32.gmra.mxu0 %v3496
        %v3572 = vpop.f32.mrf.mxu0
        %v3573 = vadd.f32 0.0, %v3572
        %v3574 = vpop.f32.mrf.mxu0
        %3575 = vmatprep.mubr.f32.mxu0 0.0
        %3576 = vmatmul.mubr.f32.gmra.mxu0 %v3499
        %v3577 = vpop.f32.mrf.mxu0
        %v3578 = vadd.f32 0.0, %v3577
        %v3579 = vpop.f32.mrf.mxu0
        %3580 = vdwg.mxu0
        %v3581 = vadd.f32 %v2969, %v3568
        %v3582 = vadd.f32 %v2970, %v3573
        %v3583 = vadd.f32 %v2971, %v3578
        %v3584 = vld [vmem:[%s843] sm:$0x1]
        %v3585 = vld [vmem:[%s846] sm:$0x1]
        %v3586 = vsel %vm1056, %v3581, 0.0
        %3587 = vadd.xlane.f32.xlu0 %v3586
        %v3588 = vpop.xlane.xlu0 %3587
        %v3589 = vsel %vm1056, %v3582, 0.0
        %3590 = vadd.xlane.f32.xlu0 %v3589
        %v3591 = vpop.xlane.xlu0 %3590
        %v3592 = vsel %vm1063, %v3583, 0.0
        %3593 = vadd.xlane.f32.xlu0 %v3592
        %v3594 = vpop.xlane.xlu0 %3593
        %v3595 = vmul.f32 %v3588, %v1067
        %v3596 = vmul.f32 %v3591, %v1067
        %v3597 = vmul.f32 %v3594, %v1067
        %v3598 = vsub.f32 %v3581, %v3595
        %v3599 = vsub.f32 %v3582, %v3596
        %v3600 = vsub.f32 %v3583, %v3597
        %v3601 = vmul.f32 %v3598, %v3598
        %v3602 = vmul.f32 %v3599, %v3599
        %v3603 = vmul.f32 %v3600, %v3600
        %v3604 = vsel %vm1056, %v3601, 0.0
        %3605 = vadd.xlane.f32.xlu0 %v3604
        %v3606 = vpop.xlane.xlu0 %3605
        %v3607 = vsel %vm1056, %v3602, 0.0
        %3608 = vadd.xlane.f32.xlu0 %v3607
        %v3609 = vpop.xlane.xlu0 %3608
        %v3610 = vsel %vm1063, %v3603, 0.0
        %3611 = vadd.xlane.f32.xlu0 %v3610
        %v3612 = vpop.xlane.xlu0 %3611
        %v3613 = vmul.f32 %v3606, %v1067
        %v3614 = vmul.f32 %v3609, %v1067
        %v3615 = vmul.f32 %v3612, %v1067
        %v3616 = vadd.f32 %v3613, 1e-05
        %v3617 = vadd.f32 %v3614, 1e-05
        %v3618 = vadd.f32 %v3615, 1e-05
        %v3619 = vrsqrt.pop %v3616
        %v3620 = vrsqrt.pop %v3617
        %v3621 = vrsqrt.pop %v3618
        %v3622 = vmul.f32 %v3598, %v3619
        %v3623 = vmul.f32 %v3599, %v3620
        %v3624 = vmul.f32 %v3600, %v3621
        %v3626 = vlaneseq
        %v3627 = vshrl.u32 %v3626, 7
        %v3628 = vsub.s32 0, %v3627
        %v3629 = vrot.slane %v3584, %v3628
        %v3631 = vmul.f32 %v3622, %v3629
        %v3632 = vmul.f32 %v3623, %v3629
        %v3633 = vmul.f32 %v3624, %v3629
        %v3635 = vlaneseq
        %v3636 = vshrl.u32 %v3635, 7
        %v3637 = vsub.s32 0, %v3636
        %v3638 = vrot.slane %v3585, %v3637
        %v3640 = vadd.f32 %v3631, %v3638
        %v3641 = vadd.f32 %v3632, %v3638
        %v3642 = vadd.f32 %v3633, %v3638
        %v3643 = vld [vmem:[%s851] sm:$0xff]
        %v3644 = vld [vmem:[%s851 + $0x8] sm:$0xff]
        %v3645 = vld [vmem:[%s851 + $0x10] sm:$0xff]
        %v3646 = vld [vmem:[%s851 + $0x18] sm:$0xff]
        %v3647 = vld [vmem:[%s851 + $0x20] sm:$0xff]
        %v3648 = vld [vmem:[%s851 + $0x28] sm:$0xff]
        %v3649 = vld [vmem:[%s851 + $0x30] sm:$0xff]
        %v3650 = vld [vmem:[%s851 + $0x38] sm:$0xff]
        %v3651 = vld [vmem:[%s851 + $0x40] sm:$0xff]
        %v3652 = vld [vmem:[%s851 + $0x48] sm:$0xff]
        %v3653 = vld [vmem:[%s851 + $0x50] sm:$0xff]
        %v3654 = vld [vmem:[%s851 + $0x58] sm:$0xff]
        %v3655 = vld [vmem:[%s851 + $0x60] sm:$0xff]
        %v3656 = vld [vmem:[%s851 + $0x68] sm:$0xff]
        %v3657 = vld [vmem:[%s851 + $0x70] sm:$0xff]
        %v3658 = vld [vmem:[%s851 + $0x78] sm:$0xff]
        %v3659 = vld [vmem:[%s855] sm:$0x3]
        %v3661 = vlaneseq
        %v3662 = vshrl.u32 %v3661, 7
        %v3663 = vsub.s32 0, %v3662
        %v3664 = vrot.slane %v3659, %v3663
        %v3665 = vlaneseq
        %v3666 = vshrl.u32 %v3665, 7
        %v3667 = vsub.s32 1, %v3666
        %v3668 = vrot.slane %v3659, %v3667
        %v3672 = vsel %vm1056, %v3640, 0
        %v3675 = vsel %vm1056, %v3641, 0
        %v3678 = vsel %vm1056, %v3642, 0
        %3680 = vmatprep.subr.mxu0 0.0
        %3681 = vmatpush1.msra.mxu0 0.0
        %3682 = vmatprep.subr.mxu0 0.0
        %3683 = vmatpush1.msra.mxu0 0.0
        %3684 = vmatprep.subr.mxu0 0.0
        %3685 = vmatpush1.msra.mxu0 0.0
        %3686 = vmatprep.subr.mxu0 0.0
        %3687 = vmatpush1.msra.mxu0 0.0
        %3688 = vmatprep.subr.mxu0 0.0
        %3689 = vmatpush1.msra.mxu0 0.0
        %3690 = vmatprep.subr.mxu0 0.0
        %3691 = vmatpush1.msra.mxu0 0.0
        %3692 = vmatprep.subr.mxu0 0.0
        %3693 = vmatpush1.msra.mxu0 0.0
        %3694 = vmatprep.subr.mxu0 0.0
        %3695 = vmatpush1.msra.mxu0 0.0
        %3696 = vmatprep.subr.mxu0 %v3658
        %3697 = vmatpush1.msra.mxu0 %v3657
        %3698 = vmatprep.subr.mxu0 %v3656
        %3699 = vmatpush1.msra.mxu0 %v3655
        %3700 = vmatprep.subr.mxu0 %v3654
        %3701 = vmatpush1.msra.mxu0 %v3653
        %3702 = vmatprep.subr.mxu0 %v3652
        %3703 = vmatpush1.msra.mxu0 %v3651
        %3704 = vmatprep.subr.mxu0 %v3650
        %3705 = vmatpush1.msra.mxu0 %v3649
        %3706 = vmatprep.subr.mxu0 %v3648
        %3707 = vmatpush1.msra.mxu0 %v3647
        %3708 = vmatprep.subr.mxu0 %v3646
        %3709 = vmatpush1.msra.mxu0 %v3645
        %3710 = vmatprep.subr.mxu0 %v3644
        %3711 = vmatpush1.msra.mxu0 %v3643
        %3712 = vmatprep.subr.mxu0 0.0
        %3713 = vmatpush2.msra.mxu0 0.0
        %3714 = vmatprep.subr.mxu0 0.0
        %3715 = vmatpush2.msra.mxu0 0.0
        %3716 = vmatprep.subr.mxu0 0.0
        %3717 = vmatpush2.msra.mxu0 0.0
        %3718 = vmatprep.subr.mxu0 0.0
        %3719 = vmatpush2.msra.mxu0 0.0
        %3720 = vmatprep.subr.mxu0 0.0
        %3721 = vmatpush2.msra.mxu0 0.0
        %3722 = vmatprep.subr.mxu0 0.0
        %3723 = vmatpush2.msra.mxu0 0.0
        %3724 = vmatprep.subr.mxu0 0.0
        %3725 = vmatpush2.msra.mxu0 0.0
        %3726 = vmatprep.subr.mxu0 0.0
        %3727 = vmatpush2.msra.mxu0 0.0
        %3728 = vmatprep.subr.mxu0 0.0
        %3729 = vmatpush2.msra.mxu0 0.0
        %3730 = vmatprep.subr.mxu0 0.0
        %3731 = vmatpush2.msra.mxu0 0.0
        %3732 = vmatprep.subr.mxu0 0.0
        %3733 = vmatpush2.msra.mxu0 0.0
        %3734 = vmatprep.subr.mxu0 0.0
        %3735 = vmatpush2.msra.mxu0 0.0
        %3736 = vmatprep.subr.mxu0 0.0
        %3737 = vmatpush2.msra.mxu0 0.0
        %3738 = vmatprep.subr.mxu0 0.0
        %3739 = vmatpush2.msra.mxu0 0.0
        %3740 = vmatprep.subr.mxu0 0.0
        %3741 = vmatpush2.msra.mxu0 0.0
        %3742 = vmatprep.subr.mxu0 0.0
        %3743 = vmatpush2.msra.mxu0 0.0
        %3744 = vmatprep.mubr.f32.mxu0 0.0
        %3745 = vmatmul.mubr.f32.gmra.mxu0 %v3672
        %v3746 = vpop.f32.mrf.mxu0
        %v3747 = vadd.f32 %v3664, %v3746
        %v3748 = vpop.f32.mrf.mxu0
        %v3749 = vadd.f32 %v3668, %v3748
        %3750 = vmatprep.mubr.f32.mxu0 0.0
        %3751 = vmatmul.mubr.f32.gmra.mxu0 %v3675
        %v3752 = vpop.f32.mrf.mxu0
        %v3753 = vadd.f32 %v3664, %v3752
        %v3754 = vpop.f32.mrf.mxu0
        %v3755 = vadd.f32 %v3668, %v3754
        %3756 = vmatprep.mubr.f32.mxu0 0.0
        %3757 = vmatmul.mubr.f32.gmra.mxu0 %v3678
        %v3758 = vpop.f32.mrf.mxu0
        %v3759 = vadd.f32 %v3664, %v3758
        %v3760 = vpop.f32.mrf.mxu0
        %v3761 = vadd.f32 %v3668, %v3760
        %3762 = vdwg.mxu0
        %v3763 = vmul.f32 %v3747, 1.702
        %v3764 = vmul.f32 %v3749, 1.702
        %v3765 = vmul.f32 %v3753, 1.702
        %v3766 = vmul.f32 %v3755, 1.702
        %v3767 = vmul.f32 %v3759, 1.702
        %v3768 = vmul.f32 %v3761, 1.702
        %v3769 = vxor.u32 %v3763, 2147483648
        %v3770 = vxor.u32 %v3764, 2147483648
        %v3771 = vxor.u32 %v3765, 2147483648
        %v3772 = vxor.u32 %v3766, 2147483648
        %v3773 = vxor.u32 %v3767, 2147483648
        %v3774 = vxor.u32 %v3768, 2147483648
        %v3775 = vmul.f32 %v3769, 1.442695
        %v3776 = vpow.pop %v3775
        %v3777 = vmul.f32 %v3770, 1.442695
        %v3778 = vpow.pop %v3777
        %v3779 = vmul.f32 %v3771, 1.442695
        %v3780 = vpow.pop %v3779
        %v3781 = vmul.f32 %v3772, 1.442695
        %v3782 = vpow.pop %v3781
        %v3783 = vmul.f32 %v3773, 1.442695
        %v3784 = vpow.pop %v3783
        %v3785 = vmul.f32 %v3774, 1.442695
        %v3786 = vpow.pop %v3785
        %v3787 = vadd.f32 %v3776, 1.0
        %v3788 = vadd.f32 %v3778, 1.0
        %v3789 = vadd.f32 %v3780, 1.0
        %v3790 = vadd.f32 %v3782, 1.0
        %v3791 = vadd.f32 %v3784, 1.0
        %v3792 = vadd.f32 %v3786, 1.0
        %v3793 = vrcp.pop %v3787
        %v3794 = vmul.f32 1.0, %v3793
        %v3795 = vrcp.pop %v3788
        %v3796 = vmul.f32 1.0, %v3795
        %v3797 = vrcp.pop %v3789
        %v3798 = vmul.f32 1.0, %v3797
        %v3799 = vrcp.pop %v3790
        %v3800 = vmul.f32 1.0, %v3799
        %v3801 = vrcp.pop %v3791
        %v3802 = vmul.f32 1.0, %v3801
        %v3803 = vrcp.pop %v3792
        %v3804 = vmul.f32 1.0, %v3803
        %v3805 = vmul.f32 %v3747, %v3794
        %v3806 = vmul.f32 %v3749, %v3796
        %v3807 = vmul.f32 %v3753, %v3798
        %v3808 = vmul.f32 %v3755, %v3800
        %v3809 = vmul.f32 %v3759, %v3802
        %v3810 = vmul.f32 %v3761, %v3804
        %v3811 = vld [vmem:[%s860] sm:$0xff]
        %v3812 = vld [vmem:[%s860 + $0x8] sm:$0xff]
        %v3813 = vld [vmem:[%s860 + $0x10] sm:$0xff]
        %v3814 = vld [vmem:[%s860 + $0x18] sm:$0xff]
        %v3815 = vld [vmem:[%s860 + $0x20] sm:$0xff]
        %v3816 = vld [vmem:[%s860 + $0x28] sm:$0xff]
        %v3817 = vld [vmem:[%s860 + $0x30] sm:$0xff]
        %v3818 = vld [vmem:[%s860 + $0x38] sm:$0xff]
        %v3819 = vld [vmem:[%s860 + $0x40] sm:$0xff]
        %v3820 = vld [vmem:[%s860 + $0x48] sm:$0xff]
        %v3821 = vld [vmem:[%s860 + $0x50] sm:$0xff]
        %v3822 = vld [vmem:[%s860 + $0x58] sm:$0xff]
        %v3823 = vld [vmem:[%s860 + $0x60] sm:$0xff]
        %v3824 = vld [vmem:[%s860 + $0x68] sm:$0xff]
        %v3825 = vld [vmem:[%s860 + $0x70] sm:$0xff]
        %v3826 = vld [vmem:[%s860 + $0x78] sm:$0xff]
        %v3827 = vld [vmem:[%s860 + $0x80] sm:$0xff]
        %v3828 = vld [vmem:[%s860 + $0x88] sm:$0xff]
        %v3829 = vld [vmem:[%s860 + $0x90] sm:$0xff]
        %v3830 = vld [vmem:[%s860 + $0x98] sm:$0xff]
        %v3831 = vld [vmem:[%s860 + $0xa0] sm:$0xff]
        %v3832 = vld [vmem:[%s860 + $0xa8] sm:$0xff]
        %v3833 = vld [vmem:[%s860 + $0xb0] sm:$0xff]
        %v3834 = vld [vmem:[%s860 + $0xb8] sm:$0xff]
        %v3835 = vld [vmem:[%s860 + $0xc0] sm:$0xff]
        %v3836 = vld [vmem:[%s860 + $0xc8] sm:$0xff]
        %v3837 = vld [vmem:[%s860 + $0xd0] sm:$0xff]
        %v3838 = vld [vmem:[%s860 + $0xd8] sm:$0xff]
        %v3839 = vld [vmem:[%s860 + $0xe0] sm:$0xff]
        %v3840 = vld [vmem:[%s860 + $0xe8] sm:$0xff]
        %v3841 = vld [vmem:[%s860 + $0xf0] sm:$0xff]
        %v3842 = vld [vmem:[%s860 + $0xf8] sm:$0xff]
        %3843 = vmatprep.subr.mxu0 0.0
        %3844 = vmatpush1.msra.mxu0 %v3826
        %3845 = vmatprep.subr.mxu0 0.0
        %3846 = vmatpush1.msra.mxu0 %v3825
        %3847 = vmatprep.subr.mxu0 0.0
        %3848 = vmatpush1.msra.mxu0 %v3824
        %3849 = vmatprep.subr.mxu0 0.0
        %3850 = vmatpush1.msra.mxu0 %v3823
        %3851 = vmatprep.subr.mxu0 0.0
        %3852 = vmatpush1.msra.mxu0 %v3822
        %3853 = vmatprep.subr.mxu0 0.0
        %3854 = vmatpush1.msra.mxu0 %v3821
        %3855 = vmatprep.subr.mxu0 0.0
        %3856 = vmatpush1.msra.mxu0 %v3820
        %3857 = vmatprep.subr.mxu0 0.0
        %3858 = vmatpush1.msra.mxu0 %v3819
        %3859 = vmatprep.subr.mxu0 0.0
        %3860 = vmatpush1.msra.mxu0 %v3818
        %3861 = vmatprep.subr.mxu0 0.0
        %3862 = vmatpush1.msra.mxu0 %v3817
        %3863 = vmatprep.subr.mxu0 0.0
        %3864 = vmatpush1.msra.mxu0 %v3816
        %3865 = vmatprep.subr.mxu0 0.0
        %3866 = vmatpush1.msra.mxu0 %v3815
        %3867 = vmatprep.subr.mxu0 0.0
        %3868 = vmatpush1.msra.mxu0 %v3814
        %3869 = vmatprep.subr.mxu0 0.0
        %3870 = vmatpush1.msra.mxu0 %v3813
        %3871 = vmatprep.subr.mxu0 0.0
        %3872 = vmatpush1.msra.mxu0 %v3812
        %3873 = vmatprep.subr.mxu0 0.0
        %3874 = vmatpush1.msra.mxu0 %v3811
        %3875 = vmatprep.subr.mxu0 0.0
        %3876 = vmatpush2.msra.mxu0 %v3842
        %3877 = vmatprep.subr.mxu0 0.0
        %3878 = vmatpush2.msra.mxu0 %v3841
        %3879 = vmatprep.subr.mxu0 0.0
        %3880 = vmatpush2.msra.mxu0 %v3840
        %3881 = vmatprep.subr.mxu0 0.0
        %3882 = vmatpush2.msra.mxu0 %v3839
        %3883 = vmatprep.subr.mxu0 0.0
        %3884 = vmatpush2.msra.mxu0 %v3838
        %3885 = vmatprep.subr.mxu0 0.0
        %3886 = vmatpush2.msra.mxu0 %v3837
        %3887 = vmatprep.subr.mxu0 0.0
        %3888 = vmatpush2.msra.mxu0 %v3836
        %3889 = vmatprep.subr.mxu0 0.0
        %3890 = vmatpush2.msra.mxu0 %v3835
        %3891 = vmatprep.subr.mxu0 0.0
        %3892 = vmatpush2.msra.mxu0 %v3834
        %3893 = vmatprep.subr.mxu0 0.0
        %3894 = vmatpush2.msra.mxu0 %v3833
        %3895 = vmatprep.subr.mxu0 0.0
        %3896 = vmatpush2.msra.mxu0 %v3832
        %3897 = vmatprep.subr.mxu0 0.0
        %3898 = vmatpush2.msra.mxu0 %v3831
        %3899 = vmatprep.subr.mxu0 0.0
        %3900 = vmatpush2.msra.mxu0 %v3830
        %3901 = vmatprep.subr.mxu0 0.0
        %3902 = vmatpush2.msra.mxu0 %v3829
        %3903 = vmatprep.subr.mxu0 0.0
        %3904 = vmatpush2.msra.mxu0 %v3828
        %3905 = vmatprep.subr.mxu0 0.0
        %3906 = vmatpush2.msra.mxu0 %v3827
        %3907 = vmatprep.mubr.f32.mxu0 %v3806
        %3908 = vmatmul.mubr.f32.gmra.mxu0 %v3805
        %v3909 = vpop.f32.mrf.mxu0
        %v3910 = vadd.f32 0.0, %v3909
        %v3911 = vpop.f32.mrf.mxu0
        %3912 = vmatprep.mubr.f32.mxu0 %v3808
        %3913 = vmatmul.mubr.f32.gmra.mxu0 %v3807
        %v3914 = vpop.f32.mrf.mxu0
        %v3915 = vadd.f32 0.0, %v3914
        %v3916 = vpop.f32.mrf.mxu0
        %3917 = vmatprep.mubr.f32.mxu0 %v3810
        %3918 = vmatmul.mubr.f32.gmra.mxu0 %v3809
        %v3919 = vpop.f32.mrf.mxu0
        %v3920 = vadd.f32 0.0, %v3919
        %v3921 = vpop.f32.mrf.mxu0
        %3922 = vdwg.mxu0
        %v3923 = vadd.f32 %v3581, %v3910
        %v3924 = vadd.f32 %v3582, %v3915
        %v3925 = vadd.f32 %v3583, %v3920
        %v3926 = vld [vmem:[%s863] sm:$0x1]
        %v3928 = vlaneseq
        %v3929 = vshrl.u32 %v3928, 7
        %v3930 = vsub.s32 0, %v3929
        %v3931 = vrot.slane %v3926, %v3930
        %v3933 = vadd.f32 %v3923, %v3931
        %v3934 = vadd.f32 %v3924, %v3931
        %v3935 = vadd.f32 %v3925, %v3931
        %3936 = vst.msk [vmem:[#allocation2] sm:$0xff] %vm1056, %v3933
        %3937 = vst.msk [vmem:[#allocation2 + $0x8] sm:$0xff] %vm1056, %v3934
        %3938 = vst.msk [vmem:[#allocation2 + $0x10] sm:$0x1] %vm1063, %v3935
        %p3939 = scmp.eq.s32.totalorder %s40, 1
        // Predicated region
        $region109: #{vit_forward.1} parent=103 // pred_check
          %p3940 = pneg %p3939
        $region110: #{vit_forward.1} parent=103 // pred_check_branch
          %3942 = sbr.rel (%p3940) target = $region112
        $region111: #{vit_forward.1} parent=103 // pred_region
          %v3943 = vld [vmem:[%s18] sm:$0x1]
          %v3944 = vld [vmem:[%s19] sm:$0x1]
          %v3945 = vsel %vm1063, %v3935, 0.0
          %3946 = vadd.xlane.f32.xlu0 %v3945
          %v3947 = vpop.xlane.xlu0 %3946
          %v3948 = vmul.f32 %v3947, %v1067
          %v3949 = vsub.f32 %v3935, %v3948
          %v3950 = vmul.f32 %v3949, %v3949
          %v3951 = vsel %vm1063, %v3950, 0.0
          %3952 = vadd.xlane.f32.xlu0 %v3951
          %v3953 = vpop.xlane.xlu0 %3952
          %v3954 = vmul.f32 %v3953, %v1067
          %v3955 = vadd.f32 %v3954, 1e-05
          %v3956 = vrsqrt.pop %v3955
          %v3957 = vmul.f32 %v3949, %v3956
          %v3958 = vmul.f32 %v3957, %v3943
          %v3959 = vadd.f32 %v3958, %v3944
          %v3960 = vld [vmem:[%s20] sm:$0xff]
          %v3961 = vld [vmem:[%s20 + $0x8] sm:$0xff]
          %v3962 = vld [vmem:[%s20 + $0x10] sm:$0xff]
          %v3963 = vld [vmem:[%s20 + $0x18] sm:$0xff]
          %v3964 = vld [vmem:[%s20 + $0x20] sm:$0xff]
          %v3965 = vld [vmem:[%s20 + $0x28] sm:$0xff]
          %v3966 = vld [vmem:[%s20 + $0x30] sm:$0xff]
          %v3967 = vld [vmem:[%s20 + $0x38] sm:$0xff]
          %v3969 = vsel %vm1056, %v3959, 0
          %3971 = vmatprep.subr.mxu0 0.0
          %3972 = vmatpush1.msra.mxu0 0.0
          %3973 = vmatprep.subr.mxu0 0.0
          %3974 = vmatpush1.msra.mxu0 0.0
          %3975 = vmatprep.subr.mxu0 0.0
          %3976 = vmatpush1.msra.mxu0 0.0
          %3977 = vmatprep.subr.mxu0 0.0
          %3978 = vmatpush1.msra.mxu0 0.0
          %3979 = vmatprep.subr.mxu0 0.0
          %3980 = vmatpush1.msra.mxu0 0.0
          %3981 = vmatprep.subr.mxu0 0.0
          %3982 = vmatpush1.msra.mxu0 0.0
          %3983 = vmatprep.subr.mxu0 0.0
          %3984 = vmatpush1.msra.mxu0 0.0
          %3985 = vmatprep.subr.mxu0 0.0
          %3986 = vmatpush1.msra.mxu0 0.0
          %3987 = vmatprep.subr.mxu0 0.0
          %3988 = vmatpush1.msra.mxu0 %v3967
          %3989 = vmatprep.subr.mxu0 0.0
          %3990 = vmatpush1.msra.mxu0 %v3966
          %3991 = vmatprep.subr.mxu0 0.0
          %3992 = vmatpush1.msra.mxu0 %v3965
          %3993 = vmatprep.subr.mxu0 0.0
          %3994 = vmatpush1.msra.mxu0 %v3964
          %3995 = vmatprep.subr.mxu0 0.0
          %3996 = vmatpush1.msra.mxu0 %v3963
          %3997 = vmatprep.subr.mxu0 0.0
          %3998 = vmatpush1.msra.mxu0 %v3962
          %3999 = vmatprep.subr.mxu0 0.0
          %4000 = vmatpush1.msra.mxu0 %v3961
          %4001 = vmatprep.subr.mxu0 0.0
          %4002 = vmatpush1.msra.mxu0 %v3960
          %4003 = vmatprep.subr.mxu0 0.0
          %4004 = vmatpush2.msra.mxu0 0.0
          %4005 = vmatprep.subr.mxu0 0.0
          %4006 = vmatpush2.msra.mxu0 0.0
          %4007 = vmatprep.subr.mxu0 0.0
          %4008 = vmatpush2.msra.mxu0 0.0
          %4009 = vmatprep.subr.mxu0 0.0
          %4010 = vmatpush2.msra.mxu0 0.0
          %4011 = vmatprep.subr.mxu0 0.0
          %4012 = vmatpush2.msra.mxu0 0.0
          %4013 = vmatprep.subr.mxu0 0.0
          %4014 = vmatpush2.msra.mxu0 0.0
          %4015 = vmatprep.subr.mxu0 0.0
          %4016 = vmatpush2.msra.mxu0 0.0
          %4017 = vmatprep.subr.mxu0 0.0
          %4018 = vmatpush2.msra.mxu0 0.0
          %4019 = vmatprep.subr.mxu0 0.0
          %4020 = vmatpush2.msra.mxu0 0.0
          %4021 = vmatprep.subr.mxu0 0.0
          %4022 = vmatpush2.msra.mxu0 0.0
          %4023 = vmatprep.subr.mxu0 0.0
          %4024 = vmatpush2.msra.mxu0 0.0
          %4025 = vmatprep.subr.mxu0 0.0
          %4026 = vmatpush2.msra.mxu0 0.0
          %4027 = vmatprep.subr.mxu0 0.0
          %4028 = vmatpush2.msra.mxu0 0.0
          %4029 = vmatprep.subr.mxu0 0.0
          %4030 = vmatpush2.msra.mxu0 0.0
          %4031 = vmatprep.subr.mxu0 0.0
          %4032 = vmatpush2.msra.mxu0 0.0
          %4033 = vmatprep.subr.mxu0 0.0
          %4034 = vmatpush2.msra.mxu0 0.0
          %4035 = vmatprep.mubr.f32.mxu0 0.0
          %4036 = vmatmul.mubr.f32.gmra.mxu0 %v3969
          %v4037 = vpop.f32.mrf.mxu0
          %v4038 = vadd.f32 0.0, %v4037
          %v4039 = vpop.f32.mrf.mxu0
          %4040 = vdwg.mxu0
          %vm4041 = vcmask 253952
          %4042 = vst.msk [vmem:[%s812] sm:$0x1] %vm4041, %v4038
        $region112: #{vit_forward.1} parent=103 // pred_fallthru
          _
        %s4043 = sand.u32 %s561, 1
        %s4044 = scalar_lea.sflag [#allocation4], %s4043
        %s4045 = sand.u32 %s561, 1
        %s4046 = scalar_lea.vmem [#allocation3], %s4045
        // Predicated region
        $region113: #{vit_forward.1} parent=103 // pred_check
          %p4047 = pneg %p571
        $region114: #{vit_forward.1} parent=103 // pred_check_branch
          %4049 = sbr.rel (%p4047) target = $region116
        $region115: #{vit_forward.1} parent=103 // pred_region
          %s4051 = ssub.s32 16, 16
          %4052 = vsyncadd %s4044, %s4051
          %s4053 = smul.addr %s39, 16
          %s4054 = scalar_lea.hbm %s21, %s4053
          %s4056 = sshll.u32 %s4046, 4
          %s4057 = int_to_ptr.vmem [resolvable:$true] %s4056
          %4059 = dma.vmem_to_hbm [thread:$0]  %s4057, 16, %s4054, %s4044
        $region116: #{vit_forward.1} parent=103 // pred_fallthru
          _
      $region104: #{vit_forward.1} parent=5 // pred_fallthru
        _
      %p4060 = scmp.le.s32.totalorder 2, %s30
      // Predicated region
      $region117: #{vit_forward.1} parent=5 // pred_check
        %p4061 = pneg %p4060
      $region118: #{vit_forward.1} parent=5 // pred_check_branch
        %4063 = sbr.rel (%p4061) target = $region120
      $region119: #{vit_forward.1} parent=5 // pred_region
        %s4064 = ssub.s32 %s30, 2
        // Predicated region
        $region121: #{vit_forward.1} parent=119 // pred_check
          %p4065 = pneg %p577
        $region122: #{vit_forward.1} parent=119 // pred_check_branch
          %4067 = sbr.rel (%p4065) target = $region124
        $region123: #{vit_forward.1} parent=119 // pred_region
          %s4068 = sand.u32 %s562, 1
          %s4069 = scalar_lea.sflag [#allocation4], %s4068
          %s4070 = sand.u32 %s562, 1
          %s4071 = scalar_lea.vmem [#allocation3], %s4070
          %4072 = dma.done %s4069, 16
        $region124: #{vit_forward.1} parent=119 // pred_fallthru
          _
      $region120: #{vit_forward.1} parent=5 // pred_fallthru
        _
    $region6: #{vit_forward.1} parent=1 // loop_footer
      %s34 = sadd.s32 1, %s30
    $region7: #{vit_forward.1} parent=1 // loop_footer_branch
      %29 = sbr.rel target = $region3
    $region8: #{vit_forward.1} parent=1 // loop_exit
      _
    %4073 = vsyncpa [#allocation4], 1
    %s4074 = scalar_lea.sflag [#allocation4], 1
    %4075 = vsyncpa %s4074, 1

</llo_original>
